<compile_context>
chip_gen: v5e
topology: v5e:2x2
jax: 0.10.0
libtpu: 0.0.40
codegen_flags: <defaults>
</compile_context>

<pallas_src>
import functools
import math

import jax
import jax.numpy as jnp
from jax.experimental import pallas as pl
from jax.experimental.pallas import tpu as pltpu

EPS = 1e-5  # nn.LayerNorm default


# ---------------------------------------------------------------------------
# Single fused kernel: whole forward for one (seq, feature) slab, all in VMEM
# ---------------------------------------------------------------------------
def _fused_forward_kernel(x_ref, *rest, treedef, nhead, num_enc_layers,
                          num_dec_layers, d_model, activation):
    out_ref = rest[-1]
    p = jax.tree_util.tree_unflatten(treedef, rest[:-1])   # dict of Refs

    D = d_model
    dh = D // nhead
    bf16 = jnp.bfloat16

    def mm(a, w, b):
        # bf16 operands -> MXU bf16 peak; f32 accumulation; bias add in the epilogue.
        return jnp.dot(a.astype(bf16), w, preferred_element_type=jnp.float32) + b

    def layer_norm(y, g, b):
        # single-pass stats (population variance, matching PyTorch LayerNorm)
        mu = jnp.mean(y, axis=-1, keepdims=True)
        var = jnp.mean(y * y, axis=-1, keepdims=True) - mu * mu
        return (y - mu) * jax.lax.rsqrt(var + EPS) * g + b

    def softmax(s):
        s = s - jnp.max(s, axis=-1, keepdims=True)
        e = jnp.exp(s)
        # EUP approximate reciprocal (frees VALU slots); tiny drift vs exact division.
        return e * pl.reciprocal(jnp.sum(e, axis=-1, keepdims=True), approx=True)

    def attention(q, k, v, o_w, o_b):
        # Heads are contiguous lane slices.  Each head's context is folded straight into
        # the output projection accumulation -> no lane-axis concatenate, fatter matmuls.
        # Q is pre-scaled by 1/sqrt(dh) at parameter-packing time.
        qb, kb, vb = q.astype(bf16), k.astype(bf16), v.astype(bf16)
        acc = jnp.zeros((q.shape[0], D), jnp.float32)
        for h in range(nhead):
            sl = slice(h * dh, (h + 1) * dh)
            s = jax.lax.dot_general(qb[:, sl], kb[:, sl],
                                    (((1,), (1,)), ((), ())),
                                    preferred_element_type=jnp.float32)
            p_h = softmax(s).astype(bf16)
            ctx = jnp.dot(p_h, vb[:, sl], preferred_element_type=jnp.float32)
            acc = acc + jnp.dot(ctx.astype(bf16), o_w[sl, :],
                                preferred_element_type=jnp.float32)
        return acc + o_b

    def self_attn(x, qkv_w, qkv_b, o_w, o_b):
        qkv = mm(x, qkv_w, qkv_b)                           # fused Q|K|V projection
        return attention(qkv[:, :D], qkv[:, D:2 * D], qkv[:, 2 * D:], o_w, o_b)

    def ffn(x, w1, b1, w2, b2):
        # (S, dim_ff) intermediate never leaves VMEM; relu in f32
        return mm(jnp.maximum(mm(x, w1, b1), 0.0), w2, b2)

    x = x_ref[...]                                          # (S, input_size)
    h = mm(x, p["emb_w"][...], p["emb_b"][...])             # (S, D) embedding

    # ---------------- encoder (post-norm) ----------------
    enc = p["enc"]
    mem = h
    for l in range(num_enc_layers):
        a = self_attn(mem, enc["qkv_w"][l], enc["qkv_b"][l],
                      enc["o_w"][l], enc["o_b"][l])
        mem = layer_norm(mem + a, enc["ln1_g"][l], enc["ln1_b"][l])
        f = ffn(mem, enc["w1"][l], enc["b1"][l], enc["w2"][l], enc["b2"][l])
        mem = layer_norm(mem + f, enc["ln2_g"][l], enc["ln2_b"][l])
    mem = layer_norm(mem, p["enc_norm_g"][...], p["enc_norm_b"][...])

    # ------ decoder (post-norm; no causal mask under the src=tgt interpretation) ------
    dec = p["dec"]
    t = h
    for l in range(num_dec_layers):
        a = self_attn(t, dec["sa_qkv_w"][l], dec["sa_qkv_b"][l],
                      dec["sa_o_w"][l], dec["sa_o_b"][l])
        t = layer_norm(t + a, dec["ln1_g"][l], dec["ln1_b"][l])

        q = mm(t, dec["ca_q_w"][l], dec["ca_q_b"][l])
        kv = mm(mem, dec["ca_kv_w"][l], dec["ca_kv_b"][l])   # fused K|V projection
        c = attention(q, kv[:, :D], kv[:, D:], dec["ca_o_w"][l], dec["ca_o_b"][l])
        t = layer_norm(t + c, dec["ln2_g"][l], dec["ln2_b"][l])

        f = ffn(t, dec["w1"][l], dec["b1"][l], dec["w2"][l], dec["b2"][l])
        t = layer_norm(t + f, dec["ln3_g"][l], dec["ln3_b"][l])
    t = layer_norm(t, p["dec_norm_g"][...], p["dec_norm_b"][...])

    # ---------------- output head (lane-padded to 128) ----------------
    y = mm(t, p["fc_w"][...], p["fc_b"][...])
    if activation == "relu":
        y = jnp.maximum(y, 0.0)
    elif activation == "tanh":
        y = jnp.tanh(y)
    elif activation == "sigmoid":
        y = jax.nn.sigmoid(y)
    # 'linear' / None -> identity
    out_ref[...] = y.astype(out_ref.dtype)


# ---------------------------------------------------------------------------
# Wrapper: exactly one pallas_call, computing ONLY the last batch element
# ---------------------------------------------------------------------------
def transformer_forward(x, params, *, nhead, num_enc_layers, num_dec_layers,
                        output_size, activation="linear"):
    B, S, IN = x.shape
    D = params["emb_w"].shape[1]
    OUT_PAD = params["fc_w"].shape[1]
    DIM_FF = params["enc"]["w1"].shape[2]

    # The module returns fc(transformer_out[-1]): only the LAST batch element matters,
    # so only that element is handed to (and computed by) the kernel.
    x_last = x[B - 1]                                       # (S, IN)

    flat, treedef = jax.tree_util.tree_flatten(params)
    kernel = functools.partial(
        _fused_forward_kernel, treedef=treedef, nhead=nhead,
        num_enc_layers=num_enc_layers, num_dec_layers=num_dec_layers,
        d_model=D, activation=activation)

    # Explicit scoped-VMEM budget: resident params + activation working set + margin.
    param_bytes = sum(int(a.size) * a.dtype.itemsize for a in flat)
    act_bytes = 12 * S * max(3 * D, DIM_FF, OUT_PAD, 128) * 4
    vmem_limit = max(16 << 20,
                     min(int(1.5 * (param_bytes + act_bytes)) + (2 << 20), 100 << 20))

    out = pl.pallas_call(
        kernel,
        out_shape=jax.ShapeDtypeStruct((S, OUT_PAD), jnp.float32),
        compiler_params=pltpu.CompilerParams(vmem_limit_bytes=vmem_limit),
    )(x_last, *flat)
    return out[:, :output_size]                             # strip lane padding -> (S, OUT)


# ---------------------------------------------------------------------------
# Deterministic parameter init (shapes from the module's __init__; synthetic values).
# Weights pre-packed: fused QKV / KV projections, per-layer params stacked on a leading
# layer axis, Q-scale folded in, weights cast to bf16, fc padded to 128 output lanes.
# ---------------------------------------------------------------------------
def _wf(key, shape, scale=0.05):
    return jax.random.normal(key, shape, jnp.float32) * scale


def _bf(x):
    return x.astype(jnp.bfloat16)


def _init_enc_stack(key, L, d, ff, q_scale):
    ks = jax.random.split(key, 8)
    qkv_w = _wf(ks[0], (L, d, 3 * d))
    qkv_b = _wf(ks[1], (L, 1, 3 * d))
    # fold 1/sqrt(head_dim) into the Q projection (first d output columns)
    qkv_w = qkv_w.at[:, :, :d].multiply(q_scale)
    qkv_b = qkv_b.at[:, :, :d].multiply(q_scale)
    return dict(
        qkv_w=_bf(qkv_w), qkv_b=qkv_b,
        o_w=_bf(_wf(ks[2], (L, d, d))), o_b=_wf(ks[3], (L, 1, d)),
        w1=_bf(_wf(ks[4], (L, d, ff))), b1=_wf(ks[5], (L, 1, ff)),
        w2=_bf(_wf(ks[6], (L, ff, d))), b2=_wf(ks[7], (L, 1, d)),
        ln1_g=jnp.ones((L, 1, d), jnp.float32), ln1_b=jnp.zeros((L, 1, d), jnp.float32),
        ln2_g=jnp.ones((L, 1, d), jnp.float32), ln2_b=jnp.zeros((L, 1, d), jnp.float32),
    )


def _init_dec_stack(key, L, d, ff, q_scale):
    ks = jax.random.split(key, 14)
    sa_qkv_w = _wf(ks[0], (L, d, 3 * d))
    sa_qkv_b = _wf(ks[1], (L, 1, 3 * d))
    sa_qkv_w = sa_qkv_w.at[:, :, :d].multiply(q_scale)
    sa_qkv_b = sa_qkv_b.at[:, :, :d].multiply(q_scale)
    ca_q_w = _wf(ks[4], (L, d, d)) * q_scale
    ca_q_b = _wf(ks[5], (L, 1, d)) * q_scale
    return dict(
        sa_qkv_w=_bf(sa_qkv_w), sa_qkv_b=sa_qkv_b,
        sa_o_w=_bf(_wf(ks[2], (L, d, d))), sa_o_b=_wf(ks[3], (L, 1, d)),
        ca_q_w=_bf(ca_q_w), ca_q_b=ca_q_b,
        ca_kv_w=_bf(_wf(ks[6], (L, d, 2 * d))), ca_kv_b=_wf(ks[7], (L, 1, 2 * d)),
        ca_o_w=_bf(_wf(ks[8], (L, d, d))), ca_o_b=_wf(ks[9], (L, 1, d)),
        w1=_bf(_wf(ks[10], (L, d, ff))), b1=_wf(ks[11], (L, 1, ff)),
        w2=_bf(_wf(ks[12], (L, ff, d))), b2=_wf(ks[13], (L, 1, d)),
        ln1_g=jnp.ones((L, 1, d), jnp.float32), ln1_b=jnp.zeros((L, 1, d), jnp.float32),
        ln2_g=jnp.ones((L, 1, d), jnp.float32), ln2_b=jnp.zeros((L, 1, d), jnp.float32),
        ln3_g=jnp.ones((L, 1, d), jnp.float32), ln3_b=jnp.zeros((L, 1, d), jnp.float32),
    )


def init_params(key, input_size, d_model, nhead, num_enc_layers, num_dec_layers,
                dim_ff, output_size):
    dh = d_model // nhead
    q_scale = 1.0 / math.sqrt(dh)
    out_pad = max(128, ((output_size + 127) // 128) * 128)   # lane-dense output store
    ks = jax.random.split(key, 6)
    fc_w = jnp.pad(_wf(ks[2], (d_model, output_size)),
                   ((0, 0), (0, out_pad - output_size)))
    fc_b = jnp.pad(_wf(ks[3], (1, output_size)),
                   ((0, 0), (0, out_pad - output_size)))
    return dict(
        emb_w=_bf(_wf(ks[0], (input_size, d_model))), emb_b=_wf(ks[1], (1, d_model)),
        fc_w=_bf(fc_w), fc_b=fc_b,
        enc=_init_enc_stack(ks[4], num_enc_layers, d_model, dim_ff, q_scale),
        dec=_init_dec_stack(ks[5], num_dec_layers, d_model, dim_ff, q_scale),
        enc_norm_g=jnp.ones((1, d_model), jnp.float32),
        enc_norm_b=jnp.zeros((1, d_model), jnp.float32),
        dec_norm_g=jnp.ones((1, d_model), jnp.float32),
        dec_norm_b=jnp.zeros((1, d_model), jnp.float32),
    )


# ---------------------------------------------------------------------------
if __name__ == "__main__":
    # Small shapes consistent with the module's forward:
    #   x: (batch, seq, input_size); d_model small analogue of 512; nhead=4 kept.
    B, S = 2, 8
    INPUT_SIZE, D_MODEL, NHEAD, NUM_LAYERS, DIM_FF, OUTPUT_SIZE = 16, 32, 4, 2, 64, 8
    ACTIVATION = "linear"   # module default

    key = jax.random.PRNGKey(0)
    pkey, xkey = jax.random.split(key)
    params = init_params(pkey, INPUT_SIZE, D_MODEL, NHEAD, NUM_LAYERS, NUM_LAYERS,
                         DIM_FF, OUTPUT_SIZE)
    x = jax.random.normal(xkey, (B, S, INPUT_SIZE), jnp.float32)

    out = transformer_forward(x, params, nhead=NHEAD,
                              num_enc_layers=NUM_LAYERS, num_dec_layers=NUM_LAYERS,
                              output_size=OUTPUT_SIZE, activation=ACTIVATION)
    out = jax.block_until_ready(out)

    assert out.shape == (S, OUTPUT_SIZE), out.shape
    assert bool(jnp.all(jnp.isfinite(out)))
    print("KERNEL_OK")
</pallas_src>

<mosaic_0001>
module attributes {stable_mosaic.version = 11 : i64} {
  func.func @_fused_forward_kernel(%arg0: memref<8x16xf32, #tpu.memory_space<vmem>>, %arg1: memref<2x1x64xf32, #tpu.memory_space<vmem>>, %arg2: memref<2x1x32xf32, #tpu.memory_space<vmem>>, %arg3: memref<2x1x64xf32, #tpu.memory_space<vmem>>, %arg4: memref<2x32x64xbf16, #tpu.memory_space<vmem>>, %arg5: memref<2x1x32xf32, #tpu.memory_space<vmem>>, %arg6: memref<2x32x32xbf16, #tpu.memory_space<vmem>>, %arg7: memref<2x1x32xf32, #tpu.memory_space<vmem>>, %arg8: memref<2x32x32xbf16, #tpu.memory_space<vmem>>, %arg9: memref<2x1x32xf32, #tpu.memory_space<vmem>>, %arg10: memref<2x1x32xf32, #tpu.memory_space<vmem>>, %arg11: memref<2x1x32xf32, #tpu.memory_space<vmem>>, %arg12: memref<2x1x32xf32, #tpu.memory_space<vmem>>, %arg13: memref<2x1x32xf32, #tpu.memory_space<vmem>>, %arg14: memref<2x1x32xf32, #tpu.memory_space<vmem>>, %arg15: memref<2x1x32xf32, #tpu.memory_space<vmem>>, %arg16: memref<2x32x32xbf16, #tpu.memory_space<vmem>>, %arg17: memref<2x1x96xf32, #tpu.memory_space<vmem>>, %arg18: memref<2x32x96xbf16, #tpu.memory_space<vmem>>, %arg19: memref<2x32x64xbf16, #tpu.memory_space<vmem>>, %arg20: memref<2x64x32xbf16, #tpu.memory_space<vmem>>, %arg21: memref<1x32xf32, #tpu.memory_space<vmem>>, %arg22: memref<1x32xf32, #tpu.memory_space<vmem>>, %arg23: memref<1x32xf32, #tpu.memory_space<vmem>>, %arg24: memref<16x32xbf16, #tpu.memory_space<vmem>>, %arg25: memref<2x1x64xf32, #tpu.memory_space<vmem>>, %arg26: memref<2x1x32xf32, #tpu.memory_space<vmem>>, %arg27: memref<2x1x32xf32, #tpu.memory_space<vmem>>, %arg28: memref<2x1x32xf32, #tpu.memory_space<vmem>>, %arg29: memref<2x1x32xf32, #tpu.memory_space<vmem>>, %arg30: memref<2x1x32xf32, #tpu.memory_space<vmem>>, %arg31: memref<2x1x32xf32, #tpu.memory_space<vmem>>, %arg32: memref<2x32x32xbf16, #tpu.memory_space<vmem>>, %arg33: memref<2x1x96xf32, #tpu.memory_space<vmem>>, %arg34: memref<2x32x96xbf16, #tpu.memory_space<vmem>>, %arg35: memref<2x32x64xbf16, #tpu.memory_space<vmem>>, %arg36: memref<2x64x32xbf16, #tpu.memory_space<vmem>>, %arg37: memref<1x32xf32, #tpu.memory_space<vmem>>, %arg38: memref<1x32xf32, #tpu.memory_space<vmem>>, %arg39: memref<1x128xf32, #tpu.memory_space<vmem>>, %arg40: memref<32x128xbf16, #tpu.memory_space<vmem>>, %arg41: memref<8x128xf32, #tpu.memory_space<vmem>>) attributes {dimension_semantics = [], scalar_prefetch = 0 : i64, scratch_operands = 0 : i64, tpu.core_type = #tpu.core_type<tc>} {
    %c0 = arith.constant 0 : index
    %c0_0 = arith.constant 0 : index
    %0 = vector.load %arg0[%c0, %c0_0] : memref<8x16xf32, #tpu.memory_space<vmem>>, vector<8x16xf32>
    %c0_1 = arith.constant 0 : index
    %c0_2 = arith.constant 0 : index
    %1 = vector.load %arg24[%c0_1, %c0_2] : memref<16x32xbf16, #tpu.memory_space<vmem>>, vector<16x32xbf16>
    %c0_3 = arith.constant 0 : index
    %c0_4 = arith.constant 0 : index
    %2 = vector.load %arg23[%c0_3, %c0_4] : memref<1x32xf32, #tpu.memory_space<vmem>>, vector<1x32xf32>
    %3 = arith.truncf %0 : vector<8x16xf32> to vector<8x16xbf16>
    %cst = arith.constant dense<0.000000e+00> : vector<8x32xf32>
    %4 = tpu.matmul %3, %1, %cst {dimension_numbers = #tpu.dot_dimension_numbers<[1], [0], [0], [1], [0, 0, 1, 1], [], []>} : vector<8x16xbf16>, vector<16x32xbf16>, vector<8x32xf32> -> vector<8x32xf32>
    %5 = vector.broadcast %2 : vector<1x32xf32> to vector<8x32xf32>
    %6 = arith.addf %4, %5 : vector<8x32xf32>
    %c0_5 = arith.constant 0 : index
    %c0_6 = arith.constant 0 : index
    %c0_7 = arith.constant 0 : index
    %7 = vector.load %arg34[%c0_5, %c0_6, %c0_7] : memref<2x32x96xbf16, #tpu.memory_space<vmem>>, vector<1x32x96xbf16>
    %8 = vector.shape_cast %7 : vector<1x32x96xbf16> to vector<32x96xbf16>
    %c0_8 = arith.constant 0 : index
    %c0_9 = arith.constant 0 : index
    %c0_10 = arith.constant 0 : index
    %9 = vector.load %arg33[%c0_8, %c0_9, %c0_10] : memref<2x1x96xf32, #tpu.memory_space<vmem>>, vector<1x1x96xf32>
    %10 = vector.shape_cast %9 : vector<1x1x96xf32> to vector<1x96xf32>
    %c0_11 = arith.constant 0 : index
    %c0_12 = arith.constant 0 : index
    %c0_13 = arith.constant 0 : index
    %11 = vector.load %arg32[%c0_11, %c0_12, %c0_13] : memref<2x32x32xbf16, #tpu.memory_space<vmem>>, vector<1x32x32xbf16>
    %12 = vector.shape_cast %11 : vector<1x32x32xbf16> to vector<32x32xbf16>
    %c0_14 = arith.constant 0 : index
    %c0_15 = arith.constant 0 : index
    %c0_16 = arith.constant 0 : index
    %13 = vector.load %arg31[%c0_14, %c0_15, %c0_16] : memref<2x1x32xf32, #tpu.memory_space<vmem>>, vector<1x1x32xf32>
    %14 = vector.shape_cast %13 : vector<1x1x32xf32> to vector<1x32xf32>
    %15 = arith.truncf %6 : vector<8x32xf32> to vector<8x32xbf16>
    %cst_17 = arith.constant dense<0.000000e+00> : vector<8x96xf32>
    %16 = tpu.matmul %15, %8, %cst_17 {dimension_numbers = #tpu.dot_dimension_numbers<[1], [0], [0], [1], [0, 0, 1, 1], [], []>} : vector<8x32xbf16>, vector<32x96xbf16>, vector<8x96xf32> -> vector<8x96xf32>
    %17 = vector.broadcast %10 : vector<1x96xf32> to vector<8x96xf32>
    %18 = arith.addf %16, %17 : vector<8x96xf32>
    %19 = vector.extract_strided_slice %18 {offsets = [0, 0], sizes = [8, 32], strides = [1, 1]} : vector<8x96xf32> to vector<8x32xf32>
    %20 = vector.extract_strided_slice %18 {offsets = [0, 32], sizes = [8, 32], strides = [1, 1]} : vector<8x96xf32> to vector<8x32xf32>
    %21 = vector.extract_strided_slice %18 {offsets = [0, 64], sizes = [8, 32], strides = [1, 1]} : vector<8x96xf32> to vector<8x32xf32>
    %22 = arith.truncf %19 : vector<8x32xf32> to vector<8x32xbf16>
    %23 = arith.truncf %20 : vector<8x32xf32> to vector<8x32xbf16>
    %24 = arith.truncf %21 : vector<8x32xf32> to vector<8x32xbf16>
    %cst_18 = arith.constant 0.000000e+00 : f32
    %25 = vector.broadcast %cst_18 : f32 to vector<8x32xf32>
    %26 = vector.extract_strided_slice %22 {offsets = [0, 0], sizes = [8, 8], strides = [1, 1]} : vector<8x32xbf16> to vector<8x8xbf16>
    %27 = vector.extract_strided_slice %23 {offsets = [0, 0], sizes = [8, 8], strides = [1, 1]} : vector<8x32xbf16> to vector<8x8xbf16>
    %cst_19 = arith.constant dense<0.000000e+00> : vector<8x8xf32>
    %28 = tpu.matmul %26, %27, %cst_19 {dimension_numbers = #tpu.dot_dimension_numbers<[1], [1], [0], [0], [0, 0, 1, 0], [], []>} : vector<8x8xbf16>, vector<8x8xbf16>, vector<8x8xf32> -> vector<8x8xf32>
    %cst_20 = arith.constant dense<0xFF800000> : vector<8xf32>
    %29 = vector.multi_reduction <maximumf>, %28, %cst_20 [1] : vector<8x8xf32> to vector<8xf32>
    %30 = vector.shape_cast %29 : vector<8xf32> to vector<8x1xf32>
    %31 = vector.broadcast %30 : vector<8x1xf32> to vector<8x8xf32>
    %32 = arith.subf %28, %31 : vector<8x8xf32>
    %33 = math.exp %32 : vector<8x8xf32>
    %cst_21 = arith.constant dense<0.000000e+00> : vector<8xf32>
    %34 = vector.multi_reduction <add>, %33, %cst_21 [1] : vector<8x8xf32> to vector<8xf32>
    %35 = vector.shape_cast %34 : vector<8xf32> to vector<8x1xf32>
    %36 = tpu.reciprocal %35 {approx = true} : vector<8x1xf32> -> vector<8x1xf32>
    %37 = vector.broadcast %36 : vector<8x1xf32> to vector<8x8xf32>
    %38 = arith.mulf %33, %37 : vector<8x8xf32>
    %39 = arith.truncf %38 : vector<8x8xf32> to vector<8x8xbf16>
    %40 = vector.extract_strided_slice %24 {offsets = [0, 0], sizes = [8, 8], strides = [1, 1]} : vector<8x32xbf16> to vector<8x8xbf16>
    %cst_22 = arith.constant dense<0.000000e+00> : vector<8x8xf32>
    %41 = tpu.matmul %39, %40, %cst_22 {dimension_numbers = #tpu.dot_dimension_numbers<[1], [0], [0], [1], [0, 0, 1, 1], [], []>} : vector<8x8xbf16>, vector<8x8xbf16>, vector<8x8xf32> -> vector<8x8xf32>
    %42 = arith.truncf %41 : vector<8x8xf32> to vector<8x8xbf16>
    %43 = vector.extract_strided_slice %12 {offsets = [0, 0], sizes = [8, 32], strides = [1, 1]} : vector<32x32xbf16> to vector<8x32xbf16>
    %cst_23 = arith.constant dense<0.000000e+00> : vector<8x32xf32>
    %44 = tpu.matmul %42, %43, %cst_23 {dimension_numbers = #tpu.dot_dimension_numbers<[1], [0], [0], [1], [0, 0, 1, 1], [], []>} : vector<8x8xbf16>, vector<8x32xbf16>, vector<8x32xf32> -> vector<8x32xf32>
    %45 = arith.addf %25, %44 : vector<8x32xf32>
    %46 = vector.extract_strided_slice %22 {offsets = [0, 8], sizes = [8, 8], strides = [1, 1]} : vector<8x32xbf16> to vector<8x8xbf16>
    %47 = vector.extract_strided_slice %23 {offsets = [0, 8], sizes = [8, 8], strides = [1, 1]} : vector<8x32xbf16> to vector<8x8xbf16>
    %cst_24 = arith.constant dense<0.000000e+00> : vector<8x8xf32>
    %48 = tpu.matmul %46, %47, %cst_24 {dimension_numbers = #tpu.dot_dimension_numbers<[1], [1], [0], [0], [0, 0, 1, 0], [], []>} : vector<8x8xbf16>, vector<8x8xbf16>, vector<8x8xf32> -> vector<8x8xf32>
    %cst_25 = arith.constant dense<0xFF800000> : vector<8xf32>
    %49 = vector.multi_reduction <maximumf>, %48, %cst_25 [1] : vector<8x8xf32> to vector<8xf32>
    %50 = vector.shape_cast %49 : vector<8xf32> to vector<8x1xf32>
    %51 = vector.broadcast %50 : vector<8x1xf32> to vector<8x8xf32>
    %52 = arith.subf %48, %51 : vector<8x8xf32>
    %53 = math.exp %52 : vector<8x8xf32>
    %cst_26 = arith.constant dense<0.000000e+00> : vector<8xf32>
    %54 = vector.multi_reduction <add>, %53, %cst_26 [1] : vector<8x8xf32> to vector<8xf32>
    %55 = vector.shape_cast %54 : vector<8xf32> to vector<8x1xf32>
    %56 = tpu.reciprocal %55 {approx = true} : vector<8x1xf32> -> vector<8x1xf32>
    %57 = vector.broadcast %56 : vector<8x1xf32> to vector<8x8xf32>
    %58 = arith.mulf %53, %57 : vector<8x8xf32>
    %59 = arith.truncf %58 : vector<8x8xf32> to vector<8x8xbf16>
    %60 = vector.extract_strided_slice %24 {offsets = [0, 8], sizes = [8, 8], strides = [1, 1]} : vector<8x32xbf16> to vector<8x8xbf16>
    %cst_27 = arith.constant dense<0.000000e+00> : vector<8x8xf32>
    %61 = tpu.matmul %59, %60, %cst_27 {dimension_numbers = #tpu.dot_dimension_numbers<[1], [0], [0], [1], [0, 0, 1, 1], [], []>} : vector<8x8xbf16>, vector<8x8xbf16>, vector<8x8xf32> -> vector<8x8xf32>
    %62 = arith.truncf %61 : vector<8x8xf32> to vector<8x8xbf16>
    %63 = vector.extract_strided_slice %12 {offsets = [8, 0], sizes = [8, 32], strides = [1, 1]} : vector<32x32xbf16> to vector<8x32xbf16>
    %cst_28 = arith.constant dense<0.000000e+00> : vector<8x32xf32>
    %64 = tpu.matmul %62, %63, %cst_28 {dimension_numbers = #tpu.dot_dimension_numbers<[1], [0], [0], [1], [0, 0, 1, 1], [], []>} : vector<8x8xbf16>, vector<8x32xbf16>, vector<8x32xf32> -> vector<8x32xf32>
    %65 = arith.addf %45, %64 : vector<8x32xf32>
    %66 = vector.extract_strided_slice %22 {offsets = [0, 16], sizes = [8, 8], strides = [1, 1]} : vector<8x32xbf16> to vector<8x8xbf16>
    %67 = vector.extract_strided_slice %23 {offsets = [0, 16], sizes = [8, 8], strides = [1, 1]} : vector<8x32xbf16> to vector<8x8xbf16>
    %cst_29 = arith.constant dense<0.000000e+00> : vector<8x8xf32>
    %68 = tpu.matmul %66, %67, %cst_29 {dimension_numbers = #tpu.dot_dimension_numbers<[1], [1], [0], [0], [0, 0, 1, 0], [], []>} : vector<8x8xbf16>, vector<8x8xbf16>, vector<8x8xf32> -> vector<8x8xf32>
    %cst_30 = arith.constant dense<0xFF800000> : vector<8xf32>
    %69 = vector.multi_reduction <maximumf>, %68, %cst_30 [1] : vector<8x8xf32> to vector<8xf32>
    %70 = vector.shape_cast %69 : vector<8xf32> to vector<8x1xf32>
    %71 = vector.broadcast %70 : vector<8x1xf32> to vector<8x8xf32>
    %72 = arith.subf %68, %71 : vector<8x8xf32>
    %73 = math.exp %72 : vector<8x8xf32>
    %cst_31 = arith.constant dense<0.000000e+00> : vector<8xf32>
    %74 = vector.multi_reduction <add>, %73, %cst_31 [1] : vector<8x8xf32> to vector<8xf32>
    %75 = vector.shape_cast %74 : vector<8xf32> to vector<8x1xf32>
    %76 = tpu.reciprocal %75 {approx = true} : vector<8x1xf32> -> vector<8x1xf32>
    %77 = vector.broadcast %76 : vector<8x1xf32> to vector<8x8xf32>
    %78 = arith.mulf %73, %77 : vector<8x8xf32>
    %79 = arith.truncf %78 : vector<8x8xf32> to vector<8x8xbf16>
    %80 = vector.extract_strided_slice %24 {offsets = [0, 16], sizes = [8, 8], strides = [1, 1]} : vector<8x32xbf16> to vector<8x8xbf16>
    %cst_32 = arith.constant dense<0.000000e+00> : vector<8x8xf32>
    %81 = tpu.matmul %79, %80, %cst_32 {dimension_numbers = #tpu.dot_dimension_numbers<[1], [0], [0], [1], [0, 0, 1, 1], [], []>} : vector<8x8xbf16>, vector<8x8xbf16>, vector<8x8xf32> -> vector<8x8xf32>
    %82 = arith.truncf %81 : vector<8x8xf32> to vector<8x8xbf16>
    %83 = vector.extract_strided_slice %12 {offsets = [16, 0], sizes = [8, 32], strides = [1, 1]} : vector<32x32xbf16> to vector<8x32xbf16>
    %cst_33 = arith.constant dense<0.000000e+00> : vector<8x32xf32>
    %84 = tpu.matmul %82, %83, %cst_33 {dimension_numbers = #tpu.dot_dimension_numbers<[1], [0], [0], [1], [0, 0, 1, 1], [], []>} : vector<8x8xbf16>, vector<8x32xbf16>, vector<8x32xf32> -> vector<8x32xf32>
    %85 = arith.addf %65, %84 : vector<8x32xf32>
    %86 = vector.extract_strided_slice %22 {offsets = [0, 24], sizes = [8, 8], strides = [1, 1]} : vector<8x32xbf16> to vector<8x8xbf16>
    %87 = vector.extract_strided_slice %23 {offsets = [0, 24], sizes = [8, 8], strides = [1, 1]} : vector<8x32xbf16> to vector<8x8xbf16>
    %cst_34 = arith.constant dense<0.000000e+00> : vector<8x8xf32>
    %88 = tpu.matmul %86, %87, %cst_34 {dimension_numbers = #tpu.dot_dimension_numbers<[1], [1], [0], [0], [0, 0, 1, 0], [], []>} : vector<8x8xbf16>, vector<8x8xbf16>, vector<8x8xf32> -> vector<8x8xf32>
    %cst_35 = arith.constant dense<0xFF800000> : vector<8xf32>
    %89 = vector.multi_reduction <maximumf>, %88, %cst_35 [1] : vector<8x8xf32> to vector<8xf32>
    %90 = vector.shape_cast %89 : vector<8xf32> to vector<8x1xf32>
    %91 = vector.broadcast %90 : vector<8x1xf32> to vector<8x8xf32>
    %92 = arith.subf %88, %91 : vector<8x8xf32>
    %93 = math.exp %92 : vector<8x8xf32>
    %cst_36 = arith.constant dense<0.000000e+00> : vector<8xf32>
    %94 = vector.multi_reduction <add>, %93, %cst_36 [1] : vector<8x8xf32> to vector<8xf32>
    %95 = vector.shape_cast %94 : vector<8xf32> to vector<8x1xf32>
    %96 = tpu.reciprocal %95 {approx = true} : vector<8x1xf32> -> vector<8x1xf32>
    %97 = vector.broadcast %96 : vector<8x1xf32> to vector<8x8xf32>
    %98 = arith.mulf %93, %97 : vector<8x8xf32>
    %99 = arith.truncf %98 : vector<8x8xf32> to vector<8x8xbf16>
    %100 = vector.extract_strided_slice %24 {offsets = [0, 24], sizes = [8, 8], strides = [1, 1]} : vector<8x32xbf16> to vector<8x8xbf16>
    %cst_37 = arith.constant dense<0.000000e+00> : vector<8x8xf32>
    %101 = tpu.matmul %99, %100, %cst_37 {dimension_numbers = #tpu.dot_dimension_numbers<[1], [0], [0], [1], [0, 0, 1, 1], [], []>} : vector<8x8xbf16>, vector<8x8xbf16>, vector<8x8xf32> -> vector<8x8xf32>
    %102 = arith.truncf %101 : vector<8x8xf32> to vector<8x8xbf16>
    %103 = vector.extract_strided_slice %12 {offsets = [24, 0], sizes = [8, 32], strides = [1, 1]} : vector<32x32xbf16> to vector<8x32xbf16>
    %cst_38 = arith.constant dense<0.000000e+00> : vector<8x32xf32>
    %104 = tpu.matmul %102, %103, %cst_38 {dimension_numbers = #tpu.dot_dimension_numbers<[1], [0], [0], [1], [0, 0, 1, 1], [], []>} : vector<8x8xbf16>, vector<8x32xbf16>, vector<8x32xf32> -> vector<8x32xf32>
    %105 = arith.addf %85, %104 : vector<8x32xf32>
    %106 = vector.broadcast %14 : vector<1x32xf32> to vector<8x32xf32>
    %107 = arith.addf %105, %106 : vector<8x32xf32>
    %108 = arith.addf %6, %107 : vector<8x32xf32>
    %c0_39 = arith.constant 0 : index
    %c0_40 = arith.constant 0 : index
    %c0_41 = arith.constant 0 : index
    %109 = vector.load %arg28[%c0_39, %c0_40, %c0_41] : memref<2x1x32xf32, #tpu.memory_space<vmem>>, vector<1x1x32xf32>
    %110 = vector.shape_cast %109 : vector<1x1x32xf32> to vector<1x32xf32>
    %c0_42 = arith.constant 0 : index
    %c0_43 = arith.constant 0 : index
    %c0_44 = arith.constant 0 : index
    %111 = vector.load %arg27[%c0_42, %c0_43, %c0_44] : memref<2x1x32xf32, #tpu.memory_space<vmem>>, vector<1x1x32xf32>
    %112 = vector.shape_cast %111 : vector<1x1x32xf32> to vector<1x32xf32>
    %cst_45 = arith.constant dense<0.000000e+00> : vector<8xf32>
    %113 = vector.multi_reduction <add>, %108, %cst_45 [1] : vector<8x32xf32> to vector<8xf32>
    %114 = vector.shape_cast %113 : vector<8xf32> to vector<8x1xf32>
    %cst_46 = arith.constant 3.200000e+01 : f32
    %115 = vector.broadcast %cst_46 : f32 to vector<8x1xf32>
    %116 = arith.divf %114, %115 : vector<8x1xf32>
    %117 = arith.mulf %108, %108 : vector<8x32xf32>
    %cst_47 = arith.constant dense<0.000000e+00> : vector<8xf32>
    %118 = vector.multi_reduction <add>, %117, %cst_47 [1] : vector<8x32xf32> to vector<8xf32>
    %119 = vector.shape_cast %118 : vector<8xf32> to vector<8x1xf32>
    %cst_48 = arith.constant 3.200000e+01 : f32
    %120 = vector.broadcast %cst_48 : f32 to vector<8x1xf32>
    %121 = arith.divf %119, %120 : vector<8x1xf32>
    %122 = arith.mulf %116, %116 : vector<8x1xf32>
    %123 = arith.subf %121, %122 : vector<8x1xf32>
    %124 = vector.broadcast %116 : vector<8x1xf32> to vector<8x32xf32>
    %125 = arith.subf %108, %124 : vector<8x32xf32>
    %cst_49 = arith.constant 9.99999974E-6 : f32
    %126 = vector.broadcast %cst_49 : f32 to vector<8x1xf32>
    %127 = arith.addf %123, %126 : vector<8x1xf32>
    %128 = math.rsqrt %127 : vector<8x1xf32>
    %129 = vector.broadcast %128 : vector<8x1xf32> to vector<8x32xf32>
    %130 = arith.mulf %125, %129 : vector<8x32xf32>
    %131 = vector.broadcast %110 : vector<1x32xf32> to vector<8x32xf32>
    %132 = arith.mulf %130, %131 : vector<8x32xf32>
    %133 = vector.broadcast %112 : vector<1x32xf32> to vector<8x32xf32>
    %134 = arith.addf %132, %133 : vector<8x32xf32>
    %c0_50 = arith.constant 0 : index
    %c0_51 = arith.constant 0 : index
    %c0_52 = arith.constant 0 : index
    %135 = vector.load %arg35[%c0_50, %c0_51, %c0_52] : memref<2x32x64xbf16, #tpu.memory_space<vmem>>, vector<1x32x64xbf16>
    %136 = vector.shape_cast %135 : vector<1x32x64xbf16> to vector<32x64xbf16>
    %c0_53 = arith.constant 0 : index
    %c0_54 = arith.constant 0 : index
    %c0_55 = arith.constant 0 : index
    %137 = vector.load %arg25[%c0_53, %c0_54, %c0_55] : memref<2x1x64xf32, #tpu.memory_space<vmem>>, vector<1x1x64xf32>
    %138 = vector.shape_cast %137 : vector<1x1x64xf32> to vector<1x64xf32>
    %c0_56 = arith.constant 0 : index
    %c0_57 = arith.constant 0 : index
    %c0_58 = arith.constant 0 : index
    %139 = vector.load %arg36[%c0_56, %c0_57, %c0_58] : memref<2x64x32xbf16, #tpu.memory_space<vmem>>, vector<1x64x32xbf16>
    %140 = vector.shape_cast %139 : vector<1x64x32xbf16> to vector<64x32xbf16>
    %c0_59 = arith.constant 0 : index
    %c0_60 = arith.constant 0 : index
    %c0_61 = arith.constant 0 : index
    %141 = vector.load %arg26[%c0_59, %c0_60, %c0_61] : memref<2x1x32xf32, #tpu.memory_space<vmem>>, vector<1x1x32xf32>
    %142 = vector.shape_cast %141 : vector<1x1x32xf32> to vector<1x32xf32>
    %143 = arith.truncf %134 : vector<8x32xf32> to vector<8x32xbf16>
    %cst_62 = arith.constant dense<0.000000e+00> : vector<8x64xf32>
    %144 = tpu.matmul %143, %136, %cst_62 {dimension_numbers = #tpu.dot_dimension_numbers<[1], [0], [0], [1], [0, 0, 1, 1], [], []>} : vector<8x32xbf16>, vector<32x64xbf16>, vector<8x64xf32> -> vector<8x64xf32>
    %145 = vector.broadcast %138 : vector<1x64xf32> to vector<8x64xf32>
    %146 = arith.addf %144, %145 : vector<8x64xf32>
    %cst_63 = arith.constant 0.000000e+00 : f32
    %147 = vector.broadcast %cst_63 : f32 to vector<8x64xf32>
    %148 = arith.maximumf %146, %147 : vector<8x64xf32>
    %149 = arith.truncf %148 : vector<8x64xf32> to vector<8x64xbf16>
    %cst_64 = arith.constant dense<0.000000e+00> : vector<8x32xf32>
    %150 = tpu.matmul %149, %140, %cst_64 {dimension_numbers = #tpu.dot_dimension_numbers<[1], [0], [0], [1], [0, 0, 1, 1], [], []>} : vector<8x64xbf16>, vector<64x32xbf16>, vector<8x32xf32> -> vector<8x32xf32>
    %151 = vector.broadcast %142 : vector<1x32xf32> to vector<8x32xf32>
    %152 = arith.addf %150, %151 : vector<8x32xf32>
    %153 = arith.addf %134, %152 : vector<8x32xf32>
    %c0_65 = arith.constant 0 : index
    %c0_66 = arith.constant 0 : index
    %c0_67 = arith.constant 0 : index
    %154 = vector.load %arg30[%c0_65, %c0_66, %c0_67] : memref<2x1x32xf32, #tpu.memory_space<vmem>>, vector<1x1x32xf32>
    %155 = vector.shape_cast %154 : vector<1x1x32xf32> to vector<1x32xf32>
    %c0_68 = arith.constant 0 : index
    %c0_69 = arith.constant 0 : index
    %c0_70 = arith.constant 0 : index
    %156 = vector.load %arg29[%c0_68, %c0_69, %c0_70] : memref<2x1x32xf32, #tpu.memory_space<vmem>>, vector<1x1x32xf32>
    %157 = vector.shape_cast %156 : vector<1x1x32xf32> to vector<1x32xf32>
    %cst_71 = arith.constant dense<0.000000e+00> : vector<8xf32>
    %158 = vector.multi_reduction <add>, %153, %cst_71 [1] : vector<8x32xf32> to vector<8xf32>
    %159 = vector.shape_cast %158 : vector<8xf32> to vector<8x1xf32>
    %cst_72 = arith.constant 3.200000e+01 : f32
    %160 = vector.broadcast %cst_72 : f32 to vector<8x1xf32>
    %161 = arith.divf %159, %160 : vector<8x1xf32>
    %162 = arith.mulf %153, %153 : vector<8x32xf32>
    %cst_73 = arith.constant dense<0.000000e+00> : vector<8xf32>
    %163 = vector.multi_reduction <add>, %162, %cst_73 [1] : vector<8x32xf32> to vector<8xf32>
    %164 = vector.shape_cast %163 : vector<8xf32> to vector<8x1xf32>
    %cst_74 = arith.constant 3.200000e+01 : f32
    %165 = vector.broadcast %cst_74 : f32 to vector<8x1xf32>
    %166 = arith.divf %164, %165 : vector<8x1xf32>
    %167 = arith.mulf %161, %161 : vector<8x1xf32>
    %168 = arith.subf %166, %167 : vector<8x1xf32>
    %169 = vector.broadcast %161 : vector<8x1xf32> to vector<8x32xf32>
    %170 = arith.subf %153, %169 : vector<8x32xf32>
    %cst_75 = arith.constant 9.99999974E-6 : f32
    %171 = vector.broadcast %cst_75 : f32 to vector<8x1xf32>
    %172 = arith.addf %168, %171 : vector<8x1xf32>
    %173 = math.rsqrt %172 : vector<8x1xf32>
    %174 = vector.broadcast %173 : vector<8x1xf32> to vector<8x32xf32>
    %175 = arith.mulf %170, %174 : vector<8x32xf32>
    %176 = vector.broadcast %155 : vector<1x32xf32> to vector<8x32xf32>
    %177 = arith.mulf %175, %176 : vector<8x32xf32>
    %178 = vector.broadcast %157 : vector<1x32xf32> to vector<8x32xf32>
    %179 = arith.addf %177, %178 : vector<8x32xf32>
    %c1 = arith.constant 1 : index
    %c0_76 = arith.constant 0 : index
    %c0_77 = arith.constant 0 : index
    %180 = vector.load %arg34[%c1, %c0_76, %c0_77] : memref<2x32x96xbf16, #tpu.memory_space<vmem>>, vector<1x32x96xbf16>
    %181 = vector.shape_cast %180 : vector<1x32x96xbf16> to vector<32x96xbf16>
    %c1_78 = arith.constant 1 : index
    %c0_79 = arith.constant 0 : index
    %c0_80 = arith.constant 0 : index
    %182 = vector.load %arg33[%c1_78, %c0_79, %c0_80] : memref<2x1x96xf32, #tpu.memory_space<vmem>>, vector<1x1x96xf32>
    %183 = vector.shape_cast %182 : vector<1x1x96xf32> to vector<1x96xf32>
    %c1_81 = arith.constant 1 : index
    %c0_82 = arith.constant 0 : index
    %c0_83 = arith.constant 0 : index
    %184 = vector.load %arg32[%c1_81, %c0_82, %c0_83] : memref<2x32x32xbf16, #tpu.memory_space<vmem>>, vector<1x32x32xbf16>
    %185 = vector.shape_cast %184 : vector<1x32x32xbf16> to vector<32x32xbf16>
    %c1_84 = arith.constant 1 : index
    %c0_85 = arith.constant 0 : index
    %c0_86 = arith.constant 0 : index
    %186 = vector.load %arg31[%c1_84, %c0_85, %c0_86] : memref<2x1x32xf32, #tpu.memory_space<vmem>>, vector<1x1x32xf32>
    %187 = vector.shape_cast %186 : vector<1x1x32xf32> to vector<1x32xf32>
    %188 = arith.truncf %179 : vector<8x32xf32> to vector<8x32xbf16>
    %cst_87 = arith.constant dense<0.000000e+00> : vector<8x96xf32>
    %189 = tpu.matmul %188, %181, %cst_87 {dimension_numbers = #tpu.dot_dimension_numbers<[1], [0], [0], [1], [0, 0, 1, 1], [], []>} : vector<8x32xbf16>, vector<32x96xbf16>, vector<8x96xf32> -> vector<8x96xf32>
    %190 = vector.broadcast %183 : vector<1x96xf32> to vector<8x96xf32>
    %191 = arith.addf %189, %190 : vector<8x96xf32>
    %192 = vector.extract_strided_slice %191 {offsets = [0, 0], sizes = [8, 32], strides = [1, 1]} : vector<8x96xf32> to vector<8x32xf32>
    %193 = vector.extract_strided_slice %191 {offsets = [0, 32], sizes = [8, 32], strides = [1, 1]} : vector<8x96xf32> to vector<8x32xf32>
    %194 = vector.extract_strided_slice %191 {offsets = [0, 64], sizes = [8, 32], strides = [1, 1]} : vector<8x96xf32> to vector<8x32xf32>
    %195 = arith.truncf %192 : vector<8x32xf32> to vector<8x32xbf16>
    %196 = arith.truncf %193 : vector<8x32xf32> to vector<8x32xbf16>
    %197 = arith.truncf %194 : vector<8x32xf32> to vector<8x32xbf16>
    %cst_88 = arith.constant 0.000000e+00 : f32
    %198 = vector.broadcast %cst_88 : f32 to vector<8x32xf32>
    %199 = vector.extract_strided_slice %195 {offsets = [0, 0], sizes = [8, 8], strides = [1, 1]} : vector<8x32xbf16> to vector<8x8xbf16>
    %200 = vector.extract_strided_slice %196 {offsets = [0, 0], sizes = [8, 8], strides = [1, 1]} : vector<8x32xbf16> to vector<8x8xbf16>
    %cst_89 = arith.constant dense<0.000000e+00> : vector<8x8xf32>
    %201 = tpu.matmul %199, %200, %cst_89 {dimension_numbers = #tpu.dot_dimension_numbers<[1], [1], [0], [0], [0, 0, 1, 0], [], []>} : vector<8x8xbf16>, vector<8x8xbf16>, vector<8x8xf32> -> vector<8x8xf32>
    %cst_90 = arith.constant dense<0xFF800000> : vector<8xf32>
    %202 = vector.multi_reduction <maximumf>, %201, %cst_90 [1] : vector<8x8xf32> to vector<8xf32>
    %203 = vector.shape_cast %202 : vector<8xf32> to vector<8x1xf32>
    %204 = vector.broadcast %203 : vector<8x1xf32> to vector<8x8xf32>
    %205 = arith.subf %201, %204 : vector<8x8xf32>
    %206 = math.exp %205 : vector<8x8xf32>
    %cst_91 = arith.constant dense<0.000000e+00> : vector<8xf32>
    %207 = vector.multi_reduction <add>, %206, %cst_91 [1] : vector<8x8xf32> to vector<8xf32>
    %208 = vector.shape_cast %207 : vector<8xf32> to vector<8x1xf32>
    %209 = tpu.reciprocal %208 {approx = true} : vector<8x1xf32> -> vector<8x1xf32>
    %210 = vector.broadcast %209 : vector<8x1xf32> to vector<8x8xf32>
    %211 = arith.mulf %206, %210 : vector<8x8xf32>
    %212 = arith.truncf %211 : vector<8x8xf32> to vector<8x8xbf16>
    %213 = vector.extract_strided_slice %197 {offsets = [0, 0], sizes = [8, 8], strides = [1, 1]} : vector<8x32xbf16> to vector<8x8xbf16>
    %cst_92 = arith.constant dense<0.000000e+00> : vector<8x8xf32>
    %214 = tpu.matmul %212, %213, %cst_92 {dimension_numbers = #tpu.dot_dimension_numbers<[1], [0], [0], [1], [0, 0, 1, 1], [], []>} : vector<8x8xbf16>, vector<8x8xbf16>, vector<8x8xf32> -> vector<8x8xf32>
    %215 = arith.truncf %214 : vector<8x8xf32> to vector<8x8xbf16>
    %216 = vector.extract_strided_slice %185 {offsets = [0, 0], sizes = [8, 32], strides = [1, 1]} : vector<32x32xbf16> to vector<8x32xbf16>
    %cst_93 = arith.constant dense<0.000000e+00> : vector<8x32xf32>
    %217 = tpu.matmul %215, %216, %cst_93 {dimension_numbers = #tpu.dot_dimension_numbers<[1], [0], [0], [1], [0, 0, 1, 1], [], []>} : vector<8x8xbf16>, vector<8x32xbf16>, vector<8x32xf32> -> vector<8x32xf32>
    %218 = arith.addf %198, %217 : vector<8x32xf32>
    %219 = vector.extract_strided_slice %195 {offsets = [0, 8], sizes = [8, 8], strides = [1, 1]} : vector<8x32xbf16> to vector<8x8xbf16>
    %220 = vector.extract_strided_slice %196 {offsets = [0, 8], sizes = [8, 8], strides = [1, 1]} : vector<8x32xbf16> to vector<8x8xbf16>
    %cst_94 = arith.constant dense<0.000000e+00> : vector<8x8xf32>
    %221 = tpu.matmul %219, %220, %cst_94 {dimension_numbers = #tpu.dot_dimension_numbers<[1], [1], [0], [0], [0, 0, 1, 0], [], []>} : vector<8x8xbf16>, vector<8x8xbf16>, vector<8x8xf32> -> vector<8x8xf32>
    %cst_95 = arith.constant dense<0xFF800000> : vector<8xf32>
    %222 = vector.multi_reduction <maximumf>, %221, %cst_95 [1] : vector<8x8xf32> to vector<8xf32>
    %223 = vector.shape_cast %222 : vector<8xf32> to vector<8x1xf32>
    %224 = vector.broadcast %223 : vector<8x1xf32> to vector<8x8xf32>
    %225 = arith.subf %221, %224 : vector<8x8xf32>
    %226 = math.exp %225 : vector<8x8xf32>
    %cst_96 = arith.constant dense<0.000000e+00> : vector<8xf32>
    %227 = vector.multi_reduction <add>, %226, %cst_96 [1] : vector<8x8xf32> to vector<8xf32>
    %228 = vector.shape_cast %227 : vector<8xf32> to vector<8x1xf32>
    %229 = tpu.reciprocal %228 {approx = true} : vector<8x1xf32> -> vector<8x1xf32>
    %230 = vector.broadcast %229 : vector<8x1xf32> to vector<8x8xf32>
    %231 = arith.mulf %226, %230 : vector<8x8xf32>
    %232 = arith.truncf %231 : vector<8x8xf32> to vector<8x8xbf16>
    %233 = vector.extract_strided_slice %197 {offsets = [0, 8], sizes = [8, 8], strides = [1, 1]} : vector<8x32xbf16> to vector<8x8xbf16>
    %cst_97 = arith.constant dense<0.000000e+00> : vector<8x8xf32>
    %234 = tpu.matmul %232, %233, %cst_97 {dimension_numbers = #tpu.dot_dimension_numbers<[1], [0], [0], [1], [0, 0, 1, 1], [], []>} : vector<8x8xbf16>, vector<8x8xbf16>, vector<8x8xf32> -> vector<8x8xf32>
    %235 = arith.truncf %234 : vector<8x8xf32> to vector<8x8xbf16>
    %236 = vector.extract_strided_slice %185 {offsets = [8, 0], sizes = [8, 32], strides = [1, 1]} : vector<32x32xbf16> to vector<8x32xbf16>
    %cst_98 = arith.constant dense<0.000000e+00> : vector<8x32xf32>
    %237 = tpu.matmul %235, %236, %cst_98 {dimension_numbers = #tpu.dot_dimension_numbers<[1], [0], [0], [1], [0, 0, 1, 1], [], []>} : vector<8x8xbf16>, vector<8x32xbf16>, vector<8x32xf32> -> vector<8x32xf32>
    %238 = arith.addf %218, %237 : vector<8x32xf32>
    %239 = vector.extract_strided_slice %195 {offsets = [0, 16], sizes = [8, 8], strides = [1, 1]} : vector<8x32xbf16> to vector<8x8xbf16>
    %240 = vector.extract_strided_slice %196 {offsets = [0, 16], sizes = [8, 8], strides = [1, 1]} : vector<8x32xbf16> to vector<8x8xbf16>
    %cst_99 = arith.constant dense<0.000000e+00> : vector<8x8xf32>
    %241 = tpu.matmul %239, %240, %cst_99 {dimension_numbers = #tpu.dot_dimension_numbers<[1], [1], [0], [0], [0, 0, 1, 0], [], []>} : vector<8x8xbf16>, vector<8x8xbf16>, vector<8x8xf32> -> vector<8x8xf32>
    %cst_100 = arith.constant dense<0xFF800000> : vector<8xf32>
    %242 = vector.multi_reduction <maximumf>, %241, %cst_100 [1] : vector<8x8xf32> to vector<8xf32>
    %243 = vector.shape_cast %242 : vector<8xf32> to vector<8x1xf32>
    %244 = vector.broadcast %243 : vector<8x1xf32> to vector<8x8xf32>
    %245 = arith.subf %241, %244 : vector<8x8xf32>
    %246 = math.exp %245 : vector<8x8xf32>
    %cst_101 = arith.constant dense<0.000000e+00> : vector<8xf32>
    %247 = vector.multi_reduction <add>, %246, %cst_101 [1] : vector<8x8xf32> to vector<8xf32>
    %248 = vector.shape_cast %247 : vector<8xf32> to vector<8x1xf32>
    %249 = tpu.reciprocal %248 {approx = true} : vector<8x1xf32> -> vector<8x1xf32>
    %250 = vector.broadcast %249 : vector<8x1xf32> to vector<8x8xf32>
    %251 = arith.mulf %246, %250 : vector<8x8xf32>
    %252 = arith.truncf %251 : vector<8x8xf32> to vector<8x8xbf16>
    %253 = vector.extract_strided_slice %197 {offsets = [0, 16], sizes = [8, 8], strides = [1, 1]} : vector<8x32xbf16> to vector<8x8xbf16>
    %cst_102 = arith.constant dense<0.000000e+00> : vector<8x8xf32>
    %254 = tpu.matmul %252, %253, %cst_102 {dimension_numbers = #tpu.dot_dimension_numbers<[1], [0], [0], [1], [0, 0, 1, 1], [], []>} : vector<8x8xbf16>, vector<8x8xbf16>, vector<8x8xf32> -> vector<8x8xf32>
    %255 = arith.truncf %254 : vector<8x8xf32> to vector<8x8xbf16>
    %256 = vector.extract_strided_slice %185 {offsets = [16, 0], sizes = [8, 32], strides = [1, 1]} : vector<32x32xbf16> to vector<8x32xbf16>
    %cst_103 = arith.constant dense<0.000000e+00> : vector<8x32xf32>
    %257 = tpu.matmul %255, %256, %cst_103 {dimension_numbers = #tpu.dot_dimension_numbers<[1], [0], [0], [1], [0, 0, 1, 1], [], []>} : vector<8x8xbf16>, vector<8x32xbf16>, vector<8x32xf32> -> vector<8x32xf32>
    %258 = arith.addf %238, %257 : vector<8x32xf32>
    %259 = vector.extract_strided_slice %195 {offsets = [0, 24], sizes = [8, 8], strides = [1, 1]} : vector<8x32xbf16> to vector<8x8xbf16>
    %260 = vector.extract_strided_slice %196 {offsets = [0, 24], sizes = [8, 8], strides = [1, 1]} : vector<8x32xbf16> to vector<8x8xbf16>
    %cst_104 = arith.constant dense<0.000000e+00> : vector<8x8xf32>
    %261 = tpu.matmul %259, %260, %cst_104 {dimension_numbers = #tpu.dot_dimension_numbers<[1], [1], [0], [0], [0, 0, 1, 0], [], []>} : vector<8x8xbf16>, vector<8x8xbf16>, vector<8x8xf32> -> vector<8x8xf32>
    %cst_105 = arith.constant dense<0xFF800000> : vector<8xf32>
    %262 = vector.multi_reduction <maximumf>, %261, %cst_105 [1] : vector<8x8xf32> to vector<8xf32>
    %263 = vector.shape_cast %262 : vector<8xf32> to vector<8x1xf32>
    %264 = vector.broadcast %263 : vector<8x1xf32> to vector<8x8xf32>
    %265 = arith.subf %261, %264 : vector<8x8xf32>
    %266 = math.exp %265 : vector<8x8xf32>
    %cst_106 = arith.constant dense<0.000000e+00> : vector<8xf32>
    %267 = vector.multi_reduction <add>, %266, %cst_106 [1] : vector<8x8xf32> to vector<8xf32>
    %268 = vector.shape_cast %267 : vector<8xf32> to vector<8x1xf32>
    %269 = tpu.reciprocal %268 {approx = true} : vector<8x1xf32> -> vector<8x1xf32>
    %270 = vector.broadcast %269 : vector<8x1xf32> to vector<8x8xf32>
    %271 = arith.mulf %266, %270 : vector<8x8xf32>
    %272 = arith.truncf %271 : vector<8x8xf32> to vector<8x8xbf16>
    %273 = vector.extract_strided_slice %197 {offsets = [0, 24], sizes = [8, 8], strides = [1, 1]} : vector<8x32xbf16> to vector<8x8xbf16>
    %cst_107 = arith.constant dense<0.000000e+00> : vector<8x8xf32>
    %274 = tpu.matmul %272, %273, %cst_107 {dimension_numbers = #tpu.dot_dimension_numbers<[1], [0], [0], [1], [0, 0, 1, 1], [], []>} : vector<8x8xbf16>, vector<8x8xbf16>, vector<8x8xf32> -> vector<8x8xf32>
    %275 = arith.truncf %274 : vector<8x8xf32> to vector<8x8xbf16>
    %276 = vector.extract_strided_slice %185 {offsets = [24, 0], sizes = [8, 32], strides = [1, 1]} : vector<32x32xbf16> to vector<8x32xbf16>
    %cst_108 = arith.constant dense<0.000000e+00> : vector<8x32xf32>
    %277 = tpu.matmul %275, %276, %cst_108 {dimension_numbers = #tpu.dot_dimension_numbers<[1], [0], [0], [1], [0, 0, 1, 1], [], []>} : vector<8x8xbf16>, vector<8x32xbf16>, vector<8x32xf32> -> vector<8x32xf32>
    %278 = arith.addf %258, %277 : vector<8x32xf32>
    %279 = vector.broadcast %187 : vector<1x32xf32> to vector<8x32xf32>
    %280 = arith.addf %278, %279 : vector<8x32xf32>
    %281 = arith.addf %179, %280 : vector<8x32xf32>
    %c1_109 = arith.constant 1 : index
    %c0_110 = arith.constant 0 : index
    %c0_111 = arith.constant 0 : index
    %282 = vector.load %arg28[%c1_109, %c0_110, %c0_111] : memref<2x1x32xf32, #tpu.memory_space<vmem>>, vector<1x1x32xf32>
    %283 = vector.shape_cast %282 : vector<1x1x32xf32> to vector<1x32xf32>
    %c1_112 = arith.constant 1 : index
    %c0_113 = arith.constant 0 : index
    %c0_114 = arith.constant 0 : index
    %284 = vector.load %arg27[%c1_112, %c0_113, %c0_114] : memref<2x1x32xf32, #tpu.memory_space<vmem>>, vector<1x1x32xf32>
    %285 = vector.shape_cast %284 : vector<1x1x32xf32> to vector<1x32xf32>
    %cst_115 = arith.constant dense<0.000000e+00> : vector<8xf32>
    %286 = vector.multi_reduction <add>, %281, %cst_115 [1] : vector<8x32xf32> to vector<8xf32>
    %287 = vector.shape_cast %286 : vector<8xf32> to vector<8x1xf32>
    %cst_116 = arith.constant 3.200000e+01 : f32
    %288 = vector.broadcast %cst_116 : f32 to vector<8x1xf32>
    %289 = arith.divf %287, %288 : vector<8x1xf32>
    %290 = arith.mulf %281, %281 : vector<8x32xf32>
    %cst_117 = arith.constant dense<0.000000e+00> : vector<8xf32>
    %291 = vector.multi_reduction <add>, %290, %cst_117 [1] : vector<8x32xf32> to vector<8xf32>
    %292 = vector.shape_cast %291 : vector<8xf32> to vector<8x1xf32>
    %cst_118 = arith.constant 3.200000e+01 : f32
    %293 = vector.broadcast %cst_118 : f32 to vector<8x1xf32>
    %294 = arith.divf %292, %293 : vector<8x1xf32>
    %295 = arith.mulf %289, %289 : vector<8x1xf32>
    %296 = arith.subf %294, %295 : vector<8x1xf32>
    %297 = vector.broadcast %289 : vector<8x1xf32> to vector<8x32xf32>
    %298 = arith.subf %281, %297 : vector<8x32xf32>
    %cst_119 = arith.constant 9.99999974E-6 : f32
    %299 = vector.broadcast %cst_119 : f32 to vector<8x1xf32>
    %300 = arith.addf %296, %299 : vector<8x1xf32>
    %301 = math.rsqrt %300 : vector<8x1xf32>
    %302 = vector.broadcast %301 : vector<8x1xf32> to vector<8x32xf32>
    %303 = arith.mulf %298, %302 : vector<8x32xf32>
    %304 = vector.broadcast %283 : vector<1x32xf32> to vector<8x32xf32>
    %305 = arith.mulf %303, %304 : vector<8x32xf32>
    %306 = vector.broadcast %285 : vector<1x32xf32> to vector<8x32xf32>
    %307 = arith.addf %305, %306 : vector<8x32xf32>
    %c1_120 = arith.constant 1 : index
    %c0_121 = arith.constant 0 : index
    %c0_122 = arith.constant 0 : index
    %308 = vector.load %arg35[%c1_120, %c0_121, %c0_122] : memref<2x32x64xbf16, #tpu.memory_space<vmem>>, vector<1x32x64xbf16>
    %309 = vector.shape_cast %308 : vector<1x32x64xbf16> to vector<32x64xbf16>
    %c1_123 = arith.constant 1 : index
    %c0_124 = arith.constant 0 : index
    %c0_125 = arith.constant 0 : index
    %310 = vector.load %arg25[%c1_123, %c0_124, %c0_125] : memref<2x1x64xf32, #tpu.memory_space<vmem>>, vector<1x1x64xf32>
    %311 = vector.shape_cast %310 : vector<1x1x64xf32> to vector<1x64xf32>
    %c1_126 = arith.constant 1 : index
    %c0_127 = arith.constant 0 : index
    %c0_128 = arith.constant 0 : index
    %312 = vector.load %arg36[%c1_126, %c0_127, %c0_128] : memref<2x64x32xbf16, #tpu.memory_space<vmem>>, vector<1x64x32xbf16>
    %313 = vector.shape_cast %312 : vector<1x64x32xbf16> to vector<64x32xbf16>
    %c1_129 = arith.constant 1 : index
    %c0_130 = arith.constant 0 : index
    %c0_131 = arith.constant 0 : index
    %314 = vector.load %arg26[%c1_129, %c0_130, %c0_131] : memref<2x1x32xf32, #tpu.memory_space<vmem>>, vector<1x1x32xf32>
    %315 = vector.shape_cast %314 : vector<1x1x32xf32> to vector<1x32xf32>
    %316 = arith.truncf %307 : vector<8x32xf32> to vector<8x32xbf16>
    %cst_132 = arith.constant dense<0.000000e+00> : vector<8x64xf32>
    %317 = tpu.matmul %316, %309, %cst_132 {dimension_numbers = #tpu.dot_dimension_numbers<[1], [0], [0], [1], [0, 0, 1, 1], [], []>} : vector<8x32xbf16>, vector<32x64xbf16>, vector<8x64xf32> -> vector<8x64xf32>
    %318 = vector.broadcast %311 : vector<1x64xf32> to vector<8x64xf32>
    %319 = arith.addf %317, %318 : vector<8x64xf32>
    %cst_133 = arith.constant 0.000000e+00 : f32
    %320 = vector.broadcast %cst_133 : f32 to vector<8x64xf32>
    %321 = arith.maximumf %319, %320 : vector<8x64xf32>
    %322 = arith.truncf %321 : vector<8x64xf32> to vector<8x64xbf16>
    %cst_134 = arith.constant dense<0.000000e+00> : vector<8x32xf32>
    %323 = tpu.matmul %322, %313, %cst_134 {dimension_numbers = #tpu.dot_dimension_numbers<[1], [0], [0], [1], [0, 0, 1, 1], [], []>} : vector<8x64xbf16>, vector<64x32xbf16>, vector<8x32xf32> -> vector<8x32xf32>
    %324 = vector.broadcast %315 : vector<1x32xf32> to vector<8x32xf32>
    %325 = arith.addf %323, %324 : vector<8x32xf32>
    %326 = arith.addf %307, %325 : vector<8x32xf32>
    %c1_135 = arith.constant 1 : index
    %c0_136 = arith.constant 0 : index
    %c0_137 = arith.constant 0 : index
    %327 = vector.load %arg30[%c1_135, %c0_136, %c0_137] : memref<2x1x32xf32, #tpu.memory_space<vmem>>, vector<1x1x32xf32>
    %328 = vector.shape_cast %327 : vector<1x1x32xf32> to vector<1x32xf32>
    %c1_138 = arith.constant 1 : index
    %c0_139 = arith.constant 0 : index
    %c0_140 = arith.constant 0 : index
    %329 = vector.load %arg29[%c1_138, %c0_139, %c0_140] : memref<2x1x32xf32, #tpu.memory_space<vmem>>, vector<1x1x32xf32>
    %330 = vector.shape_cast %329 : vector<1x1x32xf32> to vector<1x32xf32>
    %cst_141 = arith.constant dense<0.000000e+00> : vector<8xf32>
    %331 = vector.multi_reduction <add>, %326, %cst_141 [1] : vector<8x32xf32> to vector<8xf32>
    %332 = vector.shape_cast %331 : vector<8xf32> to vector<8x1xf32>
    %cst_142 = arith.constant 3.200000e+01 : f32
    %333 = vector.broadcast %cst_142 : f32 to vector<8x1xf32>
    %334 = arith.divf %332, %333 : vector<8x1xf32>
    %335 = arith.mulf %326, %326 : vector<8x32xf32>
    %cst_143 = arith.constant dense<0.000000e+00> : vector<8xf32>
    %336 = vector.multi_reduction <add>, %335, %cst_143 [1] : vector<8x32xf32> to vector<8xf32>
    %337 = vector.shape_cast %336 : vector<8xf32> to vector<8x1xf32>
    %cst_144 = arith.constant 3.200000e+01 : f32
    %338 = vector.broadcast %cst_144 : f32 to vector<8x1xf32>
    %339 = arith.divf %337, %338 : vector<8x1xf32>
    %340 = arith.mulf %334, %334 : vector<8x1xf32>
    %341 = arith.subf %339, %340 : vector<8x1xf32>
    %342 = vector.broadcast %334 : vector<8x1xf32> to vector<8x32xf32>
    %343 = arith.subf %326, %342 : vector<8x32xf32>
    %cst_145 = arith.constant 9.99999974E-6 : f32
    %344 = vector.broadcast %cst_145 : f32 to vector<8x1xf32>
    %345 = arith.addf %341, %344 : vector<8x1xf32>
    %346 = math.rsqrt %345 : vector<8x1xf32>
    %347 = vector.broadcast %346 : vector<8x1xf32> to vector<8x32xf32>
    %348 = arith.mulf %343, %347 : vector<8x32xf32>
    %349 = vector.broadcast %328 : vector<1x32xf32> to vector<8x32xf32>
    %350 = arith.mulf %348, %349 : vector<8x32xf32>
    %351 = vector.broadcast %330 : vector<1x32xf32> to vector<8x32xf32>
    %352 = arith.addf %350, %351 : vector<8x32xf32>
    %c0_146 = arith.constant 0 : index
    %c0_147 = arith.constant 0 : index
    %353 = vector.load %arg38[%c0_146, %c0_147] : memref<1x32xf32, #tpu.memory_space<vmem>>, vector<1x32xf32>
    %c0_148 = arith.constant 0 : index
    %c0_149 = arith.constant 0 : index
    %354 = vector.load %arg37[%c0_148, %c0_149] : memref<1x32xf32, #tpu.memory_space<vmem>>, vector<1x32xf32>
    %cst_150 = arith.constant dense<0.000000e+00> : vector<8xf32>
    %355 = vector.multi_reduction <add>, %352, %cst_150 [1] : vector<8x32xf32> to vector<8xf32>
    %356 = vector.shape_cast %355 : vector<8xf32> to vector<8x1xf32>
    %cst_151 = arith.constant 3.200000e+01 : f32
    %357 = vector.broadcast %cst_151 : f32 to vector<8x1xf32>
    %358 = arith.divf %356, %357 : vector<8x1xf32>
    %359 = arith.mulf %352, %352 : vector<8x32xf32>
    %cst_152 = arith.constant dense<0.000000e+00> : vector<8xf32>
    %360 = vector.multi_reduction <add>, %359, %cst_152 [1] : vector<8x32xf32> to vector<8xf32>
    %361 = vector.shape_cast %360 : vector<8xf32> to vector<8x1xf32>
    %cst_153 = arith.constant 3.200000e+01 : f32
    %362 = vector.broadcast %cst_153 : f32 to vector<8x1xf32>
    %363 = arith.divf %361, %362 : vector<8x1xf32>
    %364 = arith.mulf %358, %358 : vector<8x1xf32>
    %365 = arith.subf %363, %364 : vector<8x1xf32>
    %366 = vector.broadcast %358 : vector<8x1xf32> to vector<8x32xf32>
    %367 = arith.subf %352, %366 : vector<8x32xf32>
    %cst_154 = arith.constant 9.99999974E-6 : f32
    %368 = vector.broadcast %cst_154 : f32 to vector<8x1xf32>
    %369 = arith.addf %365, %368 : vector<8x1xf32>
    %370 = math.rsqrt %369 : vector<8x1xf32>
    %371 = vector.broadcast %370 : vector<8x1xf32> to vector<8x32xf32>
    %372 = arith.mulf %367, %371 : vector<8x32xf32>
    %373 = vector.broadcast %353 : vector<1x32xf32> to vector<8x32xf32>
    %374 = arith.mulf %372, %373 : vector<8x32xf32>
    %375 = vector.broadcast %354 : vector<1x32xf32> to vector<8x32xf32>
    %376 = arith.addf %374, %375 : vector<8x32xf32>
    %c0_155 = arith.constant 0 : index
    %c0_156 = arith.constant 0 : index
    %c0_157 = arith.constant 0 : index
    %377 = vector.load %arg18[%c0_155, %c0_156, %c0_157] : memref<2x32x96xbf16, #tpu.memory_space<vmem>>, vector<1x32x96xbf16>
    %378 = vector.shape_cast %377 : vector<1x32x96xbf16> to vector<32x96xbf16>
    %c0_158 = arith.constant 0 : index
    %c0_159 = arith.constant 0 : index
    %c0_160 = arith.constant 0 : index
    %379 = vector.load %arg17[%c0_158, %c0_159, %c0_160] : memref<2x1x96xf32, #tpu.memory_space<vmem>>, vector<1x1x96xf32>
    %380 = vector.shape_cast %379 : vector<1x1x96xf32> to vector<1x96xf32>
    %c0_161 = arith.constant 0 : index
    %c0_162 = arith.constant 0 : index
    %c0_163 = arith.constant 0 : index
    %381 = vector.load %arg16[%c0_161, %c0_162, %c0_163] : memref<2x32x32xbf16, #tpu.memory_space<vmem>>, vector<1x32x32xbf16>
    %382 = vector.shape_cast %381 : vector<1x32x32xbf16> to vector<32x32xbf16>
    %c0_164 = arith.constant 0 : index
    %c0_165 = arith.constant 0 : index
    %c0_166 = arith.constant 0 : index
    %383 = vector.load %arg15[%c0_164, %c0_165, %c0_166] : memref<2x1x32xf32, #tpu.memory_space<vmem>>, vector<1x1x32xf32>
    %384 = vector.shape_cast %383 : vector<1x1x32xf32> to vector<1x32xf32>
    %385 = arith.truncf %6 : vector<8x32xf32> to vector<8x32xbf16>
    %cst_167 = arith.constant dense<0.000000e+00> : vector<8x96xf32>
    %386 = tpu.matmul %385, %378, %cst_167 {dimension_numbers = #tpu.dot_dimension_numbers<[1], [0], [0], [1], [0, 0, 1, 1], [], []>} : vector<8x32xbf16>, vector<32x96xbf16>, vector<8x96xf32> -> vector<8x96xf32>
    %387 = vector.broadcast %380 : vector<1x96xf32> to vector<8x96xf32>
    %388 = arith.addf %386, %387 : vector<8x96xf32>
    %389 = vector.extract_strided_slice %388 {offsets = [0, 0], sizes = [8, 32], strides = [1, 1]} : vector<8x96xf32> to vector<8x32xf32>
    %390 = vector.extract_strided_slice %388 {offsets = [0, 32], sizes = [8, 32], strides = [1, 1]} : vector<8x96xf32> to vector<8x32xf32>
    %391 = vector.extract_strided_slice %388 {offsets = [0, 64], sizes = [8, 32], strides = [1, 1]} : vector<8x96xf32> to vector<8x32xf32>
    %392 = arith.truncf %389 : vector<8x32xf32> to vector<8x32xbf16>
    %393 = arith.truncf %390 : vector<8x32xf32> to vector<8x32xbf16>
    %394 = arith.truncf %391 : vector<8x32xf32> to vector<8x32xbf16>
    %cst_168 = arith.constant 0.000000e+00 : f32
    %395 = vector.broadcast %cst_168 : f32 to vector<8x32xf32>
    %396 = vector.extract_strided_slice %392 {offsets = [0, 0], sizes = [8, 8], strides = [1, 1]} : vector<8x32xbf16> to vector<8x8xbf16>
    %397 = vector.extract_strided_slice %393 {offsets = [0, 0], sizes = [8, 8], strides = [1, 1]} : vector<8x32xbf16> to vector<8x8xbf16>
    %cst_169 = arith.constant dense<0.000000e+00> : vector<8x8xf32>
    %398 = tpu.matmul %396, %397, %cst_169 {dimension_numbers = #tpu.dot_dimension_numbers<[1], [1], [0], [0], [0, 0, 1, 0], [], []>} : vector<8x8xbf16>, vector<8x8xbf16>, vector<8x8xf32> -> vector<8x8xf32>
    %cst_170 = arith.constant dense<0xFF800000> : vector<8xf32>
    %399 = vector.multi_reduction <maximumf>, %398, %cst_170 [1] : vector<8x8xf32> to vector<8xf32>
    %400 = vector.shape_cast %399 : vector<8xf32> to vector<8x1xf32>
    %401 = vector.broadcast %400 : vector<8x1xf32> to vector<8x8xf32>
    %402 = arith.subf %398, %401 : vector<8x8xf32>
    %403 = math.exp %402 : vector<8x8xf32>
    %cst_171 = arith.constant dense<0.000000e+00> : vector<8xf32>
    %404 = vector.multi_reduction <add>, %403, %cst_171 [1] : vector<8x8xf32> to vector<8xf32>
    %405 = vector.shape_cast %404 : vector<8xf32> to vector<8x1xf32>
    %406 = tpu.reciprocal %405 {approx = true} : vector<8x1xf32> -> vector<8x1xf32>
    %407 = vector.broadcast %406 : vector<8x1xf32> to vector<8x8xf32>
    %408 = arith.mulf %403, %407 : vector<8x8xf32>
    %409 = arith.truncf %408 : vector<8x8xf32> to vector<8x8xbf16>
    %410 = vector.extract_strided_slice %394 {offsets = [0, 0], sizes = [8, 8], strides = [1, 1]} : vector<8x32xbf16> to vector<8x8xbf16>
    %cst_172 = arith.constant dense<0.000000e+00> : vector<8x8xf32>
    %411 = tpu.matmul %409, %410, %cst_172 {dimension_numbers = #tpu.dot_dimension_numbers<[1], [0], [0], [1], [0, 0, 1, 1], [], []>} : vector<8x8xbf16>, vector<8x8xbf16>, vector<8x8xf32> -> vector<8x8xf32>
    %412 = arith.truncf %411 : vector<8x8xf32> to vector<8x8xbf16>
    %413 = vector.extract_strided_slice %382 {offsets = [0, 0], sizes = [8, 32], strides = [1, 1]} : vector<32x32xbf16> to vector<8x32xbf16>
    %cst_173 = arith.constant dense<0.000000e+00> : vector<8x32xf32>
    %414 = tpu.matmul %412, %413, %cst_173 {dimension_numbers = #tpu.dot_dimension_numbers<[1], [0], [0], [1], [0, 0, 1, 1], [], []>} : vector<8x8xbf16>, vector<8x32xbf16>, vector<8x32xf32> -> vector<8x32xf32>
    %415 = arith.addf %395, %414 : vector<8x32xf32>
    %416 = vector.extract_strided_slice %392 {offsets = [0, 8], sizes = [8, 8], strides = [1, 1]} : vector<8x32xbf16> to vector<8x8xbf16>
    %417 = vector.extract_strided_slice %393 {offsets = [0, 8], sizes = [8, 8], strides = [1, 1]} : vector<8x32xbf16> to vector<8x8xbf16>
    %cst_174 = arith.constant dense<0.000000e+00> : vector<8x8xf32>
    %418 = tpu.matmul %416, %417, %cst_174 {dimension_numbers = #tpu.dot_dimension_numbers<[1], [1], [0], [0], [0, 0, 1, 0], [], []>} : vector<8x8xbf16>, vector<8x8xbf16>, vector<8x8xf32> -> vector<8x8xf32>
    %cst_175 = arith.constant dense<0xFF800000> : vector<8xf32>
    %419 = vector.multi_reduction <maximumf>, %418, %cst_175 [1] : vector<8x8xf32> to vector<8xf32>
    %420 = vector.shape_cast %419 : vector<8xf32> to vector<8x1xf32>
    %421 = vector.broadcast %420 : vector<8x1xf32> to vector<8x8xf32>
    %422 = arith.subf %418, %421 : vector<8x8xf32>
    %423 = math.exp %422 : vector<8x8xf32>
    %cst_176 = arith.constant dense<0.000000e+00> : vector<8xf32>
    %424 = vector.multi_reduction <add>, %423, %cst_176 [1] : vector<8x8xf32> to vector<8xf32>
    %425 = vector.shape_cast %424 : vector<8xf32> to vector<8x1xf32>
    %426 = tpu.reciprocal %425 {approx = true} : vector<8x1xf32> -> vector<8x1xf32>
    %427 = vector.broadcast %426 : vector<8x1xf32> to vector<8x8xf32>
    %428 = arith.mulf %423, %427 : vector<8x8xf32>
    %429 = arith.truncf %428 : vector<8x8xf32> to vector<8x8xbf16>
    %430 = vector.extract_strided_slice %394 {offsets = [0, 8], sizes = [8, 8], strides = [1, 1]} : vector<8x32xbf16> to vector<8x8xbf16>
    %cst_177 = arith.constant dense<0.000000e+00> : vector<8x8xf32>
    %431 = tpu.matmul %429, %430, %cst_177 {dimension_numbers = #tpu.dot_dimension_numbers<[1], [0], [0], [1], [0, 0, 1, 1], [], []>} : vector<8x8xbf16>, vector<8x8xbf16>, vector<8x8xf32> -> vector<8x8xf32>
    %432 = arith.truncf %431 : vector<8x8xf32> to vector<8x8xbf16>
    %433 = vector.extract_strided_slice %382 {offsets = [8, 0], sizes = [8, 32], strides = [1, 1]} : vector<32x32xbf16> to vector<8x32xbf16>
    %cst_178 = arith.constant dense<0.000000e+00> : vector<8x32xf32>
    %434 = tpu.matmul %432, %433, %cst_178 {dimension_numbers = #tpu.dot_dimension_numbers<[1], [0], [0], [1], [0, 0, 1, 1], [], []>} : vector<8x8xbf16>, vector<8x32xbf16>, vector<8x32xf32> -> vector<8x32xf32>
    %435 = arith.addf %415, %434 : vector<8x32xf32>
    %436 = vector.extract_strided_slice %392 {offsets = [0, 16], sizes = [8, 8], strides = [1, 1]} : vector<8x32xbf16> to vector<8x8xbf16>
    %437 = vector.extract_strided_slice %393 {offsets = [0, 16], sizes = [8, 8], strides = [1, 1]} : vector<8x32xbf16> to vector<8x8xbf16>
    %cst_179 = arith.constant dense<0.000000e+00> : vector<8x8xf32>
    %438 = tpu.matmul %436, %437, %cst_179 {dimension_numbers = #tpu.dot_dimension_numbers<[1], [1], [0], [0], [0, 0, 1, 0], [], []>} : vector<8x8xbf16>, vector<8x8xbf16>, vector<8x8xf32> -> vector<8x8xf32>
    %cst_180 = arith.constant dense<0xFF800000> : vector<8xf32>
    %439 = vector.multi_reduction <maximumf>, %438, %cst_180 [1] : vector<8x8xf32> to vector<8xf32>
    %440 = vector.shape_cast %439 : vector<8xf32> to vector<8x1xf32>
    %441 = vector.broadcast %440 : vector<8x1xf32> to vector<8x8xf32>
    %442 = arith.subf %438, %441 : vector<8x8xf32>
    %443 = math.exp %442 : vector<8x8xf32>
    %cst_181 = arith.constant dense<0.000000e+00> : vector<8xf32>
    %444 = vector.multi_reduction <add>, %443, %cst_181 [1] : vector<8x8xf32> to vector<8xf32>
    %445 = vector.shape_cast %444 : vector<8xf32> to vector<8x1xf32>
    %446 = tpu.reciprocal %445 {approx = true} : vector<8x1xf32> -> vector<8x1xf32>
    %447 = vector.broadcast %446 : vector<8x1xf32> to vector<8x8xf32>
    %448 = arith.mulf %443, %447 : vector<8x8xf32>
    %449 = arith.truncf %448 : vector<8x8xf32> to vector<8x8xbf16>
    %450 = vector.extract_strided_slice %394 {offsets = [0, 16], sizes = [8, 8], strides = [1, 1]} : vector<8x32xbf16> to vector<8x8xbf16>
    %cst_182 = arith.constant dense<0.000000e+00> : vector<8x8xf32>
    %451 = tpu.matmul %449, %450, %cst_182 {dimension_numbers = #tpu.dot_dimension_numbers<[1], [0], [0], [1], [0, 0, 1, 1], [], []>} : vector<8x8xbf16>, vector<8x8xbf16>, vector<8x8xf32> -> vector<8x8xf32>
    %452 = arith.truncf %451 : vector<8x8xf32> to vector<8x8xbf16>
    %453 = vector.extract_strided_slice %382 {offsets = [16, 0], sizes = [8, 32], strides = [1, 1]} : vector<32x32xbf16> to vector<8x32xbf16>
    %cst_183 = arith.constant dense<0.000000e+00> : vector<8x32xf32>
    %454 = tpu.matmul %452, %453, %cst_183 {dimension_numbers = #tpu.dot_dimension_numbers<[1], [0], [0], [1], [0, 0, 1, 1], [], []>} : vector<8x8xbf16>, vector<8x32xbf16>, vector<8x32xf32> -> vector<8x32xf32>
    %455 = arith.addf %435, %454 : vector<8x32xf32>
    %456 = vector.extract_strided_slice %392 {offsets = [0, 24], sizes = [8, 8], strides = [1, 1]} : vector<8x32xbf16> to vector<8x8xbf16>
    %457 = vector.extract_strided_slice %393 {offsets = [0, 24], sizes = [8, 8], strides = [1, 1]} : vector<8x32xbf16> to vector<8x8xbf16>
    %cst_184 = arith.constant dense<0.000000e+00> : vector<8x8xf32>
    %458 = tpu.matmul %456, %457, %cst_184 {dimension_numbers = #tpu.dot_dimension_numbers<[1], [1], [0], [0], [0, 0, 1, 0], [], []>} : vector<8x8xbf16>, vector<8x8xbf16>, vector<8x8xf32> -> vector<8x8xf32>
    %cst_185 = arith.constant dense<0xFF800000> : vector<8xf32>
    %459 = vector.multi_reduction <maximumf>, %458, %cst_185 [1] : vector<8x8xf32> to vector<8xf32>
    %460 = vector.shape_cast %459 : vector<8xf32> to vector<8x1xf32>
    %461 = vector.broadcast %460 : vector<8x1xf32> to vector<8x8xf32>
    %462 = arith.subf %458, %461 : vector<8x8xf32>
    %463 = math.exp %462 : vector<8x8xf32>
    %cst_186 = arith.constant dense<0.000000e+00> : vector<8xf32>
    %464 = vector.multi_reduction <add>, %463, %cst_186 [1] : vector<8x8xf32> to vector<8xf32>
    %465 = vector.shape_cast %464 : vector<8xf32> to vector<8x1xf32>
    %466 = tpu.reciprocal %465 {approx = true} : vector<8x1xf32> -> vector<8x1xf32>
    %467 = vector.broadcast %466 : vector<8x1xf32> to vector<8x8xf32>
    %468 = arith.mulf %463, %467 : vector<8x8xf32>
    %469 = arith.truncf %468 : vector<8x8xf32> to vector<8x8xbf16>
    %470 = vector.extract_strided_slice %394 {offsets = [0, 24], sizes = [8, 8], strides = [1, 1]} : vector<8x32xbf16> to vector<8x8xbf16>
    %cst_187 = arith.constant dense<0.000000e+00> : vector<8x8xf32>
    %471 = tpu.matmul %469, %470, %cst_187 {dimension_numbers = #tpu.dot_dimension_numbers<[1], [0], [0], [1], [0, 0, 1, 1], [], []>} : vector<8x8xbf16>, vector<8x8xbf16>, vector<8x8xf32> -> vector<8x8xf32>
    %472 = arith.truncf %471 : vector<8x8xf32> to vector<8x8xbf16>
    %473 = vector.extract_strided_slice %382 {offsets = [24, 0], sizes = [8, 32], strides = [1, 1]} : vector<32x32xbf16> to vector<8x32xbf16>
    %cst_188 = arith.constant dense<0.000000e+00> : vector<8x32xf32>
    %474 = tpu.matmul %472, %473, %cst_188 {dimension_numbers = #tpu.dot_dimension_numbers<[1], [0], [0], [1], [0, 0, 1, 1], [], []>} : vector<8x8xbf16>, vector<8x32xbf16>, vector<8x32xf32> -> vector<8x32xf32>
    %475 = arith.addf %455, %474 : vector<8x32xf32>
    %476 = vector.broadcast %384 : vector<1x32xf32> to vector<8x32xf32>
    %477 = arith.addf %475, %476 : vector<8x32xf32>
    %478 = arith.addf %6, %477 : vector<8x32xf32>
    %c0_189 = arith.constant 0 : index
    %c0_190 = arith.constant 0 : index
    %c0_191 = arith.constant 0 : index
    %479 = vector.load %arg10[%c0_189, %c0_190, %c0_191] : memref<2x1x32xf32, #tpu.memory_space<vmem>>, vector<1x1x32xf32>
    %480 = vector.shape_cast %479 : vector<1x1x32xf32> to vector<1x32xf32>
    %c0_192 = arith.constant 0 : index
    %c0_193 = arith.constant 0 : index
    %c0_194 = arith.constant 0 : index
    %481 = vector.load %arg9[%c0_192, %c0_193, %c0_194] : memref<2x1x32xf32, #tpu.memory_space<vmem>>, vector<1x1x32xf32>
    %482 = vector.shape_cast %481 : vector<1x1x32xf32> to vector<1x32xf32>
    %cst_195 = arith.constant dense<0.000000e+00> : vector<8xf32>
    %483 = vector.multi_reduction <add>, %478, %cst_195 [1] : vector<8x32xf32> to vector<8xf32>
    %484 = vector.shape_cast %483 : vector<8xf32> to vector<8x1xf32>
    %cst_196 = arith.constant 3.200000e+01 : f32
    %485 = vector.broadcast %cst_196 : f32 to vector<8x1xf32>
    %486 = arith.divf %484, %485 : vector<8x1xf32>
    %487 = arith.mulf %478, %478 : vector<8x32xf32>
    %cst_197 = arith.constant dense<0.000000e+00> : vector<8xf32>
    %488 = vector.multi_reduction <add>, %487, %cst_197 [1] : vector<8x32xf32> to vector<8xf32>
    %489 = vector.shape_cast %488 : vector<8xf32> to vector<8x1xf32>
    %cst_198 = arith.constant 3.200000e+01 : f32
    %490 = vector.broadcast %cst_198 : f32 to vector<8x1xf32>
    %491 = arith.divf %489, %490 : vector<8x1xf32>
    %492 = arith.mulf %486, %486 : vector<8x1xf32>
    %493 = arith.subf %491, %492 : vector<8x1xf32>
    %494 = vector.broadcast %486 : vector<8x1xf32> to vector<8x32xf32>
    %495 = arith.subf %478, %494 : vector<8x32xf32>
    %cst_199 = arith.constant 9.99999974E-6 : f32
    %496 = vector.broadcast %cst_199 : f32 to vector<8x1xf32>
    %497 = arith.addf %493, %496 : vector<8x1xf32>
    %498 = math.rsqrt %497 : vector<8x1xf32>
    %499 = vector.broadcast %498 : vector<8x1xf32> to vector<8x32xf32>
    %500 = arith.mulf %495, %499 : vector<8x32xf32>
    %501 = vector.broadcast %480 : vector<1x32xf32> to vector<8x32xf32>
    %502 = arith.mulf %500, %501 : vector<8x32xf32>
    %503 = vector.broadcast %482 : vector<1x32xf32> to vector<8x32xf32>
    %504 = arith.addf %502, %503 : vector<8x32xf32>
    %c0_200 = arith.constant 0 : index
    %c0_201 = arith.constant 0 : index
    %c0_202 = arith.constant 0 : index
    %505 = vector.load %arg8[%c0_200, %c0_201, %c0_202] : memref<2x32x32xbf16, #tpu.memory_space<vmem>>, vector<1x32x32xbf16>
    %506 = vector.shape_cast %505 : vector<1x32x32xbf16> to vector<32x32xbf16>
    %c0_203 = arith.constant 0 : index
    %c0_204 = arith.constant 0 : index
    %c0_205 = arith.constant 0 : index
    %507 = vector.load %arg7[%c0_203, %c0_204, %c0_205] : memref<2x1x32xf32, #tpu.memory_space<vmem>>, vector<1x1x32xf32>
    %508 = vector.shape_cast %507 : vector<1x1x32xf32> to vector<1x32xf32>
    %509 = arith.truncf %504 : vector<8x32xf32> to vector<8x32xbf16>
    %cst_206 = arith.constant dense<0.000000e+00> : vector<8x32xf32>
    %510 = tpu.matmul %509, %506, %cst_206 {dimension_numbers = #tpu.dot_dimension_numbers<[1], [0], [0], [1], [0, 0, 1, 1], [], []>} : vector<8x32xbf16>, vector<32x32xbf16>, vector<8x32xf32> -> vector<8x32xf32>
    %511 = vector.broadcast %508 : vector<1x32xf32> to vector<8x32xf32>
    %512 = arith.addf %510, %511 : vector<8x32xf32>
    %c0_207 = arith.constant 0 : index
    %c0_208 = arith.constant 0 : index
    %c0_209 = arith.constant 0 : index
    %513 = vector.load %arg4[%c0_207, %c0_208, %c0_209] : memref<2x32x64xbf16, #tpu.memory_space<vmem>>, vector<1x32x64xbf16>
    %514 = vector.shape_cast %513 : vector<1x32x64xbf16> to vector<32x64xbf16>
    %c0_210 = arith.constant 0 : index
    %c0_211 = arith.constant 0 : index
    %c0_212 = arith.constant 0 : index
    %515 = vector.load %arg3[%c0_210, %c0_211, %c0_212] : memref<2x1x64xf32, #tpu.memory_space<vmem>>, vector<1x1x64xf32>
    %516 = vector.shape_cast %515 : vector<1x1x64xf32> to vector<1x64xf32>
    %517 = arith.truncf %376 : vector<8x32xf32> to vector<8x32xbf16>
    %cst_213 = arith.constant dense<0.000000e+00> : vector<8x64xf32>
    %518 = tpu.matmul %517, %514, %cst_213 {dimension_numbers = #tpu.dot_dimension_numbers<[1], [0], [0], [1], [0, 0, 1, 1], [], []>} : vector<8x32xbf16>, vector<32x64xbf16>, vector<8x64xf32> -> vector<8x64xf32>
    %519 = vector.broadcast %516 : vector<1x64xf32> to vector<8x64xf32>
    %520 = arith.addf %518, %519 : vector<8x64xf32>
    %521 = vector.extract_strided_slice %520 {offsets = [0, 0], sizes = [8, 32], strides = [1, 1]} : vector<8x64xf32> to vector<8x32xf32>
    %522 = vector.extract_strided_slice %520 {offsets = [0, 32], sizes = [8, 32], strides = [1, 1]} : vector<8x64xf32> to vector<8x32xf32>
    %c0_214 = arith.constant 0 : index
    %c0_215 = arith.constant 0 : index
    %c0_216 = arith.constant 0 : index
    %523 = vector.load %arg6[%c0_214, %c0_215, %c0_216] : memref<2x32x32xbf16, #tpu.memory_space<vmem>>, vector<1x32x32xbf16>
    %524 = vector.shape_cast %523 : vector<1x32x32xbf16> to vector<32x32xbf16>
    %c0_217 = arith.constant 0 : index
    %c0_218 = arith.constant 0 : index
    %c0_219 = arith.constant 0 : index
    %525 = vector.load %arg5[%c0_217, %c0_218, %c0_219] : memref<2x1x32xf32, #tpu.memory_space<vmem>>, vector<1x1x32xf32>
    %526 = vector.shape_cast %525 : vector<1x1x32xf32> to vector<1x32xf32>
    %527 = arith.truncf %512 : vector<8x32xf32> to vector<8x32xbf16>
    %528 = arith.truncf %521 : vector<8x32xf32> to vector<8x32xbf16>
    %529 = arith.truncf %522 : vector<8x32xf32> to vector<8x32xbf16>
    %cst_220 = arith.constant 0.000000e+00 : f32
    %530 = vector.broadcast %cst_220 : f32 to vector<8x32xf32>
    %531 = vector.extract_strided_slice %527 {offsets = [0, 0], sizes = [8, 8], strides = [1, 1]} : vector<8x32xbf16> to vector<8x8xbf16>
    %532 = vector.extract_strided_slice %528 {offsets = [0, 0], sizes = [8, 8], strides = [1, 1]} : vector<8x32xbf16> to vector<8x8xbf16>
    %cst_221 = arith.constant dense<0.000000e+00> : vector<8x8xf32>
    %533 = tpu.matmul %531, %532, %cst_221 {dimension_numbers = #tpu.dot_dimension_numbers<[1], [1], [0], [0], [0, 0, 1, 0], [], []>} : vector<8x8xbf16>, vector<8x8xbf16>, vector<8x8xf32> -> vector<8x8xf32>
    %cst_222 = arith.constant dense<0xFF800000> : vector<8xf32>
    %534 = vector.multi_reduction <maximumf>, %533, %cst_222 [1] : vector<8x8xf32> to vector<8xf32>
    %535 = vector.shape_cast %534 : vector<8xf32> to vector<8x1xf32>
    %536 = vector.broadcast %535 : vector<8x1xf32> to vector<8x8xf32>
    %537 = arith.subf %533, %536 : vector<8x8xf32>
    %538 = math.exp %537 : vector<8x8xf32>
    %cst_223 = arith.constant dense<0.000000e+00> : vector<8xf32>
    %539 = vector.multi_reduction <add>, %538, %cst_223 [1] : vector<8x8xf32> to vector<8xf32>
    %540 = vector.shape_cast %539 : vector<8xf32> to vector<8x1xf32>
    %541 = tpu.reciprocal %540 {approx = true} : vector<8x1xf32> -> vector<8x1xf32>
    %542 = vector.broadcast %541 : vector<8x1xf32> to vector<8x8xf32>
    %543 = arith.mulf %538, %542 : vector<8x8xf32>
    %544 = arith.truncf %543 : vector<8x8xf32> to vector<8x8xbf16>
    %545 = vector.extract_strided_slice %529 {offsets = [0, 0], sizes = [8, 8], strides = [1, 1]} : vector<8x32xbf16> to vector<8x8xbf16>
    %cst_224 = arith.constant dense<0.000000e+00> : vector<8x8xf32>
    %546 = tpu.matmul %544, %545, %cst_224 {dimension_numbers = #tpu.dot_dimension_numbers<[1], [0], [0], [1], [0, 0, 1, 1], [], []>} : vector<8x8xbf16>, vector<8x8xbf16>, vector<8x8xf32> -> vector<8x8xf32>
    %547 = arith.truncf %546 : vector<8x8xf32> to vector<8x8xbf16>
    %548 = vector.extract_strided_slice %524 {offsets = [0, 0], sizes = [8, 32], strides = [1, 1]} : vector<32x32xbf16> to vector<8x32xbf16>
    %cst_225 = arith.constant dense<0.000000e+00> : vector<8x32xf32>
    %549 = tpu.matmul %547, %548, %cst_225 {dimension_numbers = #tpu.dot_dimension_numbers<[1], [0], [0], [1], [0, 0, 1, 1], [], []>} : vector<8x8xbf16>, vector<8x32xbf16>, vector<8x32xf32> -> vector<8x32xf32>
    %550 = arith.addf %530, %549 : vector<8x32xf32>
    %551 = vector.extract_strided_slice %527 {offsets = [0, 8], sizes = [8, 8], strides = [1, 1]} : vector<8x32xbf16> to vector<8x8xbf16>
    %552 = vector.extract_strided_slice %528 {offsets = [0, 8], sizes = [8, 8], strides = [1, 1]} : vector<8x32xbf16> to vector<8x8xbf16>
    %cst_226 = arith.constant dense<0.000000e+00> : vector<8x8xf32>
    %553 = tpu.matmul %551, %552, %cst_226 {dimension_numbers = #tpu.dot_dimension_numbers<[1], [1], [0], [0], [0, 0, 1, 0], [], []>} : vector<8x8xbf16>, vector<8x8xbf16>, vector<8x8xf32> -> vector<8x8xf32>
    %cst_227 = arith.constant dense<0xFF800000> : vector<8xf32>
    %554 = vector.multi_reduction <maximumf>, %553, %cst_227 [1] : vector<8x8xf32> to vector<8xf32>
    %555 = vector.shape_cast %554 : vector<8xf32> to vector<8x1xf32>
    %556 = vector.broadcast %555 : vector<8x1xf32> to vector<8x8xf32>
    %557 = arith.subf %553, %556 : vector<8x8xf32>
    %558 = math.exp %557 : vector<8x8xf32>
    %cst_228 = arith.constant dense<0.000000e+00> : vector<8xf32>
    %559 = vector.multi_reduction <add>, %558, %cst_228 [1] : vector<8x8xf32> to vector<8xf32>
    %560 = vector.shape_cast %559 : vector<8xf32> to vector<8x1xf32>
    %561 = tpu.reciprocal %560 {approx = true} : vector<8x1xf32> -> vector<8x1xf32>
    %562 = vector.broadcast %561 : vector<8x1xf32> to vector<8x8xf32>
    %563 = arith.mulf %558, %562 : vector<8x8xf32>
    %564 = arith.truncf %563 : vector<8x8xf32> to vector<8x8xbf16>
    %565 = vector.extract_strided_slice %529 {offsets = [0, 8], sizes = [8, 8], strides = [1, 1]} : vector<8x32xbf16> to vector<8x8xbf16>
    %cst_229 = arith.constant dense<0.000000e+00> : vector<8x8xf32>
    %566 = tpu.matmul %564, %565, %cst_229 {dimension_numbers = #tpu.dot_dimension_numbers<[1], [0], [0], [1], [0, 0, 1, 1], [], []>} : vector<8x8xbf16>, vector<8x8xbf16>, vector<8x8xf32> -> vector<8x8xf32>
    %567 = arith.truncf %566 : vector<8x8xf32> to vector<8x8xbf16>
    %568 = vector.extract_strided_slice %524 {offsets = [8, 0], sizes = [8, 32], strides = [1, 1]} : vector<32x32xbf16> to vector<8x32xbf16>
    %cst_230 = arith.constant dense<0.000000e+00> : vector<8x32xf32>
    %569 = tpu.matmul %567, %568, %cst_230 {dimension_numbers = #tpu.dot_dimension_numbers<[1], [0], [0], [1], [0, 0, 1, 1], [], []>} : vector<8x8xbf16>, vector<8x32xbf16>, vector<8x32xf32> -> vector<8x32xf32>
    %570 = arith.addf %550, %569 : vector<8x32xf32>
    %571 = vector.extract_strided_slice %527 {offsets = [0, 16], sizes = [8, 8], strides = [1, 1]} : vector<8x32xbf16> to vector<8x8xbf16>
    %572 = vector.extract_strided_slice %528 {offsets = [0, 16], sizes = [8, 8], strides = [1, 1]} : vector<8x32xbf16> to vector<8x8xbf16>
    %cst_231 = arith.constant dense<0.000000e+00> : vector<8x8xf32>
    %573 = tpu.matmul %571, %572, %cst_231 {dimension_numbers = #tpu.dot_dimension_numbers<[1], [1], [0], [0], [0, 0, 1, 0], [], []>} : vector<8x8xbf16>, vector<8x8xbf16>, vector<8x8xf32> -> vector<8x8xf32>
    %cst_232 = arith.constant dense<0xFF800000> : vector<8xf32>
    %574 = vector.multi_reduction <maximumf>, %573, %cst_232 [1] : vector<8x8xf32> to vector<8xf32>
    %575 = vector.shape_cast %574 : vector<8xf32> to vector<8x1xf32>
    %576 = vector.broadcast %575 : vector<8x1xf32> to vector<8x8xf32>
    %577 = arith.subf %573, %576 : vector<8x8xf32>
    %578 = math.exp %577 : vector<8x8xf32>
    %cst_233 = arith.constant dense<0.000000e+00> : vector<8xf32>
    %579 = vector.multi_reduction <add>, %578, %cst_233 [1] : vector<8x8xf32> to vector<8xf32>
    %580 = vector.shape_cast %579 : vector<8xf32> to vector<8x1xf32>
    %581 = tpu.reciprocal %580 {approx = true} : vector<8x1xf32> -> vector<8x1xf32>
    %582 = vector.broadcast %581 : vector<8x1xf32> to vector<8x8xf32>
    %583 = arith.mulf %578, %582 : vector<8x8xf32>
    %584 = arith.truncf %583 : vector<8x8xf32> to vector<8x8xbf16>
    %585 = vector.extract_strided_slice %529 {offsets = [0, 16], sizes = [8, 8], strides = [1, 1]} : vector<8x32xbf16> to vector<8x8xbf16>
    %cst_234 = arith.constant dense<0.000000e+00> : vector<8x8xf32>
    %586 = tpu.matmul %584, %585, %cst_234 {dimension_numbers = #tpu.dot_dimension_numbers<[1], [0], [0], [1], [0, 0, 1, 1], [], []>} : vector<8x8xbf16>, vector<8x8xbf16>, vector<8x8xf32> -> vector<8x8xf32>
    %587 = arith.truncf %586 : vector<8x8xf32> to vector<8x8xbf16>
    %588 = vector.extract_strided_slice %524 {offsets = [16, 0], sizes = [8, 32], strides = [1, 1]} : vector<32x32xbf16> to vector<8x32xbf16>
    %cst_235 = arith.constant dense<0.000000e+00> : vector<8x32xf32>
    %589 = tpu.matmul %587, %588, %cst_235 {dimension_numbers = #tpu.dot_dimension_numbers<[1], [0], [0], [1], [0, 0, 1, 1], [], []>} : vector<8x8xbf16>, vector<8x32xbf16>, vector<8x32xf32> -> vector<8x32xf32>
    %590 = arith.addf %570, %589 : vector<8x32xf32>
    %591 = vector.extract_strided_slice %527 {offsets = [0, 24], sizes = [8, 8], strides = [1, 1]} : vector<8x32xbf16> to vector<8x8xbf16>
    %592 = vector.extract_strided_slice %528 {offsets = [0, 24], sizes = [8, 8], strides = [1, 1]} : vector<8x32xbf16> to vector<8x8xbf16>
    %cst_236 = arith.constant dense<0.000000e+00> : vector<8x8xf32>
    %593 = tpu.matmul %591, %592, %cst_236 {dimension_numbers = #tpu.dot_dimension_numbers<[1], [1], [0], [0], [0, 0, 1, 0], [], []>} : vector<8x8xbf16>, vector<8x8xbf16>, vector<8x8xf32> -> vector<8x8xf32>
    %cst_237 = arith.constant dense<0xFF800000> : vector<8xf32>
    %594 = vector.multi_reduction <maximumf>, %593, %cst_237 [1] : vector<8x8xf32> to vector<8xf32>
    %595 = vector.shape_cast %594 : vector<8xf32> to vector<8x1xf32>
    %596 = vector.broadcast %595 : vector<8x1xf32> to vector<8x8xf32>
    %597 = arith.subf %593, %596 : vector<8x8xf32>
    %598 = math.exp %597 : vector<8x8xf32>
    %cst_238 = arith.constant dense<0.000000e+00> : vector<8xf32>
    %599 = vector.multi_reduction <add>, %598, %cst_238 [1] : vector<8x8xf32> to vector<8xf32>
    %600 = vector.shape_cast %599 : vector<8xf32> to vector<8x1xf32>
    %601 = tpu.reciprocal %600 {approx = true} : vector<8x1xf32> -> vector<8x1xf32>
    %602 = vector.broadcast %601 : vector<8x1xf32> to vector<8x8xf32>
    %603 = arith.mulf %598, %602 : vector<8x8xf32>
    %604 = arith.truncf %603 : vector<8x8xf32> to vector<8x8xbf16>
    %605 = vector.extract_strided_slice %529 {offsets = [0, 24], sizes = [8, 8], strides = [1, 1]} : vector<8x32xbf16> to vector<8x8xbf16>
    %cst_239 = arith.constant dense<0.000000e+00> : vector<8x8xf32>
    %606 = tpu.matmul %604, %605, %cst_239 {dimension_numbers = #tpu.dot_dimension_numbers<[1], [0], [0], [1], [0, 0, 1, 1], [], []>} : vector<8x8xbf16>, vector<8x8xbf16>, vector<8x8xf32> -> vector<8x8xf32>
    %607 = arith.truncf %606 : vector<8x8xf32> to vector<8x8xbf16>
    %608 = vector.extract_strided_slice %524 {offsets = [24, 0], sizes = [8, 32], strides = [1, 1]} : vector<32x32xbf16> to vector<8x32xbf16>
    %cst_240 = arith.constant dense<0.000000e+00> : vector<8x32xf32>
    %609 = tpu.matmul %607, %608, %cst_240 {dimension_numbers = #tpu.dot_dimension_numbers<[1], [0], [0], [1], [0, 0, 1, 1], [], []>} : vector<8x8xbf16>, vector<8x32xbf16>, vector<8x32xf32> -> vector<8x32xf32>
    %610 = arith.addf %590, %609 : vector<8x32xf32>
    %611 = vector.broadcast %526 : vector<1x32xf32> to vector<8x32xf32>
    %612 = arith.addf %610, %611 : vector<8x32xf32>
    %613 = arith.addf %504, %612 : vector<8x32xf32>
    %c0_241 = arith.constant 0 : index
    %c0_242 = arith.constant 0 : index
    %c0_243 = arith.constant 0 : index
    %614 = vector.load %arg12[%c0_241, %c0_242, %c0_243] : memref<2x1x32xf32, #tpu.memory_space<vmem>>, vector<1x1x32xf32>
    %615 = vector.shape_cast %614 : vector<1x1x32xf32> to vector<1x32xf32>
    %c0_244 = arith.constant 0 : index
    %c0_245 = arith.constant 0 : index
    %c0_246 = arith.constant 0 : index
    %616 = vector.load %arg11[%c0_244, %c0_245, %c0_246] : memref<2x1x32xf32, #tpu.memory_space<vmem>>, vector<1x1x32xf32>
    %617 = vector.shape_cast %616 : vector<1x1x32xf32> to vector<1x32xf32>
    %cst_247 = arith.constant dense<0.000000e+00> : vector<8xf32>
    %618 = vector.multi_reduction <add>, %613, %cst_247 [1] : vector<8x32xf32> to vector<8xf32>
    %619 = vector.shape_cast %618 : vector<8xf32> to vector<8x1xf32>
    %cst_248 = arith.constant 3.200000e+01 : f32
    %620 = vector.broadcast %cst_248 : f32 to vector<8x1xf32>
    %621 = arith.divf %619, %620 : vector<8x1xf32>
    %622 = arith.mulf %613, %613 : vector<8x32xf32>
    %cst_249 = arith.constant dense<0.000000e+00> : vector<8xf32>
    %623 = vector.multi_reduction <add>, %622, %cst_249 [1] : vector<8x32xf32> to vector<8xf32>
    %624 = vector.shape_cast %623 : vector<8xf32> to vector<8x1xf32>
    %cst_250 = arith.constant 3.200000e+01 : f32
    %625 = vector.broadcast %cst_250 : f32 to vector<8x1xf32>
    %626 = arith.divf %624, %625 : vector<8x1xf32>
    %627 = arith.mulf %621, %621 : vector<8x1xf32>
    %628 = arith.subf %626, %627 : vector<8x1xf32>
    %629 = vector.broadcast %621 : vector<8x1xf32> to vector<8x32xf32>
    %630 = arith.subf %613, %629 : vector<8x32xf32>
    %cst_251 = arith.constant 9.99999974E-6 : f32
    %631 = vector.broadcast %cst_251 : f32 to vector<8x1xf32>
    %632 = arith.addf %628, %631 : vector<8x1xf32>
    %633 = math.rsqrt %632 : vector<8x1xf32>
    %634 = vector.broadcast %633 : vector<8x1xf32> to vector<8x32xf32>
    %635 = arith.mulf %630, %634 : vector<8x32xf32>
    %636 = vector.broadcast %615 : vector<1x32xf32> to vector<8x32xf32>
    %637 = arith.mulf %635, %636 : vector<8x32xf32>
    %638 = vector.broadcast %617 : vector<1x32xf32> to vector<8x32xf32>
    %639 = arith.addf %637, %638 : vector<8x32xf32>
    %c0_252 = arith.constant 0 : index
    %c0_253 = arith.constant 0 : index
    %c0_254 = arith.constant 0 : index
    %640 = vector.load %arg19[%c0_252, %c0_253, %c0_254] : memref<2x32x64xbf16, #tpu.memory_space<vmem>>, vector<1x32x64xbf16>
    %641 = vector.shape_cast %640 : vector<1x32x64xbf16> to vector<32x64xbf16>
    %c0_255 = arith.constant 0 : index
    %c0_256 = arith.constant 0 : index
    %c0_257 = arith.constant 0 : index
    %642 = vector.load %arg1[%c0_255, %c0_256, %c0_257] : memref<2x1x64xf32, #tpu.memory_space<vmem>>, vector<1x1x64xf32>
    %643 = vector.shape_cast %642 : vector<1x1x64xf32> to vector<1x64xf32>
    %c0_258 = arith.constant 0 : index
    %c0_259 = arith.constant 0 : index
    %c0_260 = arith.constant 0 : index
    %644 = vector.load %arg20[%c0_258, %c0_259, %c0_260] : memref<2x64x32xbf16, #tpu.memory_space<vmem>>, vector<1x64x32xbf16>
    %645 = vector.shape_cast %644 : vector<1x64x32xbf16> to vector<64x32xbf16>
    %c0_261 = arith.constant 0 : index
    %c0_262 = arith.constant 0 : index
    %c0_263 = arith.constant 0 : index
    %646 = vector.load %arg2[%c0_261, %c0_262, %c0_263] : memref<2x1x32xf32, #tpu.memory_space<vmem>>, vector<1x1x32xf32>
    %647 = vector.shape_cast %646 : vector<1x1x32xf32> to vector<1x32xf32>
    %648 = arith.truncf %639 : vector<8x32xf32> to vector<8x32xbf16>
    %cst_264 = arith.constant dense<0.000000e+00> : vector<8x64xf32>
    %649 = tpu.matmul %648, %641, %cst_264 {dimension_numbers = #tpu.dot_dimension_numbers<[1], [0], [0], [1], [0, 0, 1, 1], [], []>} : vector<8x32xbf16>, vector<32x64xbf16>, vector<8x64xf32> -> vector<8x64xf32>
    %650 = vector.broadcast %643 : vector<1x64xf32> to vector<8x64xf32>
    %651 = arith.addf %649, %650 : vector<8x64xf32>
    %cst_265 = arith.constant 0.000000e+00 : f32
    %652 = vector.broadcast %cst_265 : f32 to vector<8x64xf32>
    %653 = arith.maximumf %651, %652 : vector<8x64xf32>
    %654 = arith.truncf %653 : vector<8x64xf32> to vector<8x64xbf16>
    %cst_266 = arith.constant dense<0.000000e+00> : vector<8x32xf32>
    %655 = tpu.matmul %654, %645, %cst_266 {dimension_numbers = #tpu.dot_dimension_numbers<[1], [0], [0], [1], [0, 0, 1, 1], [], []>} : vector<8x64xbf16>, vector<64x32xbf16>, vector<8x32xf32> -> vector<8x32xf32>
    %656 = vector.broadcast %647 : vector<1x32xf32> to vector<8x32xf32>
    %657 = arith.addf %655, %656 : vector<8x32xf32>
    %658 = arith.addf %639, %657 : vector<8x32xf32>
    %c0_267 = arith.constant 0 : index
    %c0_268 = arith.constant 0 : index
    %c0_269 = arith.constant 0 : index
    %659 = vector.load %arg14[%c0_267, %c0_268, %c0_269] : memref<2x1x32xf32, #tpu.memory_space<vmem>>, vector<1x1x32xf32>
    %660 = vector.shape_cast %659 : vector<1x1x32xf32> to vector<1x32xf32>
    %c0_270 = arith.constant 0 : index
    %c0_271 = arith.constant 0 : index
    %c0_272 = arith.constant 0 : index
    %661 = vector.load %arg13[%c0_270, %c0_271, %c0_272] : memref<2x1x32xf32, #tpu.memory_space<vmem>>, vector<1x1x32xf32>
    %662 = vector.shape_cast %661 : vector<1x1x32xf32> to vector<1x32xf32>
    %cst_273 = arith.constant dense<0.000000e+00> : vector<8xf32>
    %663 = vector.multi_reduction <add>, %658, %cst_273 [1] : vector<8x32xf32> to vector<8xf32>
    %664 = vector.shape_cast %663 : vector<8xf32> to vector<8x1xf32>
    %cst_274 = arith.constant 3.200000e+01 : f32
    %665 = vector.broadcast %cst_274 : f32 to vector<8x1xf32>
    %666 = arith.divf %664, %665 : vector<8x1xf32>
    %667 = arith.mulf %658, %658 : vector<8x32xf32>
    %cst_275 = arith.constant dense<0.000000e+00> : vector<8xf32>
    %668 = vector.multi_reduction <add>, %667, %cst_275 [1] : vector<8x32xf32> to vector<8xf32>
    %669 = vector.shape_cast %668 : vector<8xf32> to vector<8x1xf32>
    %cst_276 = arith.constant 3.200000e+01 : f32
    %670 = vector.broadcast %cst_276 : f32 to vector<8x1xf32>
    %671 = arith.divf %669, %670 : vector<8x1xf32>
    %672 = arith.mulf %666, %666 : vector<8x1xf32>
    %673 = arith.subf %671, %672 : vector<8x1xf32>
    %674 = vector.broadcast %666 : vector<8x1xf32> to vector<8x32xf32>
    %675 = arith.subf %658, %674 : vector<8x32xf32>
    %cst_277 = arith.constant 9.99999974E-6 : f32
    %676 = vector.broadcast %cst_277 : f32 to vector<8x1xf32>
    %677 = arith.addf %673, %676 : vector<8x1xf32>
    %678 = math.rsqrt %677 : vector<8x1xf32>
    %679 = vector.broadcast %678 : vector<8x1xf32> to vector<8x32xf32>
    %680 = arith.mulf %675, %679 : vector<8x32xf32>
    %681 = vector.broadcast %660 : vector<1x32xf32> to vector<8x32xf32>
    %682 = arith.mulf %680, %681 : vector<8x32xf32>
    %683 = vector.broadcast %662 : vector<1x32xf32> to vector<8x32xf32>
    %684 = arith.addf %682, %683 : vector<8x32xf32>
    %c1_278 = arith.constant 1 : index
    %c0_279 = arith.constant 0 : index
    %c0_280 = arith.constant 0 : index
    %685 = vector.load %arg18[%c1_278, %c0_279, %c0_280] : memref<2x32x96xbf16, #tpu.memory_space<vmem>>, vector<1x32x96xbf16>
    %686 = vector.shape_cast %685 : vector<1x32x96xbf16> to vector<32x96xbf16>
    %c1_281 = arith.constant 1 : index
    %c0_282 = arith.constant 0 : index
    %c0_283 = arith.constant 0 : index
    %687 = vector.load %arg17[%c1_281, %c0_282, %c0_283] : memref<2x1x96xf32, #tpu.memory_space<vmem>>, vector<1x1x96xf32>
    %688 = vector.shape_cast %687 : vector<1x1x96xf32> to vector<1x96xf32>
    %c1_284 = arith.constant 1 : index
    %c0_285 = arith.constant 0 : index
    %c0_286 = arith.constant 0 : index
    %689 = vector.load %arg16[%c1_284, %c0_285, %c0_286] : memref<2x32x32xbf16, #tpu.memory_space<vmem>>, vector<1x32x32xbf16>
    %690 = vector.shape_cast %689 : vector<1x32x32xbf16> to vector<32x32xbf16>
    %c1_287 = arith.constant 1 : index
    %c0_288 = arith.constant 0 : index
    %c0_289 = arith.constant 0 : index
    %691 = vector.load %arg15[%c1_287, %c0_288, %c0_289] : memref<2x1x32xf32, #tpu.memory_space<vmem>>, vector<1x1x32xf32>
    %692 = vector.shape_cast %691 : vector<1x1x32xf32> to vector<1x32xf32>
    %693 = arith.truncf %684 : vector<8x32xf32> to vector<8x32xbf16>
    %cst_290 = arith.constant dense<0.000000e+00> : vector<8x96xf32>
    %694 = tpu.matmul %693, %686, %cst_290 {dimension_numbers = #tpu.dot_dimension_numbers<[1], [0], [0], [1], [0, 0, 1, 1], [], []>} : vector<8x32xbf16>, vector<32x96xbf16>, vector<8x96xf32> -> vector<8x96xf32>
    %695 = vector.broadcast %688 : vector<1x96xf32> to vector<8x96xf32>
    %696 = arith.addf %694, %695 : vector<8x96xf32>
    %697 = vector.extract_strided_slice %696 {offsets = [0, 0], sizes = [8, 32], strides = [1, 1]} : vector<8x96xf32> to vector<8x32xf32>
    %698 = vector.extract_strided_slice %696 {offsets = [0, 32], sizes = [8, 32], strides = [1, 1]} : vector<8x96xf32> to vector<8x32xf32>
    %699 = vector.extract_strided_slice %696 {offsets = [0, 64], sizes = [8, 32], strides = [1, 1]} : vector<8x96xf32> to vector<8x32xf32>
    %700 = arith.truncf %697 : vector<8x32xf32> to vector<8x32xbf16>
    %701 = arith.truncf %698 : vector<8x32xf32> to vector<8x32xbf16>
    %702 = arith.truncf %699 : vector<8x32xf32> to vector<8x32xbf16>
    %cst_291 = arith.constant 0.000000e+00 : f32
    %703 = vector.broadcast %cst_291 : f32 to vector<8x32xf32>
    %704 = vector.extract_strided_slice %700 {offsets = [0, 0], sizes = [8, 8], strides = [1, 1]} : vector<8x32xbf16> to vector<8x8xbf16>
    %705 = vector.extract_strided_slice %701 {offsets = [0, 0], sizes = [8, 8], strides = [1, 1]} : vector<8x32xbf16> to vector<8x8xbf16>
    %cst_292 = arith.constant dense<0.000000e+00> : vector<8x8xf32>
    %706 = tpu.matmul %704, %705, %cst_292 {dimension_numbers = #tpu.dot_dimension_numbers<[1], [1], [0], [0], [0, 0, 1, 0], [], []>} : vector<8x8xbf16>, vector<8x8xbf16>, vector<8x8xf32> -> vector<8x8xf32>
    %cst_293 = arith.constant dense<0xFF800000> : vector<8xf32>
    %707 = vector.multi_reduction <maximumf>, %706, %cst_293 [1] : vector<8x8xf32> to vector<8xf32>
    %708 = vector.shape_cast %707 : vector<8xf32> to vector<8x1xf32>
    %709 = vector.broadcast %708 : vector<8x1xf32> to vector<8x8xf32>
    %710 = arith.subf %706, %709 : vector<8x8xf32>
    %711 = math.exp %710 : vector<8x8xf32>
    %cst_294 = arith.constant dense<0.000000e+00> : vector<8xf32>
    %712 = vector.multi_reduction <add>, %711, %cst_294 [1] : vector<8x8xf32> to vector<8xf32>
    %713 = vector.shape_cast %712 : vector<8xf32> to vector<8x1xf32>
    %714 = tpu.reciprocal %713 {approx = true} : vector<8x1xf32> -> vector<8x1xf32>
    %715 = vector.broadcast %714 : vector<8x1xf32> to vector<8x8xf32>
    %716 = arith.mulf %711, %715 : vector<8x8xf32>
    %717 = arith.truncf %716 : vector<8x8xf32> to vector<8x8xbf16>
    %718 = vector.extract_strided_slice %702 {offsets = [0, 0], sizes = [8, 8], strides = [1, 1]} : vector<8x32xbf16> to vector<8x8xbf16>
    %cst_295 = arith.constant dense<0.000000e+00> : vector<8x8xf32>
    %719 = tpu.matmul %717, %718, %cst_295 {dimension_numbers = #tpu.dot_dimension_numbers<[1], [0], [0], [1], [0, 0, 1, 1], [], []>} : vector<8x8xbf16>, vector<8x8xbf16>, vector<8x8xf32> -> vector<8x8xf32>
    %720 = arith.truncf %719 : vector<8x8xf32> to vector<8x8xbf16>
    %721 = vector.extract_strided_slice %690 {offsets = [0, 0], sizes = [8, 32], strides = [1, 1]} : vector<32x32xbf16> to vector<8x32xbf16>
    %cst_296 = arith.constant dense<0.000000e+00> : vector<8x32xf32>
    %722 = tpu.matmul %720, %721, %cst_296 {dimension_numbers = #tpu.dot_dimension_numbers<[1], [0], [0], [1], [0, 0, 1, 1], [], []>} : vector<8x8xbf16>, vector<8x32xbf16>, vector<8x32xf32> -> vector<8x32xf32>
    %723 = arith.addf %703, %722 : vector<8x32xf32>
    %724 = vector.extract_strided_slice %700 {offsets = [0, 8], sizes = [8, 8], strides = [1, 1]} : vector<8x32xbf16> to vector<8x8xbf16>
    %725 = vector.extract_strided_slice %701 {offsets = [0, 8], sizes = [8, 8], strides = [1, 1]} : vector<8x32xbf16> to vector<8x8xbf16>
    %cst_297 = arith.constant dense<0.000000e+00> : vector<8x8xf32>
    %726 = tpu.matmul %724, %725, %cst_297 {dimension_numbers = #tpu.dot_dimension_numbers<[1], [1], [0], [0], [0, 0, 1, 0], [], []>} : vector<8x8xbf16>, vector<8x8xbf16>, vector<8x8xf32> -> vector<8x8xf32>
    %cst_298 = arith.constant dense<0xFF800000> : vector<8xf32>
    %727 = vector.multi_reduction <maximumf>, %726, %cst_298 [1] : vector<8x8xf32> to vector<8xf32>
    %728 = vector.shape_cast %727 : vector<8xf32> to vector<8x1xf32>
    %729 = vector.broadcast %728 : vector<8x1xf32> to vector<8x8xf32>
    %730 = arith.subf %726, %729 : vector<8x8xf32>
    %731 = math.exp %730 : vector<8x8xf32>
    %cst_299 = arith.constant dense<0.000000e+00> : vector<8xf32>
    %732 = vector.multi_reduction <add>, %731, %cst_299 [1] : vector<8x8xf32> to vector<8xf32>
    %733 = vector.shape_cast %732 : vector<8xf32> to vector<8x1xf32>
    %734 = tpu.reciprocal %733 {approx = true} : vector<8x1xf32> -> vector<8x1xf32>
    %735 = vector.broadcast %734 : vector<8x1xf32> to vector<8x8xf32>
    %736 = arith.mulf %731, %735 : vector<8x8xf32>
    %737 = arith.truncf %736 : vector<8x8xf32> to vector<8x8xbf16>
    %738 = vector.extract_strided_slice %702 {offsets = [0, 8], sizes = [8, 8], strides = [1, 1]} : vector<8x32xbf16> to vector<8x8xbf16>
    %cst_300 = arith.constant dense<0.000000e+00> : vector<8x8xf32>
    %739 = tpu.matmul %737, %738, %cst_300 {dimension_numbers = #tpu.dot_dimension_numbers<[1], [0], [0], [1], [0, 0, 1, 1], [], []>} : vector<8x8xbf16>, vector<8x8xbf16>, vector<8x8xf32> -> vector<8x8xf32>
    %740 = arith.truncf %739 : vector<8x8xf32> to vector<8x8xbf16>
    %741 = vector.extract_strided_slice %690 {offsets = [8, 0], sizes = [8, 32], strides = [1, 1]} : vector<32x32xbf16> to vector<8x32xbf16>
    %cst_301 = arith.constant dense<0.000000e+00> : vector<8x32xf32>
    %742 = tpu.matmul %740, %741, %cst_301 {dimension_numbers = #tpu.dot_dimension_numbers<[1], [0], [0], [1], [0, 0, 1, 1], [], []>} : vector<8x8xbf16>, vector<8x32xbf16>, vector<8x32xf32> -> vector<8x32xf32>
    %743 = arith.addf %723, %742 : vector<8x32xf32>
    %744 = vector.extract_strided_slice %700 {offsets = [0, 16], sizes = [8, 8], strides = [1, 1]} : vector<8x32xbf16> to vector<8x8xbf16>
    %745 = vector.extract_strided_slice %701 {offsets = [0, 16], sizes = [8, 8], strides = [1, 1]} : vector<8x32xbf16> to vector<8x8xbf16>
    %cst_302 = arith.constant dense<0.000000e+00> : vector<8x8xf32>
    %746 = tpu.matmul %744, %745, %cst_302 {dimension_numbers = #tpu.dot_dimension_numbers<[1], [1], [0], [0], [0, 0, 1, 0], [], []>} : vector<8x8xbf16>, vector<8x8xbf16>, vector<8x8xf32> -> vector<8x8xf32>
    %cst_303 = arith.constant dense<0xFF800000> : vector<8xf32>
    %747 = vector.multi_reduction <maximumf>, %746, %cst_303 [1] : vector<8x8xf32> to vector<8xf32>
    %748 = vector.shape_cast %747 : vector<8xf32> to vector<8x1xf32>
    %749 = vector.broadcast %748 : vector<8x1xf32> to vector<8x8xf32>
    %750 = arith.subf %746, %749 : vector<8x8xf32>
    %751 = math.exp %750 : vector<8x8xf32>
    %cst_304 = arith.constant dense<0.000000e+00> : vector<8xf32>
    %752 = vector.multi_reduction <add>, %751, %cst_304 [1] : vector<8x8xf32> to vector<8xf32>
    %753 = vector.shape_cast %752 : vector<8xf32> to vector<8x1xf32>
    %754 = tpu.reciprocal %753 {approx = true} : vector<8x1xf32> -> vector<8x1xf32>
    %755 = vector.broadcast %754 : vector<8x1xf32> to vector<8x8xf32>
    %756 = arith.mulf %751, %755 : vector<8x8xf32>
    %757 = arith.truncf %756 : vector<8x8xf32> to vector<8x8xbf16>
    %758 = vector.extract_strided_slice %702 {offsets = [0, 16], sizes = [8, 8], strides = [1, 1]} : vector<8x32xbf16> to vector<8x8xbf16>
    %cst_305 = arith.constant dense<0.000000e+00> : vector<8x8xf32>
    %759 = tpu.matmul %757, %758, %cst_305 {dimension_numbers = #tpu.dot_dimension_numbers<[1], [0], [0], [1], [0, 0, 1, 1], [], []>} : vector<8x8xbf16>, vector<8x8xbf16>, vector<8x8xf32> -> vector<8x8xf32>
    %760 = arith.truncf %759 : vector<8x8xf32> to vector<8x8xbf16>
    %761 = vector.extract_strided_slice %690 {offsets = [16, 0], sizes = [8, 32], strides = [1, 1]} : vector<32x32xbf16> to vector<8x32xbf16>
    %cst_306 = arith.constant dense<0.000000e+00> : vector<8x32xf32>
    %762 = tpu.matmul %760, %761, %cst_306 {dimension_numbers = #tpu.dot_dimension_numbers<[1], [0], [0], [1], [0, 0, 1, 1], [], []>} : vector<8x8xbf16>, vector<8x32xbf16>, vector<8x32xf32> -> vector<8x32xf32>
    %763 = arith.addf %743, %762 : vector<8x32xf32>
    %764 = vector.extract_strided_slice %700 {offsets = [0, 24], sizes = [8, 8], strides = [1, 1]} : vector<8x32xbf16> to vector<8x8xbf16>
    %765 = vector.extract_strided_slice %701 {offsets = [0, 24], sizes = [8, 8], strides = [1, 1]} : vector<8x32xbf16> to vector<8x8xbf16>
    %cst_307 = arith.constant dense<0.000000e+00> : vector<8x8xf32>
    %766 = tpu.matmul %764, %765, %cst_307 {dimension_numbers = #tpu.dot_dimension_numbers<[1], [1], [0], [0], [0, 0, 1, 0], [], []>} : vector<8x8xbf16>, vector<8x8xbf16>, vector<8x8xf32> -> vector<8x8xf32>
    %cst_308 = arith.constant dense<0xFF800000> : vector<8xf32>
    %767 = vector.multi_reduction <maximumf>, %766, %cst_308 [1] : vector<8x8xf32> to vector<8xf32>
    %768 = vector.shape_cast %767 : vector<8xf32> to vector<8x1xf32>
    %769 = vector.broadcast %768 : vector<8x1xf32> to vector<8x8xf32>
    %770 = arith.subf %766, %769 : vector<8x8xf32>
    %771 = math.exp %770 : vector<8x8xf32>
    %cst_309 = arith.constant dense<0.000000e+00> : vector<8xf32>
    %772 = vector.multi_reduction <add>, %771, %cst_309 [1] : vector<8x8xf32> to vector<8xf32>
    %773 = vector.shape_cast %772 : vector<8xf32> to vector<8x1xf32>
    %774 = tpu.reciprocal %773 {approx = true} : vector<8x1xf32> -> vector<8x1xf32>
    %775 = vector.broadcast %774 : vector<8x1xf32> to vector<8x8xf32>
    %776 = arith.mulf %771, %775 : vector<8x8xf32>
    %777 = arith.truncf %776 : vector<8x8xf32> to vector<8x8xbf16>
    %778 = vector.extract_strided_slice %702 {offsets = [0, 24], sizes = [8, 8], strides = [1, 1]} : vector<8x32xbf16> to vector<8x8xbf16>
    %cst_310 = arith.constant dense<0.000000e+00> : vector<8x8xf32>
    %779 = tpu.matmul %777, %778, %cst_310 {dimension_numbers = #tpu.dot_dimension_numbers<[1], [0], [0], [1], [0, 0, 1, 1], [], []>} : vector<8x8xbf16>, vector<8x8xbf16>, vector<8x8xf32> -> vector<8x8xf32>
    %780 = arith.truncf %779 : vector<8x8xf32> to vector<8x8xbf16>
    %781 = vector.extract_strided_slice %690 {offsets = [24, 0], sizes = [8, 32], strides = [1, 1]} : vector<32x32xbf16> to vector<8x32xbf16>
    %cst_311 = arith.constant dense<0.000000e+00> : vector<8x32xf32>
    %782 = tpu.matmul %780, %781, %cst_311 {dimension_numbers = #tpu.dot_dimension_numbers<[1], [0], [0], [1], [0, 0, 1, 1], [], []>} : vector<8x8xbf16>, vector<8x32xbf16>, vector<8x32xf32> -> vector<8x32xf32>
    %783 = arith.addf %763, %782 : vector<8x32xf32>
    %784 = vector.broadcast %692 : vector<1x32xf32> to vector<8x32xf32>
    %785 = arith.addf %783, %784 : vector<8x32xf32>
    %786 = arith.addf %684, %785 : vector<8x32xf32>
    %c1_312 = arith.constant 1 : index
    %c0_313 = arith.constant 0 : index
    %c0_314 = arith.constant 0 : index
    %787 = vector.load %arg10[%c1_312, %c0_313, %c0_314] : memref<2x1x32xf32, #tpu.memory_space<vmem>>, vector<1x1x32xf32>
    %788 = vector.shape_cast %787 : vector<1x1x32xf32> to vector<1x32xf32>
    %c1_315 = arith.constant 1 : index
    %c0_316 = arith.constant 0 : index
    %c0_317 = arith.constant 0 : index
    %789 = vector.load %arg9[%c1_315, %c0_316, %c0_317] : memref<2x1x32xf32, #tpu.memory_space<vmem>>, vector<1x1x32xf32>
    %790 = vector.shape_cast %789 : vector<1x1x32xf32> to vector<1x32xf32>
    %cst_318 = arith.constant dense<0.000000e+00> : vector<8xf32>
    %791 = vector.multi_reduction <add>, %786, %cst_318 [1] : vector<8x32xf32> to vector<8xf32>
    %792 = vector.shape_cast %791 : vector<8xf32> to vector<8x1xf32>
    %cst_319 = arith.constant 3.200000e+01 : f32
    %793 = vector.broadcast %cst_319 : f32 to vector<8x1xf32>
    %794 = arith.divf %792, %793 : vector<8x1xf32>
    %795 = arith.mulf %786, %786 : vector<8x32xf32>
    %cst_320 = arith.constant dense<0.000000e+00> : vector<8xf32>
    %796 = vector.multi_reduction <add>, %795, %cst_320 [1] : vector<8x32xf32> to vector<8xf32>
    %797 = vector.shape_cast %796 : vector<8xf32> to vector<8x1xf32>
    %cst_321 = arith.constant 3.200000e+01 : f32
    %798 = vector.broadcast %cst_321 : f32 to vector<8x1xf32>
    %799 = arith.divf %797, %798 : vector<8x1xf32>
    %800 = arith.mulf %794, %794 : vector<8x1xf32>
    %801 = arith.subf %799, %800 : vector<8x1xf32>
    %802 = vector.broadcast %794 : vector<8x1xf32> to vector<8x32xf32>
    %803 = arith.subf %786, %802 : vector<8x32xf32>
    %cst_322 = arith.constant 9.99999974E-6 : f32
    %804 = vector.broadcast %cst_322 : f32 to vector<8x1xf32>
    %805 = arith.addf %801, %804 : vector<8x1xf32>
    %806 = math.rsqrt %805 : vector<8x1xf32>
    %807 = vector.broadcast %806 : vector<8x1xf32> to vector<8x32xf32>
    %808 = arith.mulf %803, %807 : vector<8x32xf32>
    %809 = vector.broadcast %788 : vector<1x32xf32> to vector<8x32xf32>
    %810 = arith.mulf %808, %809 : vector<8x32xf32>
    %811 = vector.broadcast %790 : vector<1x32xf32> to vector<8x32xf32>
    %812 = arith.addf %810, %811 : vector<8x32xf32>
    %c1_323 = arith.constant 1 : index
    %c0_324 = arith.constant 0 : index
    %c0_325 = arith.constant 0 : index
    %813 = vector.load %arg8[%c1_323, %c0_324, %c0_325] : memref<2x32x32xbf16, #tpu.memory_space<vmem>>, vector<1x32x32xbf16>
    %814 = vector.shape_cast %813 : vector<1x32x32xbf16> to vector<32x32xbf16>
    %c1_326 = arith.constant 1 : index
    %c0_327 = arith.constant 0 : index
    %c0_328 = arith.constant 0 : index
    %815 = vector.load %arg7[%c1_326, %c0_327, %c0_328] : memref<2x1x32xf32, #tpu.memory_space<vmem>>, vector<1x1x32xf32>
    %816 = vector.shape_cast %815 : vector<1x1x32xf32> to vector<1x32xf32>
    %817 = arith.truncf %812 : vector<8x32xf32> to vector<8x32xbf16>
    %cst_329 = arith.constant dense<0.000000e+00> : vector<8x32xf32>
    %818 = tpu.matmul %817, %814, %cst_329 {dimension_numbers = #tpu.dot_dimension_numbers<[1], [0], [0], [1], [0, 0, 1, 1], [], []>} : vector<8x32xbf16>, vector<32x32xbf16>, vector<8x32xf32> -> vector<8x32xf32>
    %819 = vector.broadcast %816 : vector<1x32xf32> to vector<8x32xf32>
    %820 = arith.addf %818, %819 : vector<8x32xf32>
    %c1_330 = arith.constant 1 : index
    %c0_331 = arith.constant 0 : index
    %c0_332 = arith.constant 0 : index
    %821 = vector.load %arg4[%c1_330, %c0_331, %c0_332] : memref<2x32x64xbf16, #tpu.memory_space<vmem>>, vector<1x32x64xbf16>
    %822 = vector.shape_cast %821 : vector<1x32x64xbf16> to vector<32x64xbf16>
    %c1_333 = arith.constant 1 : index
    %c0_334 = arith.constant 0 : index
    %c0_335 = arith.constant 0 : index
    %823 = vector.load %arg3[%c1_333, %c0_334, %c0_335] : memref<2x1x64xf32, #tpu.memory_space<vmem>>, vector<1x1x64xf32>
    %824 = vector.shape_cast %823 : vector<1x1x64xf32> to vector<1x64xf32>
    %825 = arith.truncf %376 : vector<8x32xf32> to vector<8x32xbf16>
    %cst_336 = arith.constant dense<0.000000e+00> : vector<8x64xf32>
    %826 = tpu.matmul %825, %822, %cst_336 {dimension_numbers = #tpu.dot_dimension_numbers<[1], [0], [0], [1], [0, 0, 1, 1], [], []>} : vector<8x32xbf16>, vector<32x64xbf16>, vector<8x64xf32> -> vector<8x64xf32>
    %827 = vector.broadcast %824 : vector<1x64xf32> to vector<8x64xf32>
    %828 = arith.addf %826, %827 : vector<8x64xf32>
    %829 = vector.extract_strided_slice %828 {offsets = [0, 0], sizes = [8, 32], strides = [1, 1]} : vector<8x64xf32> to vector<8x32xf32>
    %830 = vector.extract_strided_slice %828 {offsets = [0, 32], sizes = [8, 32], strides = [1, 1]} : vector<8x64xf32> to vector<8x32xf32>
    %c1_337 = arith.constant 1 : index
    %c0_338 = arith.constant 0 : index
    %c0_339 = arith.constant 0 : index
    %831 = vector.load %arg6[%c1_337, %c0_338, %c0_339] : memref<2x32x32xbf16, #tpu.memory_space<vmem>>, vector<1x32x32xbf16>
    %832 = vector.shape_cast %831 : vector<1x32x32xbf16> to vector<32x32xbf16>
    %c1_340 = arith.constant 1 : index
    %c0_341 = arith.constant 0 : index
    %c0_342 = arith.constant 0 : index
    %833 = vector.load %arg5[%c1_340, %c0_341, %c0_342] : memref<2x1x32xf32, #tpu.memory_space<vmem>>, vector<1x1x32xf32>
    %834 = vector.shape_cast %833 : vector<1x1x32xf32> to vector<1x32xf32>
    %835 = arith.truncf %820 : vector<8x32xf32> to vector<8x32xbf16>
    %836 = arith.truncf %829 : vector<8x32xf32> to vector<8x32xbf16>
    %837 = arith.truncf %830 : vector<8x32xf32> to vector<8x32xbf16>
    %cst_343 = arith.constant 0.000000e+00 : f32
    %838 = vector.broadcast %cst_343 : f32 to vector<8x32xf32>
    %839 = vector.extract_strided_slice %835 {offsets = [0, 0], sizes = [8, 8], strides = [1, 1]} : vector<8x32xbf16> to vector<8x8xbf16>
    %840 = vector.extract_strided_slice %836 {offsets = [0, 0], sizes = [8, 8], strides = [1, 1]} : vector<8x32xbf16> to vector<8x8xbf16>
    %cst_344 = arith.constant dense<0.000000e+00> : vector<8x8xf32>
    %841 = tpu.matmul %839, %840, %cst_344 {dimension_numbers = #tpu.dot_dimension_numbers<[1], [1], [0], [0], [0, 0, 1, 0], [], []>} : vector<8x8xbf16>, vector<8x8xbf16>, vector<8x8xf32> -> vector<8x8xf32>
    %cst_345 = arith.constant dense<0xFF800000> : vector<8xf32>
    %842 = vector.multi_reduction <maximumf>, %841, %cst_345 [1] : vector<8x8xf32> to vector<8xf32>
    %843 = vector.shape_cast %842 : vector<8xf32> to vector<8x1xf32>
    %844 = vector.broadcast %843 : vector<8x1xf32> to vector<8x8xf32>
    %845 = arith.subf %841, %844 : vector<8x8xf32>
    %846 = math.exp %845 : vector<8x8xf32>
    %cst_346 = arith.constant dense<0.000000e+00> : vector<8xf32>
    %847 = vector.multi_reduction <add>, %846, %cst_346 [1] : vector<8x8xf32> to vector<8xf32>
    %848 = vector.shape_cast %847 : vector<8xf32> to vector<8x1xf32>
    %849 = tpu.reciprocal %848 {approx = true} : vector<8x1xf32> -> vector<8x1xf32>
    %850 = vector.broadcast %849 : vector<8x1xf32> to vector<8x8xf32>
    %851 = arith.mulf %846, %850 : vector<8x8xf32>
    %852 = arith.truncf %851 : vector<8x8xf32> to vector<8x8xbf16>
    %853 = vector.extract_strided_slice %837 {offsets = [0, 0], sizes = [8, 8], strides = [1, 1]} : vector<8x32xbf16> to vector<8x8xbf16>
    %cst_347 = arith.constant dense<0.000000e+00> : vector<8x8xf32>
    %854 = tpu.matmul %852, %853, %cst_347 {dimension_numbers = #tpu.dot_dimension_numbers<[1], [0], [0], [1], [0, 0, 1, 1], [], []>} : vector<8x8xbf16>, vector<8x8xbf16>, vector<8x8xf32> -> vector<8x8xf32>
    %855 = arith.truncf %854 : vector<8x8xf32> to vector<8x8xbf16>
    %856 = vector.extract_strided_slice %832 {offsets = [0, 0], sizes = [8, 32], strides = [1, 1]} : vector<32x32xbf16> to vector<8x32xbf16>
    %cst_348 = arith.constant dense<0.000000e+00> : vector<8x32xf32>
    %857 = tpu.matmul %855, %856, %cst_348 {dimension_numbers = #tpu.dot_dimension_numbers<[1], [0], [0], [1], [0, 0, 1, 1], [], []>} : vector<8x8xbf16>, vector<8x32xbf16>, vector<8x32xf32> -> vector<8x32xf32>
    %858 = arith.addf %838, %857 : vector<8x32xf32>
    %859 = vector.extract_strided_slice %835 {offsets = [0, 8], sizes = [8, 8], strides = [1, 1]} : vector<8x32xbf16> to vector<8x8xbf16>
    %860 = vector.extract_strided_slice %836 {offsets = [0, 8], sizes = [8, 8], strides = [1, 1]} : vector<8x32xbf16> to vector<8x8xbf16>
    %cst_349 = arith.constant dense<0.000000e+00> : vector<8x8xf32>
    %861 = tpu.matmul %859, %860, %cst_349 {dimension_numbers = #tpu.dot_dimension_numbers<[1], [1], [0], [0], [0, 0, 1, 0], [], []>} : vector<8x8xbf16>, vector<8x8xbf16>, vector<8x8xf32> -> vector<8x8xf32>
    %cst_350 = arith.constant dense<0xFF800000> : vector<8xf32>
    %862 = vector.multi_reduction <maximumf>, %861, %cst_350 [1] : vector<8x8xf32> to vector<8xf32>
    %863 = vector.shape_cast %862 : vector<8xf32> to vector<8x1xf32>
    %864 = vector.broadcast %863 : vector<8x1xf32> to vector<8x8xf32>
    %865 = arith.subf %861, %864 : vector<8x8xf32>
    %866 = math.exp %865 : vector<8x8xf32>
    %cst_351 = arith.constant dense<0.000000e+00> : vector<8xf32>
    %867 = vector.multi_reduction <add>, %866, %cst_351 [1] : vector<8x8xf32> to vector<8xf32>
    %868 = vector.shape_cast %867 : vector<8xf32> to vector<8x1xf32>
    %869 = tpu.reciprocal %868 {approx = true} : vector<8x1xf32> -> vector<8x1xf32>
    %870 = vector.broadcast %869 : vector<8x1xf32> to vector<8x8xf32>
    %871 = arith.mulf %866, %870 : vector<8x8xf32>
    %872 = arith.truncf %871 : vector<8x8xf32> to vector<8x8xbf16>
    %873 = vector.extract_strided_slice %837 {offsets = [0, 8], sizes = [8, 8], strides = [1, 1]} : vector<8x32xbf16> to vector<8x8xbf16>
    %cst_352 = arith.constant dense<0.000000e+00> : vector<8x8xf32>
    %874 = tpu.matmul %872, %873, %cst_352 {dimension_numbers = #tpu.dot_dimension_numbers<[1], [0], [0], [1], [0, 0, 1, 1], [], []>} : vector<8x8xbf16>, vector<8x8xbf16>, vector<8x8xf32> -> vector<8x8xf32>
    %875 = arith.truncf %874 : vector<8x8xf32> to vector<8x8xbf16>
    %876 = vector.extract_strided_slice %832 {offsets = [8, 0], sizes = [8, 32], strides = [1, 1]} : vector<32x32xbf16> to vector<8x32xbf16>
    %cst_353 = arith.constant dense<0.000000e+00> : vector<8x32xf32>
    %877 = tpu.matmul %875, %876, %cst_353 {dimension_numbers = #tpu.dot_dimension_numbers<[1], [0], [0], [1], [0, 0, 1, 1], [], []>} : vector<8x8xbf16>, vector<8x32xbf16>, vector<8x32xf32> -> vector<8x32xf32>
    %878 = arith.addf %858, %877 : vector<8x32xf32>
    %879 = vector.extract_strided_slice %835 {offsets = [0, 16], sizes = [8, 8], strides = [1, 1]} : vector<8x32xbf16> to vector<8x8xbf16>
    %880 = vector.extract_strided_slice %836 {offsets = [0, 16], sizes = [8, 8], strides = [1, 1]} : vector<8x32xbf16> to vector<8x8xbf16>
    %cst_354 = arith.constant dense<0.000000e+00> : vector<8x8xf32>
    %881 = tpu.matmul %879, %880, %cst_354 {dimension_numbers = #tpu.dot_dimension_numbers<[1], [1], [0], [0], [0, 0, 1, 0], [], []>} : vector<8x8xbf16>, vector<8x8xbf16>, vector<8x8xf32> -> vector<8x8xf32>
    %cst_355 = arith.constant dense<0xFF800000> : vector<8xf32>
    %882 = vector.multi_reduction <maximumf>, %881, %cst_355 [1] : vector<8x8xf32> to vector<8xf32>
    %883 = vector.shape_cast %882 : vector<8xf32> to vector<8x1xf32>
    %884 = vector.broadcast %883 : vector<8x1xf32> to vector<8x8xf32>
    %885 = arith.subf %881, %884 : vector<8x8xf32>
    %886 = math.exp %885 : vector<8x8xf32>
    %cst_356 = arith.constant dense<0.000000e+00> : vector<8xf32>
    %887 = vector.multi_reduction <add>, %886, %cst_356 [1] : vector<8x8xf32> to vector<8xf32>
    %888 = vector.shape_cast %887 : vector<8xf32> to vector<8x1xf32>
    %889 = tpu.reciprocal %888 {approx = true} : vector<8x1xf32> -> vector<8x1xf32>
    %890 = vector.broadcast %889 : vector<8x1xf32> to vector<8x8xf32>
    %891 = arith.mulf %886, %890 : vector<8x8xf32>
    %892 = arith.truncf %891 : vector<8x8xf32> to vector<8x8xbf16>
    %893 = vector.extract_strided_slice %837 {offsets = [0, 16], sizes = [8, 8], strides = [1, 1]} : vector<8x32xbf16> to vector<8x8xbf16>
    %cst_357 = arith.constant dense<0.000000e+00> : vector<8x8xf32>
    %894 = tpu.matmul %892, %893, %cst_357 {dimension_numbers = #tpu.dot_dimension_numbers<[1], [0], [0], [1], [0, 0, 1, 1], [], []>} : vector<8x8xbf16>, vector<8x8xbf16>, vector<8x8xf32> -> vector<8x8xf32>
    %895 = arith.truncf %894 : vector<8x8xf32> to vector<8x8xbf16>
    %896 = vector.extract_strided_slice %832 {offsets = [16, 0], sizes = [8, 32], strides = [1, 1]} : vector<32x32xbf16> to vector<8x32xbf16>
    %cst_358 = arith.constant dense<0.000000e+00> : vector<8x32xf32>
    %897 = tpu.matmul %895, %896, %cst_358 {dimension_numbers = #tpu.dot_dimension_numbers<[1], [0], [0], [1], [0, 0, 1, 1], [], []>} : vector<8x8xbf16>, vector<8x32xbf16>, vector<8x32xf32> -> vector<8x32xf32>
    %898 = arith.addf %878, %897 : vector<8x32xf32>
    %899 = vector.extract_strided_slice %835 {offsets = [0, 24], sizes = [8, 8], strides = [1, 1]} : vector<8x32xbf16> to vector<8x8xbf16>
    %900 = vector.extract_strided_slice %836 {offsets = [0, 24], sizes = [8, 8], strides = [1, 1]} : vector<8x32xbf16> to vector<8x8xbf16>
    %cst_359 = arith.constant dense<0.000000e+00> : vector<8x8xf32>
    %901 = tpu.matmul %899, %900, %cst_359 {dimension_numbers = #tpu.dot_dimension_numbers<[1], [1], [0], [0], [0, 0, 1, 0], [], []>} : vector<8x8xbf16>, vector<8x8xbf16>, vector<8x8xf32> -> vector<8x8xf32>
    %cst_360 = arith.constant dense<0xFF800000> : vector<8xf32>
    %902 = vector.multi_reduction <maximumf>, %901, %cst_360 [1] : vector<8x8xf32> to vector<8xf32>
    %903 = vector.shape_cast %902 : vector<8xf32> to vector<8x1xf32>
    %904 = vector.broadcast %903 : vector<8x1xf32> to vector<8x8xf32>
    %905 = arith.subf %901, %904 : vector<8x8xf32>
    %906 = math.exp %905 : vector<8x8xf32>
    %cst_361 = arith.constant dense<0.000000e+00> : vector<8xf32>
    %907 = vector.multi_reduction <add>, %906, %cst_361 [1] : vector<8x8xf32> to vector<8xf32>
    %908 = vector.shape_cast %907 : vector<8xf32> to vector<8x1xf32>
    %909 = tpu.reciprocal %908 {approx = true} : vector<8x1xf32> -> vector<8x1xf32>
    %910 = vector.broadcast %909 : vector<8x1xf32> to vector<8x8xf32>
    %911 = arith.mulf %906, %910 : vector<8x8xf32>
    %912 = arith.truncf %911 : vector<8x8xf32> to vector<8x8xbf16>
    %913 = vector.extract_strided_slice %837 {offsets = [0, 24], sizes = [8, 8], strides = [1, 1]} : vector<8x32xbf16> to vector<8x8xbf16>
    %cst_362 = arith.constant dense<0.000000e+00> : vector<8x8xf32>
    %914 = tpu.matmul %912, %913, %cst_362 {dimension_numbers = #tpu.dot_dimension_numbers<[1], [0], [0], [1], [0, 0, 1, 1], [], []>} : vector<8x8xbf16>, vector<8x8xbf16>, vector<8x8xf32> -> vector<8x8xf32>
    %915 = arith.truncf %914 : vector<8x8xf32> to vector<8x8xbf16>
    %916 = vector.extract_strided_slice %832 {offsets = [24, 0], sizes = [8, 32], strides = [1, 1]} : vector<32x32xbf16> to vector<8x32xbf16>
    %cst_363 = arith.constant dense<0.000000e+00> : vector<8x32xf32>
    %917 = tpu.matmul %915, %916, %cst_363 {dimension_numbers = #tpu.dot_dimension_numbers<[1], [0], [0], [1], [0, 0, 1, 1], [], []>} : vector<8x8xbf16>, vector<8x32xbf16>, vector<8x32xf32> -> vector<8x32xf32>
    %918 = arith.addf %898, %917 : vector<8x32xf32>
    %919 = vector.broadcast %834 : vector<1x32xf32> to vector<8x32xf32>
    %920 = arith.addf %918, %919 : vector<8x32xf32>
    %921 = arith.addf %812, %920 : vector<8x32xf32>
    %c1_364 = arith.constant 1 : index
    %c0_365 = arith.constant 0 : index
    %c0_366 = arith.constant 0 : index
    %922 = vector.load %arg12[%c1_364, %c0_365, %c0_366] : memref<2x1x32xf32, #tpu.memory_space<vmem>>, vector<1x1x32xf32>
    %923 = vector.shape_cast %922 : vector<1x1x32xf32> to vector<1x32xf32>
    %c1_367 = arith.constant 1 : index
    %c0_368 = arith.constant 0 : index
    %c0_369 = arith.constant 0 : index
    %924 = vector.load %arg11[%c1_367, %c0_368, %c0_369] : memref<2x1x32xf32, #tpu.memory_space<vmem>>, vector<1x1x32xf32>
    %925 = vector.shape_cast %924 : vector<1x1x32xf32> to vector<1x32xf32>
    %cst_370 = arith.constant dense<0.000000e+00> : vector<8xf32>
    %926 = vector.multi_reduction <add>, %921, %cst_370 [1] : vector<8x32xf32> to vector<8xf32>
    %927 = vector.shape_cast %926 : vector<8xf32> to vector<8x1xf32>
    %cst_371 = arith.constant 3.200000e+01 : f32
    %928 = vector.broadcast %cst_371 : f32 to vector<8x1xf32>
    %929 = arith.divf %927, %928 : vector<8x1xf32>
    %930 = arith.mulf %921, %921 : vector<8x32xf32>
    %cst_372 = arith.constant dense<0.000000e+00> : vector<8xf32>
    %931 = vector.multi_reduction <add>, %930, %cst_372 [1] : vector<8x32xf32> to vector<8xf32>
    %932 = vector.shape_cast %931 : vector<8xf32> to vector<8x1xf32>
    %cst_373 = arith.constant 3.200000e+01 : f32
    %933 = vector.broadcast %cst_373 : f32 to vector<8x1xf32>
    %934 = arith.divf %932, %933 : vector<8x1xf32>
    %935 = arith.mulf %929, %929 : vector<8x1xf32>
    %936 = arith.subf %934, %935 : vector<8x1xf32>
    %937 = vector.broadcast %929 : vector<8x1xf32> to vector<8x32xf32>
    %938 = arith.subf %921, %937 : vector<8x32xf32>
    %cst_374 = arith.constant 9.99999974E-6 : f32
    %939 = vector.broadcast %cst_374 : f32 to vector<8x1xf32>
    %940 = arith.addf %936, %939 : vector<8x1xf32>
    %941 = math.rsqrt %940 : vector<8x1xf32>
    %942 = vector.broadcast %941 : vector<8x1xf32> to vector<8x32xf32>
    %943 = arith.mulf %938, %942 : vector<8x32xf32>
    %944 = vector.broadcast %923 : vector<1x32xf32> to vector<8x32xf32>
    %945 = arith.mulf %943, %944 : vector<8x32xf32>
    %946 = vector.broadcast %925 : vector<1x32xf32> to vector<8x32xf32>
    %947 = arith.addf %945, %946 : vector<8x32xf32>
    %c1_375 = arith.constant 1 : index
    %c0_376 = arith.constant 0 : index
    %c0_377 = arith.constant 0 : index
    %948 = vector.load %arg19[%c1_375, %c0_376, %c0_377] : memref<2x32x64xbf16, #tpu.memory_space<vmem>>, vector<1x32x64xbf16>
    %949 = vector.shape_cast %948 : vector<1x32x64xbf16> to vector<32x64xbf16>
    %c1_378 = arith.constant 1 : index
    %c0_379 = arith.constant 0 : index
    %c0_380 = arith.constant 0 : index
    %950 = vector.load %arg1[%c1_378, %c0_379, %c0_380] : memref<2x1x64xf32, #tpu.memory_space<vmem>>, vector<1x1x64xf32>
    %951 = vector.shape_cast %950 : vector<1x1x64xf32> to vector<1x64xf32>
    %c1_381 = arith.constant 1 : index
    %c0_382 = arith.constant 0 : index
    %c0_383 = arith.constant 0 : index
    %952 = vector.load %arg20[%c1_381, %c0_382, %c0_383] : memref<2x64x32xbf16, #tpu.memory_space<vmem>>, vector<1x64x32xbf16>
    %953 = vector.shape_cast %952 : vector<1x64x32xbf16> to vector<64x32xbf16>
    %c1_384 = arith.constant 1 : index
    %c0_385 = arith.constant 0 : index
    %c0_386 = arith.constant 0 : index
    %954 = vector.load %arg2[%c1_384, %c0_385, %c0_386] : memref<2x1x32xf32, #tpu.memory_space<vmem>>, vector<1x1x32xf32>
    %955 = vector.shape_cast %954 : vector<1x1x32xf32> to vector<1x32xf32>
    %956 = arith.truncf %947 : vector<8x32xf32> to vector<8x32xbf16>
    %cst_387 = arith.constant dense<0.000000e+00> : vector<8x64xf32>
    %957 = tpu.matmul %956, %949, %cst_387 {dimension_numbers = #tpu.dot_dimension_numbers<[1], [0], [0], [1], [0, 0, 1, 1], [], []>} : vector<8x32xbf16>, vector<32x64xbf16>, vector<8x64xf32> -> vector<8x64xf32>
    %958 = vector.broadcast %951 : vector<1x64xf32> to vector<8x64xf32>
    %959 = arith.addf %957, %958 : vector<8x64xf32>
    %cst_388 = arith.constant 0.000000e+00 : f32
    %960 = vector.broadcast %cst_388 : f32 to vector<8x64xf32>
    %961 = arith.maximumf %959, %960 : vector<8x64xf32>
    %962 = arith.truncf %961 : vector<8x64xf32> to vector<8x64xbf16>
    %cst_389 = arith.constant dense<0.000000e+00> : vector<8x32xf32>
    %963 = tpu.matmul %962, %953, %cst_389 {dimension_numbers = #tpu.dot_dimension_numbers<[1], [0], [0], [1], [0, 0, 1, 1], [], []>} : vector<8x64xbf16>, vector<64x32xbf16>, vector<8x32xf32> -> vector<8x32xf32>
    %964 = vector.broadcast %955 : vector<1x32xf32> to vector<8x32xf32>
    %965 = arith.addf %963, %964 : vector<8x32xf32>
    %966 = arith.addf %947, %965 : vector<8x32xf32>
    %c1_390 = arith.constant 1 : index
    %c0_391 = arith.constant 0 : index
    %c0_392 = arith.constant 0 : index
    %967 = vector.load %arg14[%c1_390, %c0_391, %c0_392] : memref<2x1x32xf32, #tpu.memory_space<vmem>>, vector<1x1x32xf32>
    %968 = vector.shape_cast %967 : vector<1x1x32xf32> to vector<1x32xf32>
    %c1_393 = arith.constant 1 : index
    %c0_394 = arith.constant 0 : index
    %c0_395 = arith.constant 0 : index
    %969 = vector.load %arg13[%c1_393, %c0_394, %c0_395] : memref<2x1x32xf32, #tpu.memory_space<vmem>>, vector<1x1x32xf32>
    %970 = vector.shape_cast %969 : vector<1x1x32xf32> to vector<1x32xf32>
    %cst_396 = arith.constant dense<0.000000e+00> : vector<8xf32>
    %971 = vector.multi_reduction <add>, %966, %cst_396 [1] : vector<8x32xf32> to vector<8xf32>
    %972 = vector.shape_cast %971 : vector<8xf32> to vector<8x1xf32>
    %cst_397 = arith.constant 3.200000e+01 : f32
    %973 = vector.broadcast %cst_397 : f32 to vector<8x1xf32>
    %974 = arith.divf %972, %973 : vector<8x1xf32>
    %975 = arith.mulf %966, %966 : vector<8x32xf32>
    %cst_398 = arith.constant dense<0.000000e+00> : vector<8xf32>
    %976 = vector.multi_reduction <add>, %975, %cst_398 [1] : vector<8x32xf32> to vector<8xf32>
    %977 = vector.shape_cast %976 : vector<8xf32> to vector<8x1xf32>
    %cst_399 = arith.constant 3.200000e+01 : f32
    %978 = vector.broadcast %cst_399 : f32 to vector<8x1xf32>
    %979 = arith.divf %977, %978 : vector<8x1xf32>
    %980 = arith.mulf %974, %974 : vector<8x1xf32>
    %981 = arith.subf %979, %980 : vector<8x1xf32>
    %982 = vector.broadcast %974 : vector<8x1xf32> to vector<8x32xf32>
    %983 = arith.subf %966, %982 : vector<8x32xf32>
    %cst_400 = arith.constant 9.99999974E-6 : f32
    %984 = vector.broadcast %cst_400 : f32 to vector<8x1xf32>
    %985 = arith.addf %981, %984 : vector<8x1xf32>
    %986 = math.rsqrt %985 : vector<8x1xf32>
    %987 = vector.broadcast %986 : vector<8x1xf32> to vector<8x32xf32>
    %988 = arith.mulf %983, %987 : vector<8x32xf32>
    %989 = vector.broadcast %968 : vector<1x32xf32> to vector<8x32xf32>
    %990 = arith.mulf %988, %989 : vector<8x32xf32>
    %991 = vector.broadcast %970 : vector<1x32xf32> to vector<8x32xf32>
    %992 = arith.addf %990, %991 : vector<8x32xf32>
    %c0_401 = arith.constant 0 : index
    %c0_402 = arith.constant 0 : index
    %993 = vector.load %arg22[%c0_401, %c0_402] : memref<1x32xf32, #tpu.memory_space<vmem>>, vector<1x32xf32>
    %c0_403 = arith.constant 0 : index
    %c0_404 = arith.constant 0 : index
    %994 = vector.load %arg21[%c0_403, %c0_404] : memref<1x32xf32, #tpu.memory_space<vmem>>, vector<1x32xf32>
    %cst_405 = arith.constant dense<0.000000e+00> : vector<8xf32>
    %995 = vector.multi_reduction <add>, %992, %cst_405 [1] : vector<8x32xf32> to vector<8xf32>
    %996 = vector.shape_cast %995 : vector<8xf32> to vector<8x1xf32>
    %cst_406 = arith.constant 3.200000e+01 : f32
    %997 = vector.broadcast %cst_406 : f32 to vector<8x1xf32>
    %998 = arith.divf %996, %997 : vector<8x1xf32>
    %999 = arith.mulf %992, %992 : vector<8x32xf32>
    %cst_407 = arith.constant dense<0.000000e+00> : vector<8xf32>
    %1000 = vector.multi_reduction <add>, %999, %cst_407 [1] : vector<8x32xf32> to vector<8xf32>
    %1001 = vector.shape_cast %1000 : vector<8xf32> to vector<8x1xf32>
    %cst_408 = arith.constant 3.200000e+01 : f32
    %1002 = vector.broadcast %cst_408 : f32 to vector<8x1xf32>
    %1003 = arith.divf %1001, %1002 : vector<8x1xf32>
    %1004 = arith.mulf %998, %998 : vector<8x1xf32>
    %1005 = arith.subf %1003, %1004 : vector<8x1xf32>
    %1006 = vector.broadcast %998 : vector<8x1xf32> to vector<8x32xf32>
    %1007 = arith.subf %992, %1006 : vector<8x32xf32>
    %cst_409 = arith.constant 9.99999974E-6 : f32
    %1008 = vector.broadcast %cst_409 : f32 to vector<8x1xf32>
    %1009 = arith.addf %1005, %1008 : vector<8x1xf32>
    %1010 = math.rsqrt %1009 : vector<8x1xf32>
    %1011 = vector.broadcast %1010 : vector<8x1xf32> to vector<8x32xf32>
    %1012 = arith.mulf %1007, %1011 : vector<8x32xf32>
    %1013 = vector.broadcast %993 : vector<1x32xf32> to vector<8x32xf32>
    %1014 = arith.mulf %1012, %1013 : vector<8x32xf32>
    %1015 = vector.broadcast %994 : vector<1x32xf32> to vector<8x32xf32>
    %1016 = arith.addf %1014, %1015 : vector<8x32xf32>
    %c0_410 = arith.constant 0 : index
    %c0_411 = arith.constant 0 : index
    %1017 = vector.load %arg40[%c0_410, %c0_411] : memref<32x128xbf16, #tpu.memory_space<vmem>>, vector<32x128xbf16>
    %c0_412 = arith.constant 0 : index
    %c0_413 = arith.constant 0 : index
    %1018 = vector.load %arg39[%c0_412, %c0_413] : memref<1x128xf32, #tpu.memory_space<vmem>>, vector<1x128xf32>
    %1019 = arith.truncf %1016 : vector<8x32xf32> to vector<8x32xbf16>
    %cst_414 = arith.constant dense<0.000000e+00> : vector<8x128xf32>
    %1020 = tpu.matmul %1019, %1017, %cst_414 {dimension_numbers = #tpu.dot_dimension_numbers<[1], [0], [0], [1], [0, 0, 1, 1], [], []>} : vector<8x32xbf16>, vector<32x128xbf16>, vector<8x128xf32> -> vector<8x128xf32>
    %1021 = vector.broadcast %1018 : vector<1x128xf32> to vector<8x128xf32>
    %1022 = arith.addf %1020, %1021 : vector<8x128xf32>
    %c0_415 = arith.constant 0 : index
    %c0_416 = arith.constant 0 : index
    %1023 = vector.load %arg41[%c0_415, %c0_416] : memref<8x128xf32, #tpu.memory_space<vmem>>, vector<8x128xf32>
    tpu.vector_store %arg41[%c0_415, %c0_416], %1022 {strides = array<i32>} : memref<8x128xf32, #tpu.memory_space<vmem>>, vector<8x128xf32>,
    return
  }
}

</mosaic_0001>

<llo_original>
// kernel: tpu_custom_call.1
$region0: #{tpu_custom_call.1}
  #allocation0 [shape = 'u32[]', space=smem, size = 0x4, offset = 0x4, fixed_abs, tag = 'smem constant byte address 0x4 - core index']
  #allocation1 [shape = 'u32[72,128]{1,0:T(1,128)}', space=vmem, size = 0x9000, scoped, tag = 'internal scratch']
  %s0 = inlined_call_operand.smem [shape: u32[42], index: -1, kind: input, shape index: {}]
  %s1 = sld [smem:[%s0]]
  %s2 = scalar_lea.smem %s0, 1
  %s3 = sld [smem:[%s2]]
  %s4 = scalar_lea.smem %s0, 2
  %s5 = sld [smem:[%s4]]
  %s6 = scalar_lea.smem %s0, 3
  %s7 = sld [smem:[%s6]]
  %s8 = scalar_lea.smem %s0, 4
  %s9 = sld [smem:[%s8]]
  %s10 = scalar_lea.smem %s0, 5
  %s11 = sld [smem:[%s10]]
  %s12 = scalar_lea.smem %s0, 6
  %s13 = sld [smem:[%s12]]
  %s14 = scalar_lea.smem %s0, 7
  %s15 = sld [smem:[%s14]]
  %s16 = scalar_lea.smem %s0, 8
  %s17 = sld [smem:[%s16]]
  %s18 = scalar_lea.smem %s0, 9
  %s19 = sld [smem:[%s18]]
  %s20 = scalar_lea.smem %s0, 10
  %s21 = sld [smem:[%s20]]
  %s22 = scalar_lea.smem %s0, 11
  %s23 = sld [smem:[%s22]]
  %s24 = scalar_lea.smem %s0, 12
  %s25 = sld [smem:[%s24]]
  %s26 = scalar_lea.smem %s0, 13
  %s27 = sld [smem:[%s26]]
  %s28 = scalar_lea.smem %s0, 14
  %s29 = sld [smem:[%s28]]
  %s30 = scalar_lea.smem %s0, 15
  %s31 = sld [smem:[%s30]]
  %s32 = scalar_lea.smem %s0, 16
  %s33 = sld [smem:[%s32]]
  %s34 = scalar_lea.smem %s0, 17
  %s35 = sld [smem:[%s34]]
  %s36 = scalar_lea.smem %s0, 18
  %s37 = sld [smem:[%s36]]
  %s38 = scalar_lea.smem %s0, 19
  %s39 = sld [smem:[%s38]]
  %s40 = scalar_lea.smem %s0, 20
  %s41 = sld [smem:[%s40]]
  %s42 = scalar_lea.smem %s0, 21
  %s43 = sld [smem:[%s42]]
  %s44 = scalar_lea.smem %s0, 22
  %s45 = sld [smem:[%s44]]
  %s46 = scalar_lea.smem %s0, 23
  %s47 = sld [smem:[%s46]]
  %s48 = scalar_lea.smem %s0, 24
  %s49 = sld [smem:[%s48]]
  %s50 = scalar_lea.smem %s0, 25
  %s51 = sld [smem:[%s50]]
  %s52 = scalar_lea.smem %s0, 26
  %s53 = sld [smem:[%s52]]
  %s54 = scalar_lea.smem %s0, 27
  %s55 = sld [smem:[%s54]]
  %s56 = scalar_lea.smem %s0, 28
  %s57 = sld [smem:[%s56]]
  %s58 = scalar_lea.smem %s0, 29
  %s59 = sld [smem:[%s58]]
  %s60 = scalar_lea.smem %s0, 30
  %s61 = sld [smem:[%s60]]
  %s62 = scalar_lea.smem %s0, 31
  %s63 = sld [smem:[%s62]]
  %s64 = scalar_lea.smem %s0, 32
  %s65 = sld [smem:[%s64]]
  %s66 = scalar_lea.smem %s0, 33
  %s67 = sld [smem:[%s66]]
  %s68 = scalar_lea.smem %s0, 34
  %s69 = sld [smem:[%s68]]
  %s70 = scalar_lea.smem %s0, 35
  %s71 = sld [smem:[%s70]]
  %s72 = scalar_lea.smem %s0, 36
  %s73 = sld [smem:[%s72]]
  %s74 = scalar_lea.smem %s0, 37
  %s75 = sld [smem:[%s74]]
  %s76 = scalar_lea.smem %s0, 38
  %s77 = sld [smem:[%s76]]
  %s78 = scalar_lea.smem %s0, 39
  %s79 = sld [smem:[%s78]]
  %s80 = scalar_lea.smem %s0, 40
  %s81 = sld [smem:[%s80]]
  %s82 = scalar_lea.smem %s0, 41
  %s83 = sld [smem:[%s82]]
  %s84 = sld [smem:[#allocation0]]
  $region266: #{tpu_custom_call.1} parent=0
    _
  %s86 = ssub.s32 1, %s84
  %s87 = scalar_select 0, %s86, %s84
  $region1: #{tpu_custom_call.1} parent=0
    #allocation2 [shape = 'u8[4096]{0}', space=vmem, size = 0x1000, scoped, tag = 'input window, operand 0, single buffered']
    #allocation3 [shape = 's32[1]{0}', space=sflag, size = 0x4, scoped, tag = 'scoped memory for tpu_custom_call.1']
    #allocation4 [shape = 's32[1]{0}', space=sflag, size = 0x4, scoped, tag = 'scoped memory for tpu_custom_call.1']
    #allocation5 [shape = 'u8[1024]{0}', space=vmem, size = 0x400, scoped, tag = 'input window, operand 1, single buffered']
    #allocation6 [shape = 's32[1]{0}', space=sflag, size = 0x4, scoped, tag = 'scoped memory for tpu_custom_call.1']
    #allocation7 [shape = 'u8[1024]{0}', space=vmem, size = 0x400, scoped, tag = 'input window, operand 2, single buffered']
    #allocation8 [shape = 'u8[1024]{0}', space=vmem, size = 0x400, scoped, tag = 'input window, operand 3, single buffered']
    #allocation9 [shape = 's32[1]{0}', space=sflag, size = 0x4, scoped, tag = 'scoped memory for tpu_custom_call.1']
    #allocation10 [shape = 'u8[1024]{0}', space=vmem, size = 0x400, scoped, tag = 'input window, operand 5, single buffered']
    #allocation11 [shape = 'u8[1024]{0}', space=vmem, size = 0x400, scoped, tag = 'input window, operand 7, single buffered']
    #allocation12 [shape = 's32[1]{0}', space=sflag, size = 0x4, scoped, tag = 'scoped memory for tpu_custom_call.1']
    #allocation13 [shape = 'u8[1024]{0}', space=vmem, size = 0x400, scoped, tag = 'input window, operand 9, single buffered']
    #allocation14 [shape = 'u8[1024]{0}', space=vmem, size = 0x400, scoped, tag = 'input window, operand 10, single buffered']
    #allocation15 [shape = 's32[1]{0}', space=sflag, size = 0x4, scoped, tag = 'scoped memory for tpu_custom_call.1']
    #allocation16 [shape = 'u8[1024]{0}', space=vmem, size = 0x400, scoped, tag = 'input window, operand 11, single buffered']
    #allocation17 [shape = 'u8[1024]{0}', space=vmem, size = 0x400, scoped, tag = 'input window, operand 12, single buffered']
    #allocation18 [shape = 's32[1]{0}', space=sflag, size = 0x4, scoped, tag = 'scoped memory for tpu_custom_call.1']
    #allocation19 [shape = 'u8[1024]{0}', space=vmem, size = 0x400, scoped, tag = 'input window, operand 13, single buffered']
    #allocation20 [shape = 'u8[1024]{0}', space=vmem, size = 0x400, scoped, tag = 'input window, operand 14, single buffered']
    #allocation21 [shape = 's32[1]{0}', space=sflag, size = 0x4, scoped, tag = 'scoped memory for tpu_custom_call.1']
    #allocation22 [shape = 'u8[1024]{0}', space=vmem, size = 0x400, scoped, tag = 'input window, operand 15, single buffered']
    #allocation23 [shape = 'u8[1024]{0}', space=vmem, size = 0x400, scoped, tag = 'input window, operand 17, single buffered']
    #allocation24 [shape = 's32[1]{0}', space=sflag, size = 0x4, scoped, tag = 'scoped memory for tpu_custom_call.1']
    #allocation25 [shape = 'u8[16384]{0}', space=vmem, size = 0x4000, scoped, tag = 'input window, operand 19, single buffered']
    #allocation26 [shape = 'u8[512]{0}', space=vmem, size = 0x400, scoped, tag = 'input window, operand 21, single buffered']
    #allocation27 [shape = 's32[1]{0}', space=sflag, size = 0x4, scoped, tag = 'scoped memory for tpu_custom_call.1']
    #allocation28 [shape = 'u8[512]{0}', space=vmem, size = 0x400, scoped, tag = 'input window, operand 22, single buffered']
    #allocation29 [shape = 'u8[512]{0}', space=vmem, size = 0x400, scoped, tag = 'input window, operand 23, single buffered']
    #allocation30 [shape = 's32[1]{0}', space=sflag, size = 0x4, scoped, tag = 'scoped memory for tpu_custom_call.1']
    #allocation31 [shape = 'u8[4096]{0}', space=vmem, size = 0x1000, scoped, tag = 'input window, operand 24, single buffered']
    #allocation32 [shape = 'u8[1024]{0}', space=vmem, size = 0x400, scoped, tag = 'input window, operand 29, single buffered']
    #allocation33 [shape = 's32[1]{0}', space=sflag, size = 0x4, scoped, tag = 'scoped memory for tpu_custom_call.1']
    #allocation34 [shape = 'u8[16384]{0}', space=vmem, size = 0x4000, scoped, tag = 'input window, operand 32, single buffered']
    #allocation35 [shape = 'u8[16384]{0}', space=vmem, size = 0x4000, scoped, tag = 'input window, operand 34, single buffered']
    #allocation36 [shape = 's32[1]{0}', space=sflag, size = 0x4, scoped, tag = 'scoped memory for tpu_custom_call.1']
    #allocation37 [shape = 'u8[16384]{0}', space=vmem, size = 0x4000, scoped, tag = 'input window, operand 35, single buffered']
    #allocation38 [shape = 'u8[4096]{0}', space=vmem, size = 0x1000, scoped, tag = 'output window, operand 0, single buffered']
    %88 = vsyncpa [#allocation3], 0
    %89 = vsyncpa [#allocation6], 0
    %90 = vsyncpa [#allocation9], 0
    %91 = vsyncpa [#allocation12], 0
    %92 = vsyncpa [#allocation15], 0
    %93 = vsyncpa [#allocation18], 0
    %94 = vsyncpa [#allocation21], 0
    %95 = vsyncpa [#allocation24], 0
    %96 = vsyncpa [#allocation27], 0
    %97 = vsyncpa [#allocation30], 0
    %98 = vsyncpa [#allocation33], 0
    %99 = vsyncpa [#allocation36], 0
    %100 = vsyncpa [#allocation4], 0
    // Predicated region
    $region2: #{tpu_custom_call.1} parent=1 // pred_check
      _
    $region3: #{tpu_custom_call.1} parent=1 // pred_check_branch
      %102 = sbr.rel (0) target = $region5
    $region4: #{tpu_custom_call.1} parent=1 // pred_region
      %104 = vsyncadd [#allocation3], 0
      %s106 = sshll.u32 %s1, 4
      %s107 = int_to_ptr.hbm [resolvable:$true] %s106
      %s108 = sshll.u32 [#allocation2], 4
      %s109 = int_to_ptr.vmem [resolvable:$true] %s108
      %111 = dma.hbm_to_vmem [thread:$0]  %s107, 128, %s109, [#allocation3]
    $region5: #{tpu_custom_call.1} parent=1 // pred_fallthru
      _
    // Predicated region
    $region6: #{tpu_custom_call.1} parent=1 // pred_check
      _
    $region7: #{tpu_custom_call.1} parent=1 // pred_check_branch
      %113 = sbr.rel (0) target = $region9
    $region8: #{tpu_custom_call.1} parent=1 // pred_region
      %115 = vsyncadd [#allocation6], 0
      %s116 = sshll.u32 %s3, 4
      %s117 = int_to_ptr.hbm [resolvable:$true] %s116
      %s118 = sshll.u32 [#allocation5], 4
      %s119 = int_to_ptr.vmem [resolvable:$true] %s118
      %124 = dma.hbm_to_vmem [thread:$0]  %s117, 32, %s119, [#allocation6], 16, 16, 1
    $region9: #{tpu_custom_call.1} parent=1 // pred_fallthru
      _
    // Predicated region
    $region10: #{tpu_custom_call.1} parent=1 // pred_check
      _
    $region11: #{tpu_custom_call.1} parent=1 // pred_check_branch
      %126 = sbr.rel (0) target = $region13
    $region12: #{tpu_custom_call.1} parent=1 // pred_region
      %128 = vsyncadd [#allocation6], 0
      %s129 = sshll.u32 %s5, 4
      %s130 = int_to_ptr.hbm [resolvable:$true] %s129
      %s131 = sshll.u32 [#allocation7], 4
      %s132 = int_to_ptr.vmem [resolvable:$true] %s131
      %137 = dma.hbm_to_vmem [thread:$0]  %s130, 32, %s132, [#allocation6], 16, 16, 1
    $region13: #{tpu_custom_call.1} parent=1 // pred_fallthru
      _
    // Predicated region
    $region14: #{tpu_custom_call.1} parent=1 // pred_check
      _
    $region15: #{tpu_custom_call.1} parent=1 // pred_check_branch
      %139 = sbr.rel (0) target = $region17
    $region16: #{tpu_custom_call.1} parent=1 // pred_region
      %141 = vsyncadd [#allocation9], 0
      %s142 = sshll.u32 %s7, 4
      %s143 = int_to_ptr.hbm [resolvable:$true] %s142
      %s144 = sshll.u32 [#allocation8], 4
      %s145 = int_to_ptr.vmem [resolvable:$true] %s144
      %150 = dma.hbm_to_vmem [thread:$0]  %s143, 32, %s145, [#allocation9], 16, 16, 1
    $region17: #{tpu_custom_call.1} parent=1 // pred_fallthru
      _
    // Predicated region
    $region18: #{tpu_custom_call.1} parent=1 // pred_check
      _
    $region19: #{tpu_custom_call.1} parent=1 // pred_check_branch
      %152 = sbr.rel (0) target = $region21
    $region20: #{tpu_custom_call.1} parent=1 // pred_region
      _
    $region21: #{tpu_custom_call.1} parent=1 // pred_fallthru
      _
    // Predicated region
    $region22: #{tpu_custom_call.1} parent=1 // pred_check
      _
    $region23: #{tpu_custom_call.1} parent=1 // pred_check_branch
      %154 = sbr.rel (0) target = $region25
    $region24: #{tpu_custom_call.1} parent=1 // pred_region
      %156 = vsyncadd [#allocation9], 0
      %s157 = sshll.u32 %s11, 4
      %s158 = int_to_ptr.hbm [resolvable:$true] %s157
      %s159 = sshll.u32 [#allocation10], 4
      %s160 = int_to_ptr.vmem [resolvable:$true] %s159
      %165 = dma.hbm_to_vmem [thread:$0]  %s158, 32, %s160, [#allocation9], 16, 16, 1
    $region25: #{tpu_custom_call.1} parent=1 // pred_fallthru
      _
    // Predicated region
    $region26: #{tpu_custom_call.1} parent=1 // pred_check
      _
    $region27: #{tpu_custom_call.1} parent=1 // pred_check_branch
      %167 = sbr.rel (0) target = $region29
    $region28: #{tpu_custom_call.1} parent=1 // pred_region
      _
    $region29: #{tpu_custom_call.1} parent=1 // pred_fallthru
      _
    // Predicated region
    $region30: #{tpu_custom_call.1} parent=1 // pred_check
      _
    $region31: #{tpu_custom_call.1} parent=1 // pred_check_branch
      %169 = sbr.rel (0) target = $region33
    $region32: #{tpu_custom_call.1} parent=1 // pred_region
      %171 = vsyncadd [#allocation12], 0
      %s172 = sshll.u32 %s15, 4
      %s173 = int_to_ptr.hbm [resolvable:$true] %s172
      %s174 = sshll.u32 [#allocation11], 4
      %s175 = int_to_ptr.vmem [resolvable:$true] %s174
      %180 = dma.hbm_to_vmem [thread:$0]  %s173, 32, %s175, [#allocation12], 16, 16, 1
    $region33: #{tpu_custom_call.1} parent=1 // pred_fallthru
      _
    // Predicated region
    $region34: #{tpu_custom_call.1} parent=1 // pred_check
      _
    $region35: #{tpu_custom_call.1} parent=1 // pred_check_branch
      %182 = sbr.rel (0) target = $region37
    $region36: #{tpu_custom_call.1} parent=1 // pred_region
      _
    $region37: #{tpu_custom_call.1} parent=1 // pred_fallthru
      _
    // Predicated region
    $region38: #{tpu_custom_call.1} parent=1 // pred_check
      _
    $region39: #{tpu_custom_call.1} parent=1 // pred_check_branch
      %184 = sbr.rel (0) target = $region41
    $region40: #{tpu_custom_call.1} parent=1 // pred_region
      %186 = vsyncadd [#allocation12], 0
      %s187 = sshll.u32 %s19, 4
      %s188 = int_to_ptr.hbm [resolvable:$true] %s187
      %s189 = sshll.u32 [#allocation13], 4
      %s190 = int_to_ptr.vmem [resolvable:$true] %s189
      %195 = dma.hbm_to_vmem [thread:$0]  %s188, 32, %s190, [#allocation12], 16, 16, 1
    $region41: #{tpu_custom_call.1} parent=1 // pred_fallthru
      _
    // Predicated region
    $region42: #{tpu_custom_call.1} parent=1 // pred_check
      _
    $region43: #{tpu_custom_call.1} parent=1 // pred_check_branch
      %197 = sbr.rel (0) target = $region45
    $region44: #{tpu_custom_call.1} parent=1 // pred_region
      %199 = vsyncadd [#allocation15], 0
      %s200 = sshll.u32 %s21, 4
      %s201 = int_to_ptr.hbm [resolvable:$true] %s200
      %s202 = sshll.u32 [#allocation14], 4
      %s203 = int_to_ptr.vmem [resolvable:$true] %s202
      %208 = dma.hbm_to_vmem [thread:$0]  %s201, 32, %s203, [#allocation15], 16, 16, 1
    $region45: #{tpu_custom_call.1} parent=1 // pred_fallthru
      _
    // Predicated region
    $region46: #{tpu_custom_call.1} parent=1 // pred_check
      _
    $region47: #{tpu_custom_call.1} parent=1 // pred_check_branch
      %210 = sbr.rel (0) target = $region49
    $region48: #{tpu_custom_call.1} parent=1 // pred_region
      %212 = vsyncadd [#allocation15], 0
      %s213 = sshll.u32 %s23, 4
      %s214 = int_to_ptr.hbm [resolvable:$true] %s213
      %s215 = sshll.u32 [#allocation16], 4
      %s216 = int_to_ptr.vmem [resolvable:$true] %s215
      %221 = dma.hbm_to_vmem [thread:$0]  %s214, 32, %s216, [#allocation15], 16, 16, 1
    $region49: #{tpu_custom_call.1} parent=1 // pred_fallthru
      _
    // Predicated region
    $region50: #{tpu_custom_call.1} parent=1 // pred_check
      _
    $region51: #{tpu_custom_call.1} parent=1 // pred_check_branch
      %223 = sbr.rel (0) target = $region53
    $region52: #{tpu_custom_call.1} parent=1 // pred_region
      %225 = vsyncadd [#allocation18], 0
      %s226 = sshll.u32 %s25, 4
      %s227 = int_to_ptr.hbm [resolvable:$true] %s226
      %s228 = sshll.u32 [#allocation17], 4
      %s229 = int_to_ptr.vmem [resolvable:$true] %s228
      %234 = dma.hbm_to_vmem [thread:$0]  %s227, 32, %s229, [#allocation18], 16, 16, 1
    $region53: #{tpu_custom_call.1} parent=1 // pred_fallthru
      _
    // Predicated region
    $region54: #{tpu_custom_call.1} parent=1 // pred_check
      _
    $region55: #{tpu_custom_call.1} parent=1 // pred_check_branch
      %236 = sbr.rel (0) target = $region57
    $region56: #{tpu_custom_call.1} parent=1 // pred_region
      %238 = vsyncadd [#allocation18], 0
      %s239 = sshll.u32 %s27, 4
      %s240 = int_to_ptr.hbm [resolvable:$true] %s239
      %s241 = sshll.u32 [#allocation19], 4
      %s242 = int_to_ptr.vmem [resolvable:$true] %s241
      %247 = dma.hbm_to_vmem [thread:$0]  %s240, 32, %s242, [#allocation18], 16, 16, 1
    $region57: #{tpu_custom_call.1} parent=1 // pred_fallthru
      _
    // Predicated region
    $region58: #{tpu_custom_call.1} parent=1 // pred_check
      _
    $region59: #{tpu_custom_call.1} parent=1 // pred_check_branch
      %249 = sbr.rel (0) target = $region61
    $region60: #{tpu_custom_call.1} parent=1 // pred_region
      %251 = vsyncadd [#allocation21], 0
      %s252 = sshll.u32 %s29, 4
      %s253 = int_to_ptr.hbm [resolvable:$true] %s252
      %s254 = sshll.u32 [#allocation20], 4
      %s255 = int_to_ptr.vmem [resolvable:$true] %s254
      %260 = dma.hbm_to_vmem [thread:$0]  %s253, 32, %s255, [#allocation21], 16, 16, 1
    $region61: #{tpu_custom_call.1} parent=1 // pred_fallthru
      _
    // Predicated region
    $region62: #{tpu_custom_call.1} parent=1 // pred_check
      _
    $region63: #{tpu_custom_call.1} parent=1 // pred_check_branch
      %262 = sbr.rel (0) target = $region65
    $region64: #{tpu_custom_call.1} parent=1 // pred_region
      %264 = vsyncadd [#allocation21], 0
      %s265 = sshll.u32 %s31, 4
      %s266 = int_to_ptr.hbm [resolvable:$true] %s265
      %s267 = sshll.u32 [#allocation22], 4
      %s268 = int_to_ptr.vmem [resolvable:$true] %s267
      %273 = dma.hbm_to_vmem [thread:$0]  %s266, 32, %s268, [#allocation21], 16, 16, 1
    $region65: #{tpu_custom_call.1} parent=1 // pred_fallthru
      _
    // Predicated region
    $region66: #{tpu_custom_call.1} parent=1 // pred_check
      _
    $region67: #{tpu_custom_call.1} parent=1 // pred_check_branch
      %275 = sbr.rel (0) target = $region69
    $region68: #{tpu_custom_call.1} parent=1 // pred_region
      _
    $region69: #{tpu_custom_call.1} parent=1 // pred_fallthru
      _
    // Predicated region
    $region70: #{tpu_custom_call.1} parent=1 // pred_check
      _
    $region71: #{tpu_custom_call.1} parent=1 // pred_check_branch
      %277 = sbr.rel (0) target = $region73
    $region72: #{tpu_custom_call.1} parent=1 // pred_region
      %279 = vsyncadd [#allocation24], 0
      %s280 = sshll.u32 %s35, 4
      %s281 = int_to_ptr.hbm [resolvable:$true] %s280
      %s282 = sshll.u32 [#allocation23], 4
      %s283 = int_to_ptr.vmem [resolvable:$true] %s282
      %288 = dma.hbm_to_vmem [thread:$0]  %s281, 32, %s283, [#allocation24], 16, 16, 1
    $region73: #{tpu_custom_call.1} parent=1 // pred_fallthru
      _
    // Predicated region
    $region74: #{tpu_custom_call.1} parent=1 // pred_check
      _
    $region75: #{tpu_custom_call.1} parent=1 // pred_check_branch
      %290 = sbr.rel (0) target = $region77
    $region76: #{tpu_custom_call.1} parent=1 // pred_region
      _
    $region77: #{tpu_custom_call.1} parent=1 // pred_fallthru
      _
    // Predicated region
    $region78: #{tpu_custom_call.1} parent=1 // pred_check
      _
    $region79: #{tpu_custom_call.1} parent=1 // pred_check_branch
      %292 = sbr.rel (0) target = $region81
    $region80: #{tpu_custom_call.1} parent=1 // pred_region
      %294 = vsyncadd [#allocation24], 0
      %s295 = sshll.u32 %s39, 4
      %s296 = int_to_ptr.hbm [resolvable:$true] %s295
      %s297 = sshll.u32 [#allocation25], 4
      %s298 = int_to_ptr.vmem [resolvable:$true] %s297
      %303 = dma.hbm_to_vmem [thread:$0]  %s296, 512, %s298, [#allocation24], 64, 64, 4
    $region81: #{tpu_custom_call.1} parent=1 // pred_fallthru
      _
    // Predicated region
    $region82: #{tpu_custom_call.1} parent=1 // pred_check
      _
    $region83: #{tpu_custom_call.1} parent=1 // pred_check_branch
      %305 = sbr.rel (0) target = $region85
    $region84: #{tpu_custom_call.1} parent=1 // pred_region
      _
    $region85: #{tpu_custom_call.1} parent=1 // pred_fallthru
      _
    // Predicated region
    $region86: #{tpu_custom_call.1} parent=1 // pred_check
      _
    $region87: #{tpu_custom_call.1} parent=1 // pred_check_branch
      %307 = sbr.rel (0) target = $region89
    $region88: #{tpu_custom_call.1} parent=1 // pred_region
      %309 = vsyncadd [#allocation27], 0
      %s311 = sshll.u32 %s43, 4
      %s312 = int_to_ptr.hbm [resolvable:$true] %s311
      %s313 = sshll.u32 [#allocation26], 4
      %s314 = int_to_ptr.vmem [resolvable:$true] %s313
      %316 = dma.hbm_to_vmem [thread:$0]  %s312, 16, %s314, [#allocation27]
    $region89: #{tpu_custom_call.1} parent=1 // pred_fallthru
      _
    // Predicated region
    $region90: #{tpu_custom_call.1} parent=1 // pred_check
      _
    $region91: #{tpu_custom_call.1} parent=1 // pred_check_branch
      %318 = sbr.rel (0) target = $region93
    $region92: #{tpu_custom_call.1} parent=1 // pred_region
      %320 = vsyncadd [#allocation27], 0
      %s322 = sshll.u32 %s45, 4
      %s323 = int_to_ptr.hbm [resolvable:$true] %s322
      %s324 = sshll.u32 [#allocation28], 4
      %s325 = int_to_ptr.vmem [resolvable:$true] %s324
      %327 = dma.hbm_to_vmem [thread:$0]  %s323, 16, %s325, [#allocation27]
    $region93: #{tpu_custom_call.1} parent=1 // pred_fallthru
      _
    // Predicated region
    $region94: #{tpu_custom_call.1} parent=1 // pred_check
      _
    $region95: #{tpu_custom_call.1} parent=1 // pred_check_branch
      %329 = sbr.rel (0) target = $region97
    $region96: #{tpu_custom_call.1} parent=1 // pred_region
      %331 = vsyncadd [#allocation30], 0
      %s333 = sshll.u32 %s47, 4
      %s334 = int_to_ptr.hbm [resolvable:$true] %s333
      %s335 = sshll.u32 [#allocation29], 4
      %s336 = int_to_ptr.vmem [resolvable:$true] %s335
      %338 = dma.hbm_to_vmem [thread:$0]  %s334, 16, %s336, [#allocation30]
    $region97: #{tpu_custom_call.1} parent=1 // pred_fallthru
      _
    // Predicated region
    $region98: #{tpu_custom_call.1} parent=1 // pred_check
      _
    $region99: #{tpu_custom_call.1} parent=1 // pred_check_branch
      %340 = sbr.rel (0) target = $region101
    $region100: #{tpu_custom_call.1} parent=1 // pred_region
      %342 = vsyncadd [#allocation30], 0
      %s343 = sshll.u32 %s49, 4
      %s344 = int_to_ptr.hbm [resolvable:$true] %s343
      %s345 = sshll.u32 [#allocation31], 4
      %s346 = int_to_ptr.vmem [resolvable:$true] %s345
      %351 = dma.hbm_to_vmem [thread:$0]  %s344, 128, %s346, [#allocation30], 64, 64, 4
    $region101: #{tpu_custom_call.1} parent=1 // pred_fallthru
      _
    // Predicated region
    $region102: #{tpu_custom_call.1} parent=1 // pred_check
      _
    $region103: #{tpu_custom_call.1} parent=1 // pred_check_branch
      %353 = sbr.rel (0) target = $region105
    $region104: #{tpu_custom_call.1} parent=1 // pred_region
      _
    $region105: #{tpu_custom_call.1} parent=1 // pred_fallthru
      _
    // Predicated region
    $region106: #{tpu_custom_call.1} parent=1 // pred_check
      _
    $region107: #{tpu_custom_call.1} parent=1 // pred_check_branch
      %355 = sbr.rel (0) target = $region109
    $region108: #{tpu_custom_call.1} parent=1 // pred_region
      _
    $region109: #{tpu_custom_call.1} parent=1 // pred_fallthru
      _
    // Predicated region
    $region110: #{tpu_custom_call.1} parent=1 // pred_check
      _
    $region111: #{tpu_custom_call.1} parent=1 // pred_check_branch
      %357 = sbr.rel (0) target = $region113
    $region112: #{tpu_custom_call.1} parent=1 // pred_region
      _
    $region113: #{tpu_custom_call.1} parent=1 // pred_fallthru
      _
    // Predicated region
    $region114: #{tpu_custom_call.1} parent=1 // pred_check
      _
    $region115: #{tpu_custom_call.1} parent=1 // pred_check_branch
      %359 = sbr.rel (0) target = $region117
    $region116: #{tpu_custom_call.1} parent=1 // pred_region
      _
    $region117: #{tpu_custom_call.1} parent=1 // pred_fallthru
      _
    // Predicated region
    $region118: #{tpu_custom_call.1} parent=1 // pred_check
      _
    $region119: #{tpu_custom_call.1} parent=1 // pred_check_branch
      %361 = sbr.rel (0) target = $region121
    $region120: #{tpu_custom_call.1} parent=1 // pred_region
      %363 = vsyncadd [#allocation33], 0
      %s364 = sshll.u32 %s59, 4
      %s365 = int_to_ptr.hbm [resolvable:$true] %s364
      %s366 = sshll.u32 [#allocation32], 4
      %s367 = int_to_ptr.vmem [resolvable:$true] %s366
      %372 = dma.hbm_to_vmem [thread:$0]  %s365, 32, %s367, [#allocation33], 16, 16, 1
    $region121: #{tpu_custom_call.1} parent=1 // pred_fallthru
      _
    // Predicated region
    $region122: #{tpu_custom_call.1} parent=1 // pred_check
      _
    $region123: #{tpu_custom_call.1} parent=1 // pred_check_branch
      %374 = sbr.rel (0) target = $region125
    $region124: #{tpu_custom_call.1} parent=1 // pred_region
      _
    $region125: #{tpu_custom_call.1} parent=1 // pred_fallthru
      _
    // Predicated region
    $region126: #{tpu_custom_call.1} parent=1 // pred_check
      _
    $region127: #{tpu_custom_call.1} parent=1 // pred_check_branch
      %376 = sbr.rel (0) target = $region129
    $region128: #{tpu_custom_call.1} parent=1 // pred_region
      _
    $region129: #{tpu_custom_call.1} parent=1 // pred_fallthru
      _
    // Predicated region
    $region130: #{tpu_custom_call.1} parent=1 // pred_check
      _
    $region131: #{tpu_custom_call.1} parent=1 // pred_check_branch
      %378 = sbr.rel (0) target = $region133
    $region132: #{tpu_custom_call.1} parent=1 // pred_region
      %380 = vsyncadd [#allocation33], 0
      %s381 = sshll.u32 %s65, 4
      %s382 = int_to_ptr.hbm [resolvable:$true] %s381
      %s383 = sshll.u32 [#allocation34], 4
      %s384 = int_to_ptr.vmem [resolvable:$true] %s383
      %389 = dma.hbm_to_vmem [thread:$0]  %s382, 512, %s384, [#allocation33], 64, 64, 4
    $region133: #{tpu_custom_call.1} parent=1 // pred_fallthru
      _
    // Predicated region
    $region134: #{tpu_custom_call.1} parent=1 // pred_check
      _
    $region135: #{tpu_custom_call.1} parent=1 // pred_check_branch
      %391 = sbr.rel (0) target = $region137
    $region136: #{tpu_custom_call.1} parent=1 // pred_region
      _
    $region137: #{tpu_custom_call.1} parent=1 // pred_fallthru
      _
    // Predicated region
    $region138: #{tpu_custom_call.1} parent=1 // pred_check
      _
    $region139: #{tpu_custom_call.1} parent=1 // pred_check_branch
      %393 = sbr.rel (0) target = $region141
    $region140: #{tpu_custom_call.1} parent=1 // pred_region
      %395 = vsyncadd [#allocation36], 0
      %s396 = sshll.u32 %s69, 4
      %s397 = int_to_ptr.hbm [resolvable:$true] %s396
      %s398 = sshll.u32 [#allocation35], 4
      %s399 = int_to_ptr.vmem [resolvable:$true] %s398
      %404 = dma.hbm_to_vmem [thread:$0]  %s397, 512, %s399, [#allocation36], 64, 64, 4
    $region141: #{tpu_custom_call.1} parent=1 // pred_fallthru
      _
    // Predicated region
    $region142: #{tpu_custom_call.1} parent=1 // pred_check
      _
    $region143: #{tpu_custom_call.1} parent=1 // pred_check_branch
      %406 = sbr.rel (0) target = $region145
    $region144: #{tpu_custom_call.1} parent=1 // pred_region
      %408 = vsyncadd [#allocation36], 0
      %s409 = sshll.u32 %s71, 4
      %s410 = int_to_ptr.hbm [resolvable:$true] %s409
      %s411 = sshll.u32 [#allocation37], 4
      %s412 = int_to_ptr.vmem [resolvable:$true] %s411
      %417 = dma.hbm_to_vmem [thread:$0]  %s410, 512, %s412, [#allocation36], 64, 64, 4
    $region145: #{tpu_custom_call.1} parent=1 // pred_fallthru
      _
    // Predicated region
    $region146: #{tpu_custom_call.1} parent=1 // pred_check
      _
    $region147: #{tpu_custom_call.1} parent=1 // pred_check_branch
      %419 = sbr.rel (0) target = $region149
    $region148: #{tpu_custom_call.1} parent=1 // pred_region
      _
    $region149: #{tpu_custom_call.1} parent=1 // pred_fallthru
      _
    // Predicated region
    $region150: #{tpu_custom_call.1} parent=1 // pred_check
      _
    $region151: #{tpu_custom_call.1} parent=1 // pred_check_branch
      %421 = sbr.rel (0) target = $region153
    $region152: #{tpu_custom_call.1} parent=1 // pred_region
      _
    $region153: #{tpu_custom_call.1} parent=1 // pred_fallthru
      _
    // Predicated region
    $region154: #{tpu_custom_call.1} parent=1 // pred_check
      _
    $region155: #{tpu_custom_call.1} parent=1 // pred_check_branch
      %423 = sbr.rel (0) target = $region157
    $region156: #{tpu_custom_call.1} parent=1 // pred_region
      _
    $region157: #{tpu_custom_call.1} parent=1 // pred_fallthru
      _
    // Predicated region
    $region158: #{tpu_custom_call.1} parent=1 // pred_check
      _
    $region159: #{tpu_custom_call.1} parent=1 // pred_check_branch
      %425 = sbr.rel (0) target = $region161
    $region160: #{tpu_custom_call.1} parent=1 // pred_region
      _
    $region161: #{tpu_custom_call.1} parent=1 // pred_fallthru
      _
    // Predicated region
    $region162: #{tpu_custom_call.1} parent=1 // pred_check
      _
    $region163: #{tpu_custom_call.1} parent=1 // pred_check_branch
      %427 = sbr.rel (0) target = $region165
    $region164: #{tpu_custom_call.1} parent=1 // pred_region
      _
    $region165: #{tpu_custom_call.1} parent=1 // pred_fallthru
      _
    // Predicated region
    $region166: #{tpu_custom_call.1} parent=1 // pred_check
      _
    $region167: #{tpu_custom_call.1} parent=1 // pred_check_branch
      %429 = sbr.rel (0) target = $region169
    $region168: #{tpu_custom_call.1} parent=1 // pred_region
      %431 = dma.done [#allocation3], 128
    $region169: #{tpu_custom_call.1} parent=1 // pred_fallthru
      _
    // Predicated region
    $region170: #{tpu_custom_call.1} parent=1 // pred_check
      _
    $region171: #{tpu_custom_call.1} parent=1 // pred_check_branch
      %433 = sbr.rel (0) target = $region173
    $region172: #{tpu_custom_call.1} parent=1 // pred_region
      %435 = dma.done [#allocation6], 32
    $region173: #{tpu_custom_call.1} parent=1 // pred_fallthru
      _
    // Predicated region
    $region174: #{tpu_custom_call.1} parent=1 // pred_check
      _
    $region175: #{tpu_custom_call.1} parent=1 // pred_check_branch
      %437 = sbr.rel (0) target = $region177
    $region176: #{tpu_custom_call.1} parent=1 // pred_region
      %439 = dma.done [#allocation6], 32
    $region177: #{tpu_custom_call.1} parent=1 // pred_fallthru
      _
    // Predicated region
    $region178: #{tpu_custom_call.1} parent=1 // pred_check
      _
    $region179: #{tpu_custom_call.1} parent=1 // pred_check_branch
      %441 = sbr.rel (0) target = $region181
    $region180: #{tpu_custom_call.1} parent=1 // pred_region
      %443 = dma.done [#allocation9], 32
    $region181: #{tpu_custom_call.1} parent=1 // pred_fallthru
      _
    // Predicated region
    $region182: #{tpu_custom_call.1} parent=1 // pred_check
      _
    $region183: #{tpu_custom_call.1} parent=1 // pred_check_branch
      %445 = sbr.rel (0) target = $region185
    $region184: #{tpu_custom_call.1} parent=1 // pred_region
      %447 = dma.done [#allocation9], 32
    $region185: #{tpu_custom_call.1} parent=1 // pred_fallthru
      _
    // Predicated region
    $region186: #{tpu_custom_call.1} parent=1 // pred_check
      _
    $region187: #{tpu_custom_call.1} parent=1 // pred_check_branch
      %449 = sbr.rel (0) target = $region189
    $region188: #{tpu_custom_call.1} parent=1 // pred_region
      %451 = dma.done [#allocation12], 32
    $region189: #{tpu_custom_call.1} parent=1 // pred_fallthru
      _
    // Predicated region
    $region190: #{tpu_custom_call.1} parent=1 // pred_check
      _
    $region191: #{tpu_custom_call.1} parent=1 // pred_check_branch
      %453 = sbr.rel (0) target = $region193
    $region192: #{tpu_custom_call.1} parent=1 // pred_region
      %455 = dma.done [#allocation12], 32
    $region193: #{tpu_custom_call.1} parent=1 // pred_fallthru
      _
    // Predicated region
    $region194: #{tpu_custom_call.1} parent=1 // pred_check
      _
    $region195: #{tpu_custom_call.1} parent=1 // pred_check_branch
      %457 = sbr.rel (0) target = $region197
    $region196: #{tpu_custom_call.1} parent=1 // pred_region
      %459 = dma.done [#allocation15], 32
    $region197: #{tpu_custom_call.1} parent=1 // pred_fallthru
      _
    // Predicated region
    $region198: #{tpu_custom_call.1} parent=1 // pred_check
      _
    $region199: #{tpu_custom_call.1} parent=1 // pred_check_branch
      %461 = sbr.rel (0) target = $region201
    $region200: #{tpu_custom_call.1} parent=1 // pred_region
      %463 = dma.done [#allocation15], 32
    $region201: #{tpu_custom_call.1} parent=1 // pred_fallthru
      _
    // Predicated region
    $region202: #{tpu_custom_call.1} parent=1 // pred_check
      _
    $region203: #{tpu_custom_call.1} parent=1 // pred_check_branch
      %465 = sbr.rel (0) target = $region205
    $region204: #{tpu_custom_call.1} parent=1 // pred_region
      %467 = dma.done [#allocation18], 32
    $region205: #{tpu_custom_call.1} parent=1 // pred_fallthru
      _
    // Predicated region
    $region206: #{tpu_custom_call.1} parent=1 // pred_check
      _
    $region207: #{tpu_custom_call.1} parent=1 // pred_check_branch
      %469 = sbr.rel (0) target = $region209
    $region208: #{tpu_custom_call.1} parent=1 // pred_region
      %471 = dma.done [#allocation18], 32
    $region209: #{tpu_custom_call.1} parent=1 // pred_fallthru
      _
    // Predicated region
    $region210: #{tpu_custom_call.1} parent=1 // pred_check
      _
    $region211: #{tpu_custom_call.1} parent=1 // pred_check_branch
      %473 = sbr.rel (0) target = $region213
    $region212: #{tpu_custom_call.1} parent=1 // pred_region
      %475 = dma.done [#allocation21], 32
    $region213: #{tpu_custom_call.1} parent=1 // pred_fallthru
      _
    // Predicated region
    $region214: #{tpu_custom_call.1} parent=1 // pred_check
      _
    $region215: #{tpu_custom_call.1} parent=1 // pred_check_branch
      %477 = sbr.rel (0) target = $region217
    $region216: #{tpu_custom_call.1} parent=1 // pred_region
      %479 = dma.done [#allocation21], 32
    $region217: #{tpu_custom_call.1} parent=1 // pred_fallthru
      _
    // Predicated region
    $region218: #{tpu_custom_call.1} parent=1 // pred_check
      _
    $region219: #{tpu_custom_call.1} parent=1 // pred_check_branch
      %481 = sbr.rel (0) target = $region221
    $region220: #{tpu_custom_call.1} parent=1 // pred_region
      %483 = dma.done [#allocation24], 32
    $region221: #{tpu_custom_call.1} parent=1 // pred_fallthru
      _
    // Predicated region
    $region222: #{tpu_custom_call.1} parent=1 // pred_check
      _
    $region223: #{tpu_custom_call.1} parent=1 // pred_check_branch
      %485 = sbr.rel (0) target = $region225
    $region224: #{tpu_custom_call.1} parent=1 // pred_region
      %487 = dma.done [#allocation24], 512
    $region225: #{tpu_custom_call.1} parent=1 // pred_fallthru
      _
    // Predicated region
    $region226: #{tpu_custom_call.1} parent=1 // pred_check
      _
    $region227: #{tpu_custom_call.1} parent=1 // pred_check_branch
      %489 = sbr.rel (0) target = $region229
    $region228: #{tpu_custom_call.1} parent=1 // pred_region
      %491 = dma.done [#allocation27], 16
    $region229: #{tpu_custom_call.1} parent=1 // pred_fallthru
      _
    // Predicated region
    $region230: #{tpu_custom_call.1} parent=1 // pred_check
      _
    $region231: #{tpu_custom_call.1} parent=1 // pred_check_branch
      %493 = sbr.rel (0) target = $region233
    $region232: #{tpu_custom_call.1} parent=1 // pred_region
      %495 = dma.done [#allocation27], 16
    $region233: #{tpu_custom_call.1} parent=1 // pred_fallthru
      _
    // Predicated region
    $region234: #{tpu_custom_call.1} parent=1 // pred_check
      _
    $region235: #{tpu_custom_call.1} parent=1 // pred_check_branch
      %497 = sbr.rel (0) target = $region237
    $region236: #{tpu_custom_call.1} parent=1 // pred_region
      %499 = dma.done [#allocation30], 16
    $region237: #{tpu_custom_call.1} parent=1 // pred_fallthru
      _
    // Predicated region
    $region238: #{tpu_custom_call.1} parent=1 // pred_check
      _
    $region239: #{tpu_custom_call.1} parent=1 // pred_check_branch
      %501 = sbr.rel (0) target = $region241
    $region240: #{tpu_custom_call.1} parent=1 // pred_region
      %503 = dma.done [#allocation30], 128
    $region241: #{tpu_custom_call.1} parent=1 // pred_fallthru
      _
    // Predicated region
    $region242: #{tpu_custom_call.1} parent=1 // pred_check
      _
    $region243: #{tpu_custom_call.1} parent=1 // pred_check_branch
      %505 = sbr.rel (0) target = $region245
    $region244: #{tpu_custom_call.1} parent=1 // pred_region
      %507 = dma.done [#allocation33], 32
    $region245: #{tpu_custom_call.1} parent=1 // pred_fallthru
      _
    // Predicated region
    $region246: #{tpu_custom_call.1} parent=1 // pred_check
      _
    $region247: #{tpu_custom_call.1} parent=1 // pred_check_branch
      %509 = sbr.rel (0) target = $region249
    $region248: #{tpu_custom_call.1} parent=1 // pred_region
      %511 = dma.done [#allocation33], 512
    $region249: #{tpu_custom_call.1} parent=1 // pred_fallthru
      _
    // Predicated region
    $region250: #{tpu_custom_call.1} parent=1 // pred_check
      _
    $region251: #{tpu_custom_call.1} parent=1 // pred_check_branch
      %513 = sbr.rel (0) target = $region253
    $region252: #{tpu_custom_call.1} parent=1 // pred_region
      %515 = dma.done [#allocation36], 512
    $region253: #{tpu_custom_call.1} parent=1 // pred_fallthru
      _
    // Predicated region
    $region254: #{tpu_custom_call.1} parent=1 // pred_check
      _
    $region255: #{tpu_custom_call.1} parent=1 // pred_check_branch
      %517 = sbr.rel (0) target = $region257
    $region256: #{tpu_custom_call.1} parent=1 // pred_region
      %519 = dma.done [#allocation36], 512
    $region257: #{tpu_custom_call.1} parent=1 // pred_fallthru
      _
    %v521 = vld [vmem:[#allocation2] sm:$0xff]
    %v522 = vld [vmem:[#allocation31] sm:$0xf]
    %v523 = vld [vmem:[#allocation31 + $0x4] sm:$0xf]
    %v524 = vld [vmem:[#allocation29] sm:$0x1]
    %v525 = vpack.c.bf16 %v521, %v521
    %v527 = vperm.slane %v524, 0
    %v531 = vunpack.c.l.b16 %v522
    %v532 = vunpack.c.l.b16 %v523
    %v533 = vpack.c.b16 %v532, %v531
    %vm535 = vcmask 130048
    %v537 = vsel %vm535, %v525, 0
    %539 = vmatpush.bf16.msra.mxu0 0
    %540 = vmatpush.bf16.msra.mxu0 0
    %541 = vmatpush.bf16.msra.mxu0 0
    %542 = vmatpush.bf16.msra.mxu0 0
    %543 = vmatpush.bf16.msra.mxu0 0
    %544 = vmatpush.bf16.msra.mxu0 0
    %545 = vmatpush.bf16.msra.mxu0 0
    %546 = vmatpush.bf16.msra.mxu0 %v533
    %547 = vmatmul.bf16.gmra.mxu0 %v537
    %v548 = vpop.f32.mrf.mxu0
    %v549 = vadd.f32 %v527, %v548
    %v550 = vpop.f32.mrf.mxu0
    %551 = vdwg.mxu0
    %v552 = vld [vmem:[#allocation35] sm:$0xf]
    %v553 = vld [vmem:[#allocation35 + $0x4] sm:$0xf]
    %v554 = vld [vmem:[#allocation35 + $0x8] sm:$0xf]
    %v555 = vld [vmem:[#allocation35 + $0xc] sm:$0xf]
    %v556 = vld [vmem:[%s67] sm:$0x1]
    %v557 = vld [vmem:[#allocation34] sm:$0xf]
    %v558 = vld [vmem:[#allocation34 + $0x4] sm:$0xf]
    %v559 = vld [vmem:[#allocation34 + $0x8] sm:$0xf]
    %v560 = vld [vmem:[#allocation34 + $0xc] sm:$0xf]
    %v561 = vld [vmem:[%s63] sm:$0x1]
    %v562 = vpack.c.bf16 %v549, %v549
    %v564 = vperm.slane %v556, 0
    %v570 = vunpack.c.l.b16 %v552
    %v571 = vunpack.c.l.b16 %v553
    %v572 = vunpack.c.l.b16 %v554
    %v573 = vunpack.c.l.b16 %v555
    %v574 = vpack.c.b16 %v571, %v570
    %v575 = vpack.c.b16 %v573, %v572
    %vm578 = vcmask 261120
    %v580 = vsel %vm578, %v562, 0
    %582 = vmatpush.bf16.msra.mxu0 0
    %583 = vmatpush.bf16.msra.mxu0 0
    %584 = vmatpush.bf16.msra.mxu0 0
    %585 = vmatpush.bf16.msra.mxu0 0
    %586 = vmatpush.bf16.msra.mxu0 0
    %587 = vmatpush.bf16.msra.mxu0 0
    %588 = vmatpush.bf16.msra.mxu0 %v575
    %589 = vmatpush.bf16.msra.mxu0 %v574
    %590 = vmatmul.bf16.gmra.mxu0 %v580
    %v591 = vpop.f32.mrf.mxu0
    %v592 = vadd.f32 %v564, %v591
    %v593 = vpop.f32.mrf.mxu0
    %594 = vdwg.mxu0
    %v595 = vpack.c.bf16 %v592, %v592
    %v597 = vunpack.c.l.b16 %v595
    %v598 = vpack.c.b16 %v597, %v597
    %599 = vrot.lane.b32.xlu0 %v598, 96
    %v600 = vpop.permute.xlu0 %599
    %vm601 = vcmask 64512
    %v603 = vsel %vm601, %v595, 0
    %v606 = vsel %vm601, %v600, 0
    %608 = vmatpush.bf16.xpose.msra.mxu0 0
    %609 = vmatpush.bf16.xpose.msra.mxu0 0
    %610 = vmatpush.bf16.xpose.msra.mxu0 0
    %611 = vmatpush.bf16.xpose.msra.mxu0 0
    %612 = vmatpush.bf16.xpose.msra.mxu0 0
    %613 = vmatpush.bf16.xpose.msra.mxu0 0
    %614 = vmatpush.bf16.xpose.msra.mxu0 0
    %615 = vmatpush.bf16.xpose.msra.mxu0 %v606
    %616 = vmatmul.bf16.gmra.mxu0 %v603
    %v617 = vpop.f32.mrf.mxu0
    %v618 = vadd.f32 0.0, %v617
    %v619 = vpop.f32.mrf.mxu0
    %620 = vdwg.mxu0
    %v621 = vsel %vm601, %v618, -inf
    %622 = vmax.xlane.f32.xlu0 %v621
    %v623 = vpop.xlane.xlu0 %622
    %v624 = vsub.f32 %v618, %v623
    %v625 = vmul.f32 %v624, 1.442695
    %v626 = vpow.pop %v625
    %v627 = vsel %vm601, %v626, 0.0
    %628 = vadd.xlane.f32.xlu0 %v627
    %v629 = vpop.xlane.xlu0 %628
    %v630 = vrcp.pop %v629
    %v631 = vmul.f32 %v626, %v630
    %v632 = vpack.c.bf16 %v631, %v631
    %633 = vrot.lane.b32.xlu0 %v598, 64
    %v634 = vpop.permute.xlu0 %633
    %v636 = vsel %vm601, %v632, 0
    %vm638 = vcmask 1043456
    %v640 = vsel %vm638, %v634, 0
    %642 = vmatpush.bf16.msra.mxu0 0
    %643 = vmatpush.bf16.msra.mxu0 0
    %644 = vmatpush.bf16.msra.mxu0 0
    %645 = vmatpush.bf16.msra.mxu0 0
    %646 = vmatpush.bf16.msra.mxu0 0
    %647 = vmatpush.bf16.msra.mxu0 0
    %648 = vmatpush.bf16.msra.mxu0 0
    %649 = vmatpush.bf16.msra.mxu0 %v640
    %650 = vmatmul.bf16.gmra.mxu0 %v636
    %v651 = vpop.f32.mrf.mxu0
    %v652 = vadd.f32 0.0, %v651
    %v653 = vpop.f32.mrf.mxu0
    %654 = vdwg.mxu0
    %v655 = vpack.c.bf16 %v652, %v652
    %656 = vrot.lane.b32.xlu0 %v598, 120
    %v657 = vpop.permute.xlu0 %656
    %658 = vrot.lane.b32.xlu0 %v598, 88
    %v659 = vpop.permute.xlu0 %658
    %v661 = vsel %vm601, %v657, 0
    %v664 = vsel %vm601, %v659, 0
    %666 = vmatpush.bf16.xpose.msra.mxu0 0
    %667 = vmatpush.bf16.xpose.msra.mxu0 0
    %668 = vmatpush.bf16.xpose.msra.mxu0 0
    %669 = vmatpush.bf16.xpose.msra.mxu0 0
    %670 = vmatpush.bf16.xpose.msra.mxu0 0
    %671 = vmatpush.bf16.xpose.msra.mxu0 0
    %672 = vmatpush.bf16.xpose.msra.mxu0 0
    %673 = vmatpush.bf16.xpose.msra.mxu0 %v664
    %674 = vmatmul.bf16.gmra.mxu0 %v661
    %v675 = vpop.f32.mrf.mxu0
    %v676 = vadd.f32 0.0, %v675
    %v677 = vpop.f32.mrf.mxu0
    %678 = vdwg.mxu0
    %v679 = vsel %vm601, %v676, -inf
    %680 = vmax.xlane.f32.xlu0 %v679
    %v681 = vpop.xlane.xlu0 %680
    %v682 = vsub.f32 %v676, %v681
    %v683 = vmul.f32 %v682, 1.442695
    %v684 = vpow.pop %v683
    %v685 = vsel %vm601, %v684, 0.0
    %686 = vadd.xlane.f32.xlu0 %v685
    %v687 = vpop.xlane.xlu0 %686
    %v688 = vrcp.pop %v687
    %v689 = vmul.f32 %v684, %v688
    %v690 = vpack.c.bf16 %v689, %v689
    %691 = vrot.lane.b32.xlu0 %v598, 56
    %v692 = vpop.permute.xlu0 %691
    %v694 = vsel %vm601, %v690, 0
    %v697 = vsel %vm638, %v692, 0
    %699 = vmatpush.bf16.msra.mxu0 0
    %700 = vmatpush.bf16.msra.mxu0 0
    %701 = vmatpush.bf16.msra.mxu0 0
    %702 = vmatpush.bf16.msra.mxu0 0
    %703 = vmatpush.bf16.msra.mxu0 0
    %704 = vmatpush.bf16.msra.mxu0 0
    %705 = vmatpush.bf16.msra.mxu0 0
    %706 = vmatpush.bf16.msra.mxu0 %v697
    %707 = vmatmul.bf16.gmra.mxu0 %v694
    %v708 = vpop.f32.mrf.mxu0
    %v709 = vadd.f32 0.0, %v708
    %v710 = vpop.f32.mrf.mxu0
    %711 = vdwg.mxu0
    %v712 = vpack.c.bf16 %v709, %v709
    %v714 = vsel %vm601, %v712, 0
    %v717 = vsel %vm638, %v558, 0
    %719 = vmatpush.bf16.msra.mxu0 0
    %720 = vmatpush.bf16.msra.mxu0 0
    %721 = vmatpush.bf16.msra.mxu0 0
    %722 = vmatpush.bf16.msra.mxu0 0
    %723 = vmatpush.bf16.msra.mxu0 0
    %724 = vmatpush.bf16.msra.mxu0 0
    %725 = vmatpush.bf16.msra.mxu0 0
    %726 = vmatpush.bf16.msra.mxu0 %v717
    %727 = vmatmul.bf16.gmra.mxu0 %v714
    %v728 = vpop.f32.mrf.mxu0
    %v729 = vadd.f32 0.0, %v728
    %v730 = vpop.f32.mrf.mxu0
    %731 = vdwg.mxu0
    %v733 = vsel %vm601, %v655, 0
    %v736 = vsel %vm638, %v557, 0
    %738 = vmatpush.bf16.msra.mxu0 0
    %739 = vmatpush.bf16.msra.mxu0 0
    %740 = vmatpush.bf16.msra.mxu0 0
    %741 = vmatpush.bf16.msra.mxu0 0
    %742 = vmatpush.bf16.msra.mxu0 0
    %743 = vmatpush.bf16.msra.mxu0 0
    %744 = vmatpush.bf16.msra.mxu0 0
    %745 = vmatpush.bf16.msra.mxu0 %v736
    %746 = vmatmul.bf16.gmra.mxu0 %v733
    %v747 = vpop.f32.mrf.mxu0
    %v748 = vadd.f32 %v729, %v747
    %v749 = vpop.f32.mrf.mxu0
    %750 = vdwg.mxu0
    %751 = vrot.lane.b32.xlu0 %v598, 112
    %v752 = vpop.permute.xlu0 %751
    %753 = vrot.lane.b32.xlu0 %v598, 80
    %v754 = vpop.permute.xlu0 %753
    %v756 = vsel %vm601, %v752, 0
    %v759 = vsel %vm601, %v754, 0
    %761 = vmatpush.bf16.xpose.msra.mxu0 0
    %762 = vmatpush.bf16.xpose.msra.mxu0 0
    %763 = vmatpush.bf16.xpose.msra.mxu0 0
    %764 = vmatpush.bf16.xpose.msra.mxu0 0
    %765 = vmatpush.bf16.xpose.msra.mxu0 0
    %766 = vmatpush.bf16.xpose.msra.mxu0 0
    %767 = vmatpush.bf16.xpose.msra.mxu0 0
    %768 = vmatpush.bf16.xpose.msra.mxu0 %v759
    %769 = vmatmul.bf16.gmra.mxu0 %v756
    %v770 = vpop.f32.mrf.mxu0
    %v771 = vadd.f32 0.0, %v770
    %v772 = vpop.f32.mrf.mxu0
    %773 = vdwg.mxu0
    %v774 = vsel %vm601, %v771, -inf
    %775 = vmax.xlane.f32.xlu0 %v774
    %v776 = vpop.xlane.xlu0 %775
    %v777 = vsub.f32 %v771, %v776
    %v778 = vmul.f32 %v777, 1.442695
    %v779 = vpow.pop %v778
    %v780 = vsel %vm601, %v779, 0.0
    %781 = vadd.xlane.f32.xlu0 %v780
    %v782 = vpop.xlane.xlu0 %781
    %v783 = vrcp.pop %v782
    %v784 = vmul.f32 %v779, %v783
    %v785 = vpack.c.bf16 %v784, %v784
    %786 = vrot.lane.b32.xlu0 %v598, 48
    %v787 = vpop.permute.xlu0 %786
    %v789 = vsel %vm601, %v785, 0
    %v792 = vsel %vm638, %v787, 0
    %794 = vmatpush.bf16.msra.mxu0 0
    %795 = vmatpush.bf16.msra.mxu0 0
    %796 = vmatpush.bf16.msra.mxu0 0
    %797 = vmatpush.bf16.msra.mxu0 0
    %798 = vmatpush.bf16.msra.mxu0 0
    %799 = vmatpush.bf16.msra.mxu0 0
    %800 = vmatpush.bf16.msra.mxu0 0
    %801 = vmatpush.bf16.msra.mxu0 %v792
    %802 = vmatmul.bf16.gmra.mxu0 %v789
    %v803 = vpop.f32.mrf.mxu0
    %v804 = vadd.f32 0.0, %v803
    %v805 = vpop.f32.mrf.mxu0
    %806 = vdwg.mxu0
    %v807 = vpack.c.bf16 %v804, %v804
    %v809 = vsel %vm601, %v807, 0
    %v812 = vsel %vm638, %v559, 0
    %814 = vmatpush.bf16.msra.mxu0 0
    %815 = vmatpush.bf16.msra.mxu0 0
    %816 = vmatpush.bf16.msra.mxu0 0
    %817 = vmatpush.bf16.msra.mxu0 0
    %818 = vmatpush.bf16.msra.mxu0 0
    %819 = vmatpush.bf16.msra.mxu0 0
    %820 = vmatpush.bf16.msra.mxu0 0
    %821 = vmatpush.bf16.msra.mxu0 %v812
    %822 = vmatmul.bf16.gmra.mxu0 %v809
    %v823 = vpop.f32.mrf.mxu0
    %v824 = vadd.f32 0.0, %v823
    %v825 = vpop.f32.mrf.mxu0
    %826 = vdwg.mxu0
    %v827 = vadd.f32 %v748, %v824
    %828 = vrot.lane.b32.xlu0 %v598, 104
    %v829 = vpop.permute.xlu0 %828
    %830 = vrot.lane.b32.xlu0 %v598, 72
    %v831 = vpop.permute.xlu0 %830
    %v833 = vsel %vm601, %v829, 0
    %v836 = vsel %vm601, %v831, 0
    %838 = vmatpush.bf16.xpose.msra.mxu0 0
    %839 = vmatpush.bf16.xpose.msra.mxu0 0
    %840 = vmatpush.bf16.xpose.msra.mxu0 0
    %841 = vmatpush.bf16.xpose.msra.mxu0 0
    %842 = vmatpush.bf16.xpose.msra.mxu0 0
    %843 = vmatpush.bf16.xpose.msra.mxu0 0
    %844 = vmatpush.bf16.xpose.msra.mxu0 0
    %845 = vmatpush.bf16.xpose.msra.mxu0 %v836
    %846 = vmatmul.bf16.gmra.mxu0 %v833
    %v847 = vpop.f32.mrf.mxu0
    %v848 = vadd.f32 0.0, %v847
    %v849 = vpop.f32.mrf.mxu0
    %850 = vdwg.mxu0
    %v851 = vsel %vm601, %v848, -inf
    %852 = vmax.xlane.f32.xlu0 %v851
    %v853 = vpop.xlane.xlu0 %852
    %v854 = vsub.f32 %v848, %v853
    %v855 = vmul.f32 %v854, 1.442695
    %v856 = vpow.pop %v855
    %v857 = vsel %vm601, %v856, 0.0
    %858 = vadd.xlane.f32.xlu0 %v857
    %v859 = vpop.xlane.xlu0 %858
    %v860 = vrcp.pop %v859
    %v861 = vmul.f32 %v856, %v860
    %v862 = vpack.c.bf16 %v861, %v861
    %863 = vrot.lane.b32.xlu0 %v598, 40
    %v864 = vpop.permute.xlu0 %863
    %v866 = vsel %vm601, %v862, 0
    %v869 = vsel %vm638, %v864, 0
    %871 = vmatpush.bf16.msra.mxu0 0
    %872 = vmatpush.bf16.msra.mxu0 0
    %873 = vmatpush.bf16.msra.mxu0 0
    %874 = vmatpush.bf16.msra.mxu0 0
    %875 = vmatpush.bf16.msra.mxu0 0
    %876 = vmatpush.bf16.msra.mxu0 0
    %877 = vmatpush.bf16.msra.mxu0 0
    %878 = vmatpush.bf16.msra.mxu0 %v869
    %879 = vmatmul.bf16.gmra.mxu0 %v866
    %v880 = vpop.f32.mrf.mxu0
    %v881 = vadd.f32 0.0, %v880
    %v882 = vpop.f32.mrf.mxu0
    %883 = vdwg.mxu0
    %v884 = vpack.c.bf16 %v881, %v881
    %v886 = vsel %vm601, %v884, 0
    %v889 = vsel %vm638, %v560, 0
    %891 = vmatpush.bf16.msra.mxu0 0
    %892 = vmatpush.bf16.msra.mxu0 0
    %893 = vmatpush.bf16.msra.mxu0 0
    %894 = vmatpush.bf16.msra.mxu0 0
    %895 = vmatpush.bf16.msra.mxu0 0
    %896 = vmatpush.bf16.msra.mxu0 0
    %897 = vmatpush.bf16.msra.mxu0 0
    %898 = vmatpush.bf16.msra.mxu0 %v889
    %899 = vmatmul.bf16.gmra.mxu0 %v886
    %v900 = vpop.f32.mrf.mxu0
    %v901 = vadd.f32 0.0, %v900
    %v902 = vpop.f32.mrf.mxu0
    %903 = vdwg.mxu0
    %v904 = vadd.f32 %v827, %v901
    %v906 = vperm.slane %v561, 0
    %v908 = vadd.f32 %v904, %v906
    %v909 = vadd.f32 %v549, %v908
    %v910 = vld [vmem:[%s57] sm:$0x1]
    %v911 = vld [vmem:[%s55] sm:$0x1]
    %v912 = vsel %vm578, %v909, 0.0
    %913 = vadd.xlane.f32.xlu0 %v912
    %v914 = vpop.xlane.xlu0 %913
    %v915 = vrcp.pop 32.0
    %v916 = vmul.f32 32.0, %v915
    %v917 = vsub.f32 1.0, %v916
    %v918 = vmul.f32 %v915, %v917
    %v919 = vadd.f32 %v915, %v918
    %vm920 = vweird.f32 %v915
    %v921 = vsel %vm920, %v915, %v919
    %v922 = vmul.f32 %v914, %v921
    %v923 = vmul.f32 %v909, %v909
    %v924 = vsel %vm578, %v923, 0.0
    %925 = vadd.xlane.f32.xlu0 %v924
    %v926 = vpop.xlane.xlu0 %925
    %v927 = vmul.f32 %v926, %v921
    %v928 = vmul.f32 %v922, %v922
    %v929 = vsub.f32 %v927, %v928
    %v930 = vsub.f32 %v909, %v922
    %v931 = vadd.f32 %v929, 1e-05
    %v932 = vrsqrt.pop %v931
    %v933 = vmul.f32 %v932, %v931
    %v934 = vmul.f32 %v933, %v932
    %v935 = vmul.f32 0.5, %v934
    %v936 = vsub.f32 1.5, %v935
    %v937 = vmul.f32 %v932, %v936
    %vm938 = vweird.f32 %v931
    %vm939 = vweird.f32 %v932
    %vm940 = vmor %vm938, %vm939
    %v941 = vsel %vm940, %v932, %v937
    %v942 = vmul.f32 %v930, %v941
    %v944 = vperm.slane %v910, 0
    %v946 = vmul.f32 %v942, %v944
    %v948 = vperm.slane %v911, 0
    %v950 = vadd.f32 %v946, %v948
    %v951 = vld [vmem:[#allocation37] sm:$0xf]
    %v952 = vld [vmem:[#allocation37 + $0x4] sm:$0xf]
    %v953 = vld [vmem:[#allocation37 + $0x8] sm:$0xf]
    %v954 = vld [vmem:[#allocation37 + $0xc] sm:$0xf]
    %v955 = vld [vmem:[%s51] sm:$0x1]
    %v956 = vld [vmem:[%s73] sm:$0xf]
    %v957 = vld [vmem:[%s73 + $0x4] sm:$0xf]
    %v958 = vld [vmem:[%s73 + $0x8] sm:$0xf]
    %v959 = vld [vmem:[%s73 + $0xc] sm:$0xf]
    %v960 = vld [vmem:[%s73 + $0x10] sm:$0xf]
    %v961 = vld [vmem:[%s73 + $0x14] sm:$0xf]
    %v962 = vld [vmem:[%s73 + $0x18] sm:$0xf]
    %v963 = vld [vmem:[%s73 + $0x1c] sm:$0xf]
    %v964 = vld [vmem:[%s53] sm:$0x1]
    %v965 = vpack.c.bf16 %v950, %v950
    %v967 = vperm.slane %v955, 0
    %v973 = vunpack.c.l.b16 %v951
    %v974 = vunpack.c.l.b16 %v952
    %v975 = vunpack.c.l.b16 %v953
    %v976 = vunpack.c.l.b16 %v954
    %v977 = vpack.c.b16 %v974, %v973
    %v978 = vpack.c.b16 %v976, %v975
    %v982 = vsel %vm578, %v965, 0
    %984 = vmatpush.bf16.msra.mxu0 0
    %985 = vmatpush.bf16.msra.mxu0 0
    %986 = vmatpush.bf16.msra.mxu0 0
    %987 = vmatpush.bf16.msra.mxu0 0
    %988 = vmatpush.bf16.msra.mxu0 0
    %989 = vmatpush.bf16.msra.mxu0 0
    %990 = vmatpush.bf16.msra.mxu0 %v978
    %991 = vmatpush.bf16.msra.mxu0 %v977
    %992 = vmatmul.bf16.gmra.mxu0 %v982
    %v993 = vpop.f32.mrf.mxu0
    %v994 = vadd.f32 %v967, %v993
    %v995 = vpop.f32.mrf.mxu0
    %996 = vdwg.mxu0
    %v997 = vmax.f32 %v994, 0.0
    %v998 = vpack.c.bf16 %v997, %v997
    %v1000 = vperm.slane %v964, 0
    %v1010 = vunpack.c.l.b16 %v956
    %v1011 = vunpack.c.l.b16 %v957
    %v1012 = vunpack.c.l.b16 %v958
    %v1013 = vunpack.c.l.b16 %v959
    %v1014 = vunpack.c.l.b16 %v960
    %v1015 = vunpack.c.l.b16 %v961
    %v1016 = vunpack.c.l.b16 %v962
    %v1017 = vunpack.c.l.b16 %v963
    %v1018 = vpack.c.b16 %v1011, %v1010
    %v1019 = vpack.c.b16 %v1013, %v1012
    %v1020 = vpack.c.b16 %v1015, %v1014
    %v1021 = vpack.c.b16 %v1017, %v1016
    %vm1026 = vcmask 523264
    %v1028 = vsel %vm1026, %v998, 0
    %1030 = vmatpush.bf16.msra.mxu0 0
    %1031 = vmatpush.bf16.msra.mxu0 0
    %1032 = vmatpush.bf16.msra.mxu0 0
    %1033 = vmatpush.bf16.msra.mxu0 0
    %1034 = vmatpush.bf16.msra.mxu0 %v1021
    %1035 = vmatpush.bf16.msra.mxu0 %v1020
    %1036 = vmatpush.bf16.msra.mxu0 %v1019
    %1037 = vmatpush.bf16.msra.mxu0 %v1018
    %1038 = vmatmul.bf16.gmra.mxu0 %v1028
    %v1039 = vpop.f32.mrf.mxu0
    %v1040 = vadd.f32 %v1000, %v1039
    %v1041 = vpop.f32.mrf.mxu0
    %1042 = vdwg.mxu0
    %v1043 = vadd.f32 %v950, %v1040
    %v1044 = vld [vmem:[%s61] sm:$0x1]
    %v1045 = vld [vmem:[#allocation32] sm:$0x1]
    %v1046 = vsel %vm578, %v1043, 0.0
    %1047 = vadd.xlane.f32.xlu0 %v1046
    %v1048 = vpop.xlane.xlu0 %1047
    %v1049 = vmul.f32 %v1048, %v921
    %v1050 = vmul.f32 %v1043, %v1043
    %v1051 = vsel %vm578, %v1050, 0.0
    %1052 = vadd.xlane.f32.xlu0 %v1051
    %v1053 = vpop.xlane.xlu0 %1052
    %v1054 = vmul.f32 %v1053, %v921
    %v1055 = vmul.f32 %v1049, %v1049
    %v1056 = vsub.f32 %v1054, %v1055
    %v1057 = vsub.f32 %v1043, %v1049
    %v1058 = vadd.f32 %v1056, 1e-05
    %v1059 = vrsqrt.pop %v1058
    %v1060 = vmul.f32 %v1059, %v1058
    %v1061 = vmul.f32 %v1060, %v1059
    %v1062 = vmul.f32 0.5, %v1061
    %v1063 = vsub.f32 1.5, %v1062
    %v1064 = vmul.f32 %v1059, %v1063
    %vm1065 = vweird.f32 %v1058
    %vm1066 = vweird.f32 %v1059
    %vm1067 = vmor %vm1065, %vm1066
    %v1068 = vsel %vm1067, %v1059, %v1064
    %v1069 = vmul.f32 %v1057, %v1068
    %v1071 = vperm.slane %v1044, 0
    %v1073 = vmul.f32 %v1069, %v1071
    %v1075 = vperm.slane %v1045, 0
    %v1077 = vadd.f32 %v1073, %v1075
    %s1078 = scalar_lea.vmem [#allocation35], 16
    %v1079 = vld [vmem:[%s1078] sm:$0xf]
    %v1080 = vld [vmem:[%s1078 + $0x4] sm:$0xf]
    %v1081 = vld [vmem:[%s1078 + $0x8] sm:$0xf]
    %v1082 = vld [vmem:[%s1078 + $0xc] sm:$0xf]
    %s1083 = scalar_lea.vmem %s67, 1
    %v1084 = vld [vmem:[%s1083] sm:$0x1]
    %s1085 = scalar_lea.vmem [#allocation34], 16
    %v1086 = vld [vmem:[%s1085] sm:$0xf]
    %v1087 = vld [vmem:[%s1085 + $0x4] sm:$0xf]
    %v1088 = vld [vmem:[%s1085 + $0x8] sm:$0xf]
    %v1089 = vld [vmem:[%s1085 + $0xc] sm:$0xf]
    %s1090 = scalar_lea.vmem %s63, 1
    %v1091 = vld [vmem:[%s1090] sm:$0x1]
    %v1092 = vpack.c.bf16 %v1077, %v1077
    %v1094 = vperm.slane %v1084, 0
    %v1100 = vunpack.c.l.b16 %v1079
    %v1101 = vunpack.c.l.b16 %v1080
    %v1102 = vunpack.c.l.b16 %v1081
    %v1103 = vunpack.c.l.b16 %v1082
    %v1104 = vpack.c.b16 %v1101, %v1100
    %v1105 = vpack.c.b16 %v1103, %v1102
    %v1109 = vsel %vm578, %v1092, 0
    %1111 = vmatpush.bf16.msra.mxu0 0
    %1112 = vmatpush.bf16.msra.mxu0 0
    %1113 = vmatpush.bf16.msra.mxu0 0
    %1114 = vmatpush.bf16.msra.mxu0 0
    %1115 = vmatpush.bf16.msra.mxu0 0
    %1116 = vmatpush.bf16.msra.mxu0 0
    %1117 = vmatpush.bf16.msra.mxu0 %v1105
    %1118 = vmatpush.bf16.msra.mxu0 %v1104
    %1119 = vmatmul.bf16.gmra.mxu0 %v1109
    %v1120 = vpop.f32.mrf.mxu0
    %v1121 = vadd.f32 %v1094, %v1120
    %v1122 = vpop.f32.mrf.mxu0
    %1123 = vdwg.mxu0
    %v1124 = vpack.c.bf16 %v1121, %v1121
    %v1126 = vunpack.c.l.b16 %v1124
    %v1127 = vpack.c.b16 %v1126, %v1126
    %1128 = vrot.lane.b32.xlu0 %v1127, 96
    %v1129 = vpop.permute.xlu0 %1128
    %v1131 = vsel %vm601, %v1124, 0
    %v1134 = vsel %vm601, %v1129, 0
    %1136 = vmatpush.bf16.xpose.msra.mxu0 0
    %1137 = vmatpush.bf16.xpose.msra.mxu0 0
    %1138 = vmatpush.bf16.xpose.msra.mxu0 0
    %1139 = vmatpush.bf16.xpose.msra.mxu0 0
    %1140 = vmatpush.bf16.xpose.msra.mxu0 0
    %1141 = vmatpush.bf16.xpose.msra.mxu0 0
    %1142 = vmatpush.bf16.xpose.msra.mxu0 0
    %1143 = vmatpush.bf16.xpose.msra.mxu0 %v1134
    %1144 = vmatmul.bf16.gmra.mxu0 %v1131
    %v1145 = vpop.f32.mrf.mxu0
    %v1146 = vadd.f32 0.0, %v1145
    %v1147 = vpop.f32.mrf.mxu0
    %1148 = vdwg.mxu0
    %v1149 = vsel %vm601, %v1146, -inf
    %1150 = vmax.xlane.f32.xlu0 %v1149
    %v1151 = vpop.xlane.xlu0 %1150
    %v1152 = vsub.f32 %v1146, %v1151
    %v1153 = vmul.f32 %v1152, 1.442695
    %v1154 = vpow.pop %v1153
    %v1155 = vsel %vm601, %v1154, 0.0
    %1156 = vadd.xlane.f32.xlu0 %v1155
    %v1157 = vpop.xlane.xlu0 %1156
    %v1158 = vrcp.pop %v1157
    %v1159 = vmul.f32 %v1154, %v1158
    %v1160 = vpack.c.bf16 %v1159, %v1159
    %1161 = vrot.lane.b32.xlu0 %v1127, 64
    %v1162 = vpop.permute.xlu0 %1161
    %v1164 = vsel %vm601, %v1160, 0
    %v1167 = vsel %vm638, %v1162, 0
    %1169 = vmatpush.bf16.msra.mxu0 0
    %1170 = vmatpush.bf16.msra.mxu0 0
    %1171 = vmatpush.bf16.msra.mxu0 0
    %1172 = vmatpush.bf16.msra.mxu0 0
    %1173 = vmatpush.bf16.msra.mxu0 0
    %1174 = vmatpush.bf16.msra.mxu0 0
    %1175 = vmatpush.bf16.msra.mxu0 0
    %1176 = vmatpush.bf16.msra.mxu0 %v1167
    %1177 = vmatmul.bf16.gmra.mxu0 %v1164
    %v1178 = vpop.f32.mrf.mxu0
    %v1179 = vadd.f32 0.0, %v1178
    %v1180 = vpop.f32.mrf.mxu0
    %1181 = vdwg.mxu0
    %v1182 = vpack.c.bf16 %v1179, %v1179
    %1183 = vrot.lane.b32.xlu0 %v1127, 120
    %v1184 = vpop.permute.xlu0 %1183
    %1185 = vrot.lane.b32.xlu0 %v1127, 88
    %v1186 = vpop.permute.xlu0 %1185
    %v1188 = vsel %vm601, %v1184, 0
    %v1191 = vsel %vm601, %v1186, 0
    %1193 = vmatpush.bf16.xpose.msra.mxu0 0
    %1194 = vmatpush.bf16.xpose.msra.mxu0 0
    %1195 = vmatpush.bf16.xpose.msra.mxu0 0
    %1196 = vmatpush.bf16.xpose.msra.mxu0 0
    %1197 = vmatpush.bf16.xpose.msra.mxu0 0
    %1198 = vmatpush.bf16.xpose.msra.mxu0 0
    %1199 = vmatpush.bf16.xpose.msra.mxu0 0
    %1200 = vmatpush.bf16.xpose.msra.mxu0 %v1191
    %1201 = vmatmul.bf16.gmra.mxu0 %v1188
    %v1202 = vpop.f32.mrf.mxu0
    %v1203 = vadd.f32 0.0, %v1202
    %v1204 = vpop.f32.mrf.mxu0
    %1205 = vdwg.mxu0
    %v1206 = vsel %vm601, %v1203, -inf
    %1207 = vmax.xlane.f32.xlu0 %v1206
    %v1208 = vpop.xlane.xlu0 %1207
    %v1209 = vsub.f32 %v1203, %v1208
    %v1210 = vmul.f32 %v1209, 1.442695
    %v1211 = vpow.pop %v1210
    %v1212 = vsel %vm601, %v1211, 0.0
    %1213 = vadd.xlane.f32.xlu0 %v1212
    %v1214 = vpop.xlane.xlu0 %1213
    %v1215 = vrcp.pop %v1214
    %v1216 = vmul.f32 %v1211, %v1215
    %v1217 = vpack.c.bf16 %v1216, %v1216
    %1218 = vrot.lane.b32.xlu0 %v1127, 56
    %v1219 = vpop.permute.xlu0 %1218
    %v1221 = vsel %vm601, %v1217, 0
    %v1224 = vsel %vm638, %v1219, 0
    %1226 = vmatpush.bf16.msra.mxu0 0
    %1227 = vmatpush.bf16.msra.mxu0 0
    %1228 = vmatpush.bf16.msra.mxu0 0
    %1229 = vmatpush.bf16.msra.mxu0 0
    %1230 = vmatpush.bf16.msra.mxu0 0
    %1231 = vmatpush.bf16.msra.mxu0 0
    %1232 = vmatpush.bf16.msra.mxu0 0
    %1233 = vmatpush.bf16.msra.mxu0 %v1224
    %1234 = vmatmul.bf16.gmra.mxu0 %v1221
    %v1235 = vpop.f32.mrf.mxu0
    %v1236 = vadd.f32 0.0, %v1235
    %v1237 = vpop.f32.mrf.mxu0
    %1238 = vdwg.mxu0
    %v1239 = vpack.c.bf16 %v1236, %v1236
    %v1241 = vsel %vm601, %v1239, 0
    %v1244 = vsel %vm638, %v1087, 0
    %1246 = vmatpush.bf16.msra.mxu0 0
    %1247 = vmatpush.bf16.msra.mxu0 0
    %1248 = vmatpush.bf16.msra.mxu0 0
    %1249 = vmatpush.bf16.msra.mxu0 0
    %1250 = vmatpush.bf16.msra.mxu0 0
    %1251 = vmatpush.bf16.msra.mxu0 0
    %1252 = vmatpush.bf16.msra.mxu0 0
    %1253 = vmatpush.bf16.msra.mxu0 %v1244
    %1254 = vmatmul.bf16.gmra.mxu0 %v1241
    %v1255 = vpop.f32.mrf.mxu0
    %v1256 = vadd.f32 0.0, %v1255
    %v1257 = vpop.f32.mrf.mxu0
    %1258 = vdwg.mxu0
    %v1260 = vsel %vm601, %v1182, 0
    %v1263 = vsel %vm638, %v1086, 0
    %1265 = vmatpush.bf16.msra.mxu0 0
    %1266 = vmatpush.bf16.msra.mxu0 0
    %1267 = vmatpush.bf16.msra.mxu0 0
    %1268 = vmatpush.bf16.msra.mxu0 0
    %1269 = vmatpush.bf16.msra.mxu0 0
    %1270 = vmatpush.bf16.msra.mxu0 0
    %1271 = vmatpush.bf16.msra.mxu0 0
    %1272 = vmatpush.bf16.msra.mxu0 %v1263
    %1273 = vmatmul.bf16.gmra.mxu0 %v1260
    %v1274 = vpop.f32.mrf.mxu0
    %v1275 = vadd.f32 %v1256, %v1274
    %v1276 = vpop.f32.mrf.mxu0
    %1277 = vdwg.mxu0
    %1278 = vrot.lane.b32.xlu0 %v1127, 112
    %v1279 = vpop.permute.xlu0 %1278
    %1280 = vrot.lane.b32.xlu0 %v1127, 80
    %v1281 = vpop.permute.xlu0 %1280
    %v1283 = vsel %vm601, %v1279, 0
    %v1286 = vsel %vm601, %v1281, 0
    %1288 = vmatpush.bf16.xpose.msra.mxu0 0
    %1289 = vmatpush.bf16.xpose.msra.mxu0 0
    %1290 = vmatpush.bf16.xpose.msra.mxu0 0
    %1291 = vmatpush.bf16.xpose.msra.mxu0 0
    %1292 = vmatpush.bf16.xpose.msra.mxu0 0
    %1293 = vmatpush.bf16.xpose.msra.mxu0 0
    %1294 = vmatpush.bf16.xpose.msra.mxu0 0
    %1295 = vmatpush.bf16.xpose.msra.mxu0 %v1286
    %1296 = vmatmul.bf16.gmra.mxu0 %v1283
    %v1297 = vpop.f32.mrf.mxu0
    %v1298 = vadd.f32 0.0, %v1297
    %v1299 = vpop.f32.mrf.mxu0
    %1300 = vdwg.mxu0
    %v1301 = vsel %vm601, %v1298, -inf
    %1302 = vmax.xlane.f32.xlu0 %v1301
    %v1303 = vpop.xlane.xlu0 %1302
    %v1304 = vsub.f32 %v1298, %v1303
    %v1305 = vmul.f32 %v1304, 1.442695
    %v1306 = vpow.pop %v1305
    %v1307 = vsel %vm601, %v1306, 0.0
    %1308 = vadd.xlane.f32.xlu0 %v1307
    %v1309 = vpop.xlane.xlu0 %1308
    %v1310 = vrcp.pop %v1309
    %v1311 = vmul.f32 %v1306, %v1310
    %v1312 = vpack.c.bf16 %v1311, %v1311
    %1313 = vrot.lane.b32.xlu0 %v1127, 48
    %v1314 = vpop.permute.xlu0 %1313
    %v1316 = vsel %vm601, %v1312, 0
    %v1319 = vsel %vm638, %v1314, 0
    %1321 = vmatpush.bf16.msra.mxu0 0
    %1322 = vmatpush.bf16.msra.mxu0 0
    %1323 = vmatpush.bf16.msra.mxu0 0
    %1324 = vmatpush.bf16.msra.mxu0 0
    %1325 = vmatpush.bf16.msra.mxu0 0
    %1326 = vmatpush.bf16.msra.mxu0 0
    %1327 = vmatpush.bf16.msra.mxu0 0
    %1328 = vmatpush.bf16.msra.mxu0 %v1319
    %1329 = vmatmul.bf16.gmra.mxu0 %v1316
    %v1330 = vpop.f32.mrf.mxu0
    %v1331 = vadd.f32 0.0, %v1330
    %v1332 = vpop.f32.mrf.mxu0
    %1333 = vdwg.mxu0
    %v1334 = vpack.c.bf16 %v1331, %v1331
    %v1336 = vsel %vm601, %v1334, 0
    %v1339 = vsel %vm638, %v1088, 0
    %1341 = vmatpush.bf16.msra.mxu0 0
    %1342 = vmatpush.bf16.msra.mxu0 0
    %1343 = vmatpush.bf16.msra.mxu0 0
    %1344 = vmatpush.bf16.msra.mxu0 0
    %1345 = vmatpush.bf16.msra.mxu0 0
    %1346 = vmatpush.bf16.msra.mxu0 0
    %1347 = vmatpush.bf16.msra.mxu0 0
    %1348 = vmatpush.bf16.msra.mxu0 %v1339
    %1349 = vmatmul.bf16.gmra.mxu0 %v1336
    %v1350 = vpop.f32.mrf.mxu0
    %v1351 = vadd.f32 0.0, %v1350
    %v1352 = vpop.f32.mrf.mxu0
    %1353 = vdwg.mxu0
    %v1354 = vadd.f32 %v1275, %v1351
    %1355 = vrot.lane.b32.xlu0 %v1127, 104
    %v1356 = vpop.permute.xlu0 %1355
    %1357 = vrot.lane.b32.xlu0 %v1127, 72
    %v1358 = vpop.permute.xlu0 %1357
    %v1360 = vsel %vm601, %v1356, 0
    %v1363 = vsel %vm601, %v1358, 0
    %1365 = vmatpush.bf16.xpose.msra.mxu0 0
    %1366 = vmatpush.bf16.xpose.msra.mxu0 0
    %1367 = vmatpush.bf16.xpose.msra.mxu0 0
    %1368 = vmatpush.bf16.xpose.msra.mxu0 0
    %1369 = vmatpush.bf16.xpose.msra.mxu0 0
    %1370 = vmatpush.bf16.xpose.msra.mxu0 0
    %1371 = vmatpush.bf16.xpose.msra.mxu0 0
    %1372 = vmatpush.bf16.xpose.msra.mxu0 %v1363
    %1373 = vmatmul.bf16.gmra.mxu0 %v1360
    %v1374 = vpop.f32.mrf.mxu0
    %v1375 = vadd.f32 0.0, %v1374
    %v1376 = vpop.f32.mrf.mxu0
    %1377 = vdwg.mxu0
    %v1378 = vsel %vm601, %v1375, -inf
    %1379 = vmax.xlane.f32.xlu0 %v1378
    %v1380 = vpop.xlane.xlu0 %1379
    %v1381 = vsub.f32 %v1375, %v1380
    %v1382 = vmul.f32 %v1381, 1.442695
    %v1383 = vpow.pop %v1382
    %v1384 = vsel %vm601, %v1383, 0.0
    %1385 = vadd.xlane.f32.xlu0 %v1384
    %v1386 = vpop.xlane.xlu0 %1385
    %v1387 = vrcp.pop %v1386
    %v1388 = vmul.f32 %v1383, %v1387
    %v1389 = vpack.c.bf16 %v1388, %v1388
    %1390 = vrot.lane.b32.xlu0 %v1127, 40
    %v1391 = vpop.permute.xlu0 %1390
    %v1393 = vsel %vm601, %v1389, 0
    %v1396 = vsel %vm638, %v1391, 0
    %1398 = vmatpush.bf16.msra.mxu0 0
    %1399 = vmatpush.bf16.msra.mxu0 0
    %1400 = vmatpush.bf16.msra.mxu0 0
    %1401 = vmatpush.bf16.msra.mxu0 0
    %1402 = vmatpush.bf16.msra.mxu0 0
    %1403 = vmatpush.bf16.msra.mxu0 0
    %1404 = vmatpush.bf16.msra.mxu0 0
    %1405 = vmatpush.bf16.msra.mxu0 %v1396
    %1406 = vmatmul.bf16.gmra.mxu0 %v1393
    %v1407 = vpop.f32.mrf.mxu0
    %v1408 = vadd.f32 0.0, %v1407
    %v1409 = vpop.f32.mrf.mxu0
    %1410 = vdwg.mxu0
    %v1411 = vpack.c.bf16 %v1408, %v1408
    %v1413 = vsel %vm601, %v1411, 0
    %v1416 = vsel %vm638, %v1089, 0
    %1418 = vmatpush.bf16.msra.mxu0 0
    %1419 = vmatpush.bf16.msra.mxu0 0
    %1420 = vmatpush.bf16.msra.mxu0 0
    %1421 = vmatpush.bf16.msra.mxu0 0
    %1422 = vmatpush.bf16.msra.mxu0 0
    %1423 = vmatpush.bf16.msra.mxu0 0
    %1424 = vmatpush.bf16.msra.mxu0 0
    %1425 = vmatpush.bf16.msra.mxu0 %v1416
    %1426 = vmatmul.bf16.gmra.mxu0 %v1413
    %v1427 = vpop.f32.mrf.mxu0
    %v1428 = vadd.f32 0.0, %v1427
    %v1429 = vpop.f32.mrf.mxu0
    %1430 = vdwg.mxu0
    %v1431 = vadd.f32 %v1354, %v1428
    %v1433 = vperm.slane %v1091, 0
    %v1435 = vadd.f32 %v1431, %v1433
    %v1436 = vadd.f32 %v1077, %v1435
    %s1437 = scalar_lea.vmem %s57, 1
    %v1438 = vld [vmem:[%s1437] sm:$0x1]
    %s1439 = scalar_lea.vmem %s55, 1
    %v1440 = vld [vmem:[%s1439] sm:$0x1]
    %v1441 = vsel %vm578, %v1436, 0.0
    %1442 = vadd.xlane.f32.xlu0 %v1441
    %v1443 = vpop.xlane.xlu0 %1442
    %v1444 = vmul.f32 %v1443, %v921
    %v1445 = vmul.f32 %v1436, %v1436
    %v1446 = vsel %vm578, %v1445, 0.0
    %1447 = vadd.xlane.f32.xlu0 %v1446
    %v1448 = vpop.xlane.xlu0 %1447
    %v1449 = vmul.f32 %v1448, %v921
    %v1450 = vmul.f32 %v1444, %v1444
    %v1451 = vsub.f32 %v1449, %v1450
    %v1452 = vsub.f32 %v1436, %v1444
    %v1453 = vadd.f32 %v1451, 1e-05
    %v1454 = vrsqrt.pop %v1453
    %v1455 = vmul.f32 %v1454, %v1453
    %v1456 = vmul.f32 %v1455, %v1454
    %v1457 = vmul.f32 0.5, %v1456
    %v1458 = vsub.f32 1.5, %v1457
    %v1459 = vmul.f32 %v1454, %v1458
    %vm1460 = vweird.f32 %v1453
    %vm1461 = vweird.f32 %v1454
    %vm1462 = vmor %vm1460, %vm1461
    %v1463 = vsel %vm1462, %v1454, %v1459
    %v1464 = vmul.f32 %v1452, %v1463
    %v1466 = vperm.slane %v1438, 0
    %v1468 = vmul.f32 %v1464, %v1466
    %v1470 = vperm.slane %v1440, 0
    %v1472 = vadd.f32 %v1468, %v1470
    %s1473 = scalar_lea.vmem [#allocation37], 16
    %v1474 = vld [vmem:[%s1473] sm:$0xf]
    %v1475 = vld [vmem:[%s1473 + $0x4] sm:$0xf]
    %v1476 = vld [vmem:[%s1473 + $0x8] sm:$0xf]
    %v1477 = vld [vmem:[%s1473 + $0xc] sm:$0xf]
    %s1478 = scalar_lea.vmem %s51, 1
    %v1479 = vld [vmem:[%s1478] sm:$0x1]
    %s1480 = scalar_lea.vmem %s73, 32
    %v1481 = vld [vmem:[%s1480] sm:$0xf]
    %v1482 = vld [vmem:[%s1480 + $0x4] sm:$0xf]
    %v1483 = vld [vmem:[%s1480 + $0x8] sm:$0xf]
    %v1484 = vld [vmem:[%s1480 + $0xc] sm:$0xf]
    %v1485 = vld [vmem:[%s1480 + $0x10] sm:$0xf]
    %v1486 = vld [vmem:[%s1480 + $0x14] sm:$0xf]
    %v1487 = vld [vmem:[%s1480 + $0x18] sm:$0xf]
    %v1488 = vld [vmem:[%s1480 + $0x1c] sm:$0xf]
    %s1489 = scalar_lea.vmem %s53, 1
    %v1490 = vld [vmem:[%s1489] sm:$0x1]
    %v1491 = vpack.c.bf16 %v1472, %v1472
    %v1493 = vperm.slane %v1479, 0
    %v1499 = vunpack.c.l.b16 %v1474
    %v1500 = vunpack.c.l.b16 %v1475
    %v1501 = vunpack.c.l.b16 %v1476
    %v1502 = vunpack.c.l.b16 %v1477
    %v1503 = vpack.c.b16 %v1500, %v1499
    %v1504 = vpack.c.b16 %v1502, %v1501
    %v1508 = vsel %vm578, %v1491, 0
    %1510 = vmatpush.bf16.msra.mxu0 0
    %1511 = vmatpush.bf16.msra.mxu0 0
    %1512 = vmatpush.bf16.msra.mxu0 0
    %1513 = vmatpush.bf16.msra.mxu0 0
    %1514 = vmatpush.bf16.msra.mxu0 0
    %1515 = vmatpush.bf16.msra.mxu0 0
    %1516 = vmatpush.bf16.msra.mxu0 %v1504
    %1517 = vmatpush.bf16.msra.mxu0 %v1503
    %1518 = vmatmul.bf16.gmra.mxu0 %v1508
    %v1519 = vpop.f32.mrf.mxu0
    %v1520 = vadd.f32 %v1493, %v1519
    %v1521 = vpop.f32.mrf.mxu0
    %1522 = vdwg.mxu0
    %v1523 = vmax.f32 %v1520, 0.0
    %v1524 = vpack.c.bf16 %v1523, %v1523
    %v1526 = vperm.slane %v1490, 0
    %v1536 = vunpack.c.l.b16 %v1481
    %v1537 = vunpack.c.l.b16 %v1482
    %v1538 = vunpack.c.l.b16 %v1483
    %v1539 = vunpack.c.l.b16 %v1484
    %v1540 = vunpack.c.l.b16 %v1485
    %v1541 = vunpack.c.l.b16 %v1486
    %v1542 = vunpack.c.l.b16 %v1487
    %v1543 = vunpack.c.l.b16 %v1488
    %v1544 = vpack.c.b16 %v1537, %v1536
    %v1545 = vpack.c.b16 %v1539, %v1538
    %v1546 = vpack.c.b16 %v1541, %v1540
    %v1547 = vpack.c.b16 %v1543, %v1542
    %v1553 = vsel %vm1026, %v1524, 0
    %1555 = vmatpush.bf16.msra.mxu0 0
    %1556 = vmatpush.bf16.msra.mxu0 0
    %1557 = vmatpush.bf16.msra.mxu0 0
    %1558 = vmatpush.bf16.msra.mxu0 0
    %1559 = vmatpush.bf16.msra.mxu0 %v1547
    %1560 = vmatpush.bf16.msra.mxu0 %v1546
    %1561 = vmatpush.bf16.msra.mxu0 %v1545
    %1562 = vmatpush.bf16.msra.mxu0 %v1544
    %1563 = vmatmul.bf16.gmra.mxu0 %v1553
    %v1564 = vpop.f32.mrf.mxu0
    %v1565 = vadd.f32 %v1526, %v1564
    %v1566 = vpop.f32.mrf.mxu0
    %1567 = vdwg.mxu0
    %v1568 = vadd.f32 %v1472, %v1565
    %s1569 = scalar_lea.vmem %s61, 1
    %v1570 = vld [vmem:[%s1569] sm:$0x1]
    %s1571 = scalar_lea.vmem [#allocation32], 1
    %v1572 = vld [vmem:[%s1571] sm:$0x1]
    %v1573 = vsel %vm578, %v1568, 0.0
    %1574 = vadd.xlane.f32.xlu0 %v1573
    %v1575 = vpop.xlane.xlu0 %1574
    %v1576 = vmul.f32 %v1575, %v921
    %v1577 = vmul.f32 %v1568, %v1568
    %v1578 = vsel %vm578, %v1577, 0.0
    %1579 = vadd.xlane.f32.xlu0 %v1578
    %v1580 = vpop.xlane.xlu0 %1579
    %v1581 = vmul.f32 %v1580, %v921
    %v1582 = vmul.f32 %v1576, %v1576
    %v1583 = vsub.f32 %v1581, %v1582
    %v1584 = vsub.f32 %v1568, %v1576
    %v1585 = vadd.f32 %v1583, 1e-05
    %v1586 = vrsqrt.pop %v1585
    %v1587 = vmul.f32 %v1586, %v1585
    %v1588 = vmul.f32 %v1587, %v1586
    %v1589 = vmul.f32 0.5, %v1588
    %v1590 = vsub.f32 1.5, %v1589
    %v1591 = vmul.f32 %v1586, %v1590
    %vm1592 = vweird.f32 %v1585
    %vm1593 = vweird.f32 %v1586
    %vm1594 = vmor %vm1592, %vm1593
    %v1595 = vsel %vm1594, %v1586, %v1591
    %v1596 = vmul.f32 %v1584, %v1595
    %v1598 = vperm.slane %v1570, 0
    %v1600 = vmul.f32 %v1596, %v1598
    %v1602 = vperm.slane %v1572, 0
    %v1604 = vadd.f32 %v1600, %v1602
    %v1605 = vld [vmem:[%s77] sm:$0x1]
    %v1606 = vld [vmem:[%s75] sm:$0x1]
    %v1607 = vsel %vm578, %v1604, 0.0
    %1608 = vadd.xlane.f32.xlu0 %v1607
    %v1609 = vpop.xlane.xlu0 %1608
    %v1610 = vmul.f32 %v1609, %v921
    %v1611 = vmul.f32 %v1604, %v1604
    %v1612 = vsel %vm578, %v1611, 0.0
    %1613 = vadd.xlane.f32.xlu0 %v1612
    %v1614 = vpop.xlane.xlu0 %1613
    %v1615 = vmul.f32 %v1614, %v921
    %v1616 = vmul.f32 %v1610, %v1610
    %v1617 = vsub.f32 %v1615, %v1616
    %v1618 = vsub.f32 %v1604, %v1610
    %v1619 = vadd.f32 %v1617, 1e-05
    %v1620 = vrsqrt.pop %v1619
    %v1621 = vmul.f32 %v1620, %v1619
    %v1622 = vmul.f32 %v1621, %v1620
    %v1623 = vmul.f32 0.5, %v1622
    %v1624 = vsub.f32 1.5, %v1623
    %v1625 = vmul.f32 %v1620, %v1624
    %vm1626 = vweird.f32 %v1619
    %vm1627 = vweird.f32 %v1620
    %vm1628 = vmor %vm1626, %vm1627
    %v1629 = vsel %vm1628, %v1620, %v1625
    %v1630 = vmul.f32 %v1618, %v1629
    %v1632 = vperm.slane %v1605, 0
    %v1634 = vmul.f32 %v1630, %v1632
    %v1636 = vperm.slane %v1606, 0
    %v1638 = vadd.f32 %v1634, %v1636
    %v1639 = vld [vmem:[%s37] sm:$0xf]
    %v1640 = vld [vmem:[%s37 + $0x4] sm:$0xf]
    %v1641 = vld [vmem:[%s37 + $0x8] sm:$0xf]
    %v1642 = vld [vmem:[%s37 + $0xc] sm:$0xf]
    %v1643 = vld [vmem:[#allocation23] sm:$0x1]
    %v1644 = vld [vmem:[%s33] sm:$0xf]
    %v1645 = vld [vmem:[%s33 + $0x4] sm:$0xf]
    %v1646 = vld [vmem:[%s33 + $0x8] sm:$0xf]
    %v1647 = vld [vmem:[%s33 + $0xc] sm:$0xf]
    %v1648 = vld [vmem:[#allocation22] sm:$0x1]
    %v1650 = vperm.slane %v1643, 0
    %v1656 = vunpack.c.l.b16 %v1639
    %v1657 = vunpack.c.l.b16 %v1640
    %v1658 = vunpack.c.l.b16 %v1641
    %v1659 = vunpack.c.l.b16 %v1642
    %v1660 = vpack.c.b16 %v1657, %v1656
    %v1661 = vpack.c.b16 %v1659, %v1658
    %1664 = vmatpush.bf16.msra.mxu0 0
    %1665 = vmatpush.bf16.msra.mxu0 0
    %1666 = vmatpush.bf16.msra.mxu0 0
    %1667 = vmatpush.bf16.msra.mxu0 0
    %1668 = vmatpush.bf16.msra.mxu0 0
    %1669 = vmatpush.bf16.msra.mxu0 0
    %1670 = vmatpush.bf16.msra.mxu0 %v1661
    %1671 = vmatpush.bf16.msra.mxu0 %v1660
    %1672 = vmatmul.bf16.gmra.mxu0 %v580
    %v1673 = vpop.f32.mrf.mxu0
    %v1674 = vadd.f32 %v1650, %v1673
    %v1675 = vpop.f32.mrf.mxu0
    %1676 = vdwg.mxu0
    %v1677 = vpack.c.bf16 %v1674, %v1674
    %v1679 = vunpack.c.l.b16 %v1677
    %v1680 = vpack.c.b16 %v1679, %v1679
    %1681 = vrot.lane.b32.xlu0 %v1680, 96
    %v1682 = vpop.permute.xlu0 %1681
    %v1684 = vsel %vm601, %v1677, 0
    %v1687 = vsel %vm601, %v1682, 0
    %1689 = vmatpush.bf16.xpose.msra.mxu0 0
    %1690 = vmatpush.bf16.xpose.msra.mxu0 0
    %1691 = vmatpush.bf16.xpose.msra.mxu0 0
    %1692 = vmatpush.bf16.xpose.msra.mxu0 0
    %1693 = vmatpush.bf16.xpose.msra.mxu0 0
    %1694 = vmatpush.bf16.xpose.msra.mxu0 0
    %1695 = vmatpush.bf16.xpose.msra.mxu0 0
    %1696 = vmatpush.bf16.xpose.msra.mxu0 %v1687
    %1697 = vmatmul.bf16.gmra.mxu0 %v1684
    %v1698 = vpop.f32.mrf.mxu0
    %v1699 = vadd.f32 0.0, %v1698
    %v1700 = vpop.f32.mrf.mxu0
    %1701 = vdwg.mxu0
    %v1702 = vsel %vm601, %v1699, -inf
    %1703 = vmax.xlane.f32.xlu0 %v1702
    %v1704 = vpop.xlane.xlu0 %1703
    %v1705 = vsub.f32 %v1699, %v1704
    %v1706 = vmul.f32 %v1705, 1.442695
    %v1707 = vpow.pop %v1706
    %v1708 = vsel %vm601, %v1707, 0.0
    %1709 = vadd.xlane.f32.xlu0 %v1708
    %v1710 = vpop.xlane.xlu0 %1709
    %v1711 = vrcp.pop %v1710
    %v1712 = vmul.f32 %v1707, %v1711
    %v1713 = vpack.c.bf16 %v1712, %v1712
    %1714 = vrot.lane.b32.xlu0 %v1680, 64
    %v1715 = vpop.permute.xlu0 %1714
    %v1717 = vsel %vm601, %v1713, 0
    %v1720 = vsel %vm638, %v1715, 0
    %1722 = vmatpush.bf16.msra.mxu0 0
    %1723 = vmatpush.bf16.msra.mxu0 0
    %1724 = vmatpush.bf16.msra.mxu0 0
    %1725 = vmatpush.bf16.msra.mxu0 0
    %1726 = vmatpush.bf16.msra.mxu0 0
    %1727 = vmatpush.bf16.msra.mxu0 0
    %1728 = vmatpush.bf16.msra.mxu0 0
    %1729 = vmatpush.bf16.msra.mxu0 %v1720
    %1730 = vmatmul.bf16.gmra.mxu0 %v1717
    %v1731 = vpop.f32.mrf.mxu0
    %v1732 = vadd.f32 0.0, %v1731
    %v1733 = vpop.f32.mrf.mxu0
    %1734 = vdwg.mxu0
    %v1735 = vpack.c.bf16 %v1732, %v1732
    %1736 = vrot.lane.b32.xlu0 %v1680, 120
    %v1737 = vpop.permute.xlu0 %1736
    %1738 = vrot.lane.b32.xlu0 %v1680, 88
    %v1739 = vpop.permute.xlu0 %1738
    %v1741 = vsel %vm601, %v1737, 0
    %v1744 = vsel %vm601, %v1739, 0
    %1746 = vmatpush.bf16.xpose.msra.mxu0 0
    %1747 = vmatpush.bf16.xpose.msra.mxu0 0
    %1748 = vmatpush.bf16.xpose.msra.mxu0 0
    %1749 = vmatpush.bf16.xpose.msra.mxu0 0
    %1750 = vmatpush.bf16.xpose.msra.mxu0 0
    %1751 = vmatpush.bf16.xpose.msra.mxu0 0
    %1752 = vmatpush.bf16.xpose.msra.mxu0 0
    %1753 = vmatpush.bf16.xpose.msra.mxu0 %v1744
    %1754 = vmatmul.bf16.gmra.mxu0 %v1741
    %v1755 = vpop.f32.mrf.mxu0
    %v1756 = vadd.f32 0.0, %v1755
    %v1757 = vpop.f32.mrf.mxu0
    %1758 = vdwg.mxu0
    %v1759 = vsel %vm601, %v1756, -inf
    %1760 = vmax.xlane.f32.xlu0 %v1759
    %v1761 = vpop.xlane.xlu0 %1760
    %v1762 = vsub.f32 %v1756, %v1761
    %v1763 = vmul.f32 %v1762, 1.442695
    %v1764 = vpow.pop %v1763
    %v1765 = vsel %vm601, %v1764, 0.0
    %1766 = vadd.xlane.f32.xlu0 %v1765
    %v1767 = vpop.xlane.xlu0 %1766
    %v1768 = vrcp.pop %v1767
    %v1769 = vmul.f32 %v1764, %v1768
    %v1770 = vpack.c.bf16 %v1769, %v1769
    %1771 = vrot.lane.b32.xlu0 %v1680, 56
    %v1772 = vpop.permute.xlu0 %1771
    %v1774 = vsel %vm601, %v1770, 0
    %v1777 = vsel %vm638, %v1772, 0
    %1779 = vmatpush.bf16.msra.mxu0 0
    %1780 = vmatpush.bf16.msra.mxu0 0
    %1781 = vmatpush.bf16.msra.mxu0 0
    %1782 = vmatpush.bf16.msra.mxu0 0
    %1783 = vmatpush.bf16.msra.mxu0 0
    %1784 = vmatpush.bf16.msra.mxu0 0
    %1785 = vmatpush.bf16.msra.mxu0 0
    %1786 = vmatpush.bf16.msra.mxu0 %v1777
    %1787 = vmatmul.bf16.gmra.mxu0 %v1774
    %v1788 = vpop.f32.mrf.mxu0
    %v1789 = vadd.f32 0.0, %v1788
    %v1790 = vpop.f32.mrf.mxu0
    %1791 = vdwg.mxu0
    %v1792 = vpack.c.bf16 %v1789, %v1789
    %v1794 = vsel %vm601, %v1792, 0
    %v1797 = vsel %vm638, %v1645, 0
    %1799 = vmatpush.bf16.msra.mxu0 0
    %1800 = vmatpush.bf16.msra.mxu0 0
    %1801 = vmatpush.bf16.msra.mxu0 0
    %1802 = vmatpush.bf16.msra.mxu0 0
    %1803 = vmatpush.bf16.msra.mxu0 0
    %1804 = vmatpush.bf16.msra.mxu0 0
    %1805 = vmatpush.bf16.msra.mxu0 0
    %1806 = vmatpush.bf16.msra.mxu0 %v1797
    %1807 = vmatmul.bf16.gmra.mxu0 %v1794
    %v1808 = vpop.f32.mrf.mxu0
    %v1809 = vadd.f32 0.0, %v1808
    %v1810 = vpop.f32.mrf.mxu0
    %1811 = vdwg.mxu0
    %v1813 = vsel %vm601, %v1735, 0
    %v1816 = vsel %vm638, %v1644, 0
    %1818 = vmatpush.bf16.msra.mxu0 0
    %1819 = vmatpush.bf16.msra.mxu0 0
    %1820 = vmatpush.bf16.msra.mxu0 0
    %1821 = vmatpush.bf16.msra.mxu0 0
    %1822 = vmatpush.bf16.msra.mxu0 0
    %1823 = vmatpush.bf16.msra.mxu0 0
    %1824 = vmatpush.bf16.msra.mxu0 0
    %1825 = vmatpush.bf16.msra.mxu0 %v1816
    %1826 = vmatmul.bf16.gmra.mxu0 %v1813
    %v1827 = vpop.f32.mrf.mxu0
    %v1828 = vadd.f32 %v1809, %v1827
    %v1829 = vpop.f32.mrf.mxu0
    %1830 = vdwg.mxu0
    %1831 = vrot.lane.b32.xlu0 %v1680, 112
    %v1832 = vpop.permute.xlu0 %1831
    %1833 = vrot.lane.b32.xlu0 %v1680, 80
    %v1834 = vpop.permute.xlu0 %1833
    %v1836 = vsel %vm601, %v1832, 0
    %v1839 = vsel %vm601, %v1834, 0
    %1841 = vmatpush.bf16.xpose.msra.mxu0 0
    %1842 = vmatpush.bf16.xpose.msra.mxu0 0
    %1843 = vmatpush.bf16.xpose.msra.mxu0 0
    %1844 = vmatpush.bf16.xpose.msra.mxu0 0
    %1845 = vmatpush.bf16.xpose.msra.mxu0 0
    %1846 = vmatpush.bf16.xpose.msra.mxu0 0
    %1847 = vmatpush.bf16.xpose.msra.mxu0 0
    %1848 = vmatpush.bf16.xpose.msra.mxu0 %v1839
    %1849 = vmatmul.bf16.gmra.mxu0 %v1836
    %v1850 = vpop.f32.mrf.mxu0
    %v1851 = vadd.f32 0.0, %v1850
    %v1852 = vpop.f32.mrf.mxu0
    %1853 = vdwg.mxu0
    %v1854 = vsel %vm601, %v1851, -inf
    %1855 = vmax.xlane.f32.xlu0 %v1854
    %v1856 = vpop.xlane.xlu0 %1855
    %v1857 = vsub.f32 %v1851, %v1856
    %v1858 = vmul.f32 %v1857, 1.442695
    %v1859 = vpow.pop %v1858
    %v1860 = vsel %vm601, %v1859, 0.0
    %1861 = vadd.xlane.f32.xlu0 %v1860
    %v1862 = vpop.xlane.xlu0 %1861
    %v1863 = vrcp.pop %v1862
    %v1864 = vmul.f32 %v1859, %v1863
    %v1865 = vpack.c.bf16 %v1864, %v1864
    %1866 = vrot.lane.b32.xlu0 %v1680, 48
    %v1867 = vpop.permute.xlu0 %1866
    %v1869 = vsel %vm601, %v1865, 0
    %v1872 = vsel %vm638, %v1867, 0
    %1874 = vmatpush.bf16.msra.mxu0 0
    %1875 = vmatpush.bf16.msra.mxu0 0
    %1876 = vmatpush.bf16.msra.mxu0 0
    %1877 = vmatpush.bf16.msra.mxu0 0
    %1878 = vmatpush.bf16.msra.mxu0 0
    %1879 = vmatpush.bf16.msra.mxu0 0
    %1880 = vmatpush.bf16.msra.mxu0 0
    %1881 = vmatpush.bf16.msra.mxu0 %v1872
    %1882 = vmatmul.bf16.gmra.mxu0 %v1869
    %v1883 = vpop.f32.mrf.mxu0
    %v1884 = vadd.f32 0.0, %v1883
    %v1885 = vpop.f32.mrf.mxu0
    %1886 = vdwg.mxu0
    %v1887 = vpack.c.bf16 %v1884, %v1884
    %v1889 = vsel %vm601, %v1887, 0
    %v1892 = vsel %vm638, %v1646, 0
    %1894 = vmatpush.bf16.msra.mxu0 0
    %1895 = vmatpush.bf16.msra.mxu0 0
    %1896 = vmatpush.bf16.msra.mxu0 0
    %1897 = vmatpush.bf16.msra.mxu0 0
    %1898 = vmatpush.bf16.msra.mxu0 0
    %1899 = vmatpush.bf16.msra.mxu0 0
    %1900 = vmatpush.bf16.msra.mxu0 0
    %1901 = vmatpush.bf16.msra.mxu0 %v1892
    %1902 = vmatmul.bf16.gmra.mxu0 %v1889
    %v1903 = vpop.f32.mrf.mxu0
    %v1904 = vadd.f32 0.0, %v1903
    %v1905 = vpop.f32.mrf.mxu0
    %1906 = vdwg.mxu0
    %v1907 = vadd.f32 %v1828, %v1904
    %1908 = vrot.lane.b32.xlu0 %v1680, 104
    %v1909 = vpop.permute.xlu0 %1908
    %1910 = vrot.lane.b32.xlu0 %v1680, 72
    %v1911 = vpop.permute.xlu0 %1910
    %v1913 = vsel %vm601, %v1909, 0
    %v1916 = vsel %vm601, %v1911, 0
    %1918 = vmatpush.bf16.xpose.msra.mxu0 0
    %1919 = vmatpush.bf16.xpose.msra.mxu0 0
    %1920 = vmatpush.bf16.xpose.msra.mxu0 0
    %1921 = vmatpush.bf16.xpose.msra.mxu0 0
    %1922 = vmatpush.bf16.xpose.msra.mxu0 0
    %1923 = vmatpush.bf16.xpose.msra.mxu0 0
    %1924 = vmatpush.bf16.xpose.msra.mxu0 0
    %1925 = vmatpush.bf16.xpose.msra.mxu0 %v1916
    %1926 = vmatmul.bf16.gmra.mxu0 %v1913
    %v1927 = vpop.f32.mrf.mxu0
    %v1928 = vadd.f32 0.0, %v1927
    %v1929 = vpop.f32.mrf.mxu0
    %1930 = vdwg.mxu0
    %v1931 = vsel %vm601, %v1928, -inf
    %1932 = vmax.xlane.f32.xlu0 %v1931
    %v1933 = vpop.xlane.xlu0 %1932
    %v1934 = vsub.f32 %v1928, %v1933
    %v1935 = vmul.f32 %v1934, 1.442695
    %v1936 = vpow.pop %v1935
    %v1937 = vsel %vm601, %v1936, 0.0
    %1938 = vadd.xlane.f32.xlu0 %v1937
    %v1939 = vpop.xlane.xlu0 %1938
    %v1940 = vrcp.pop %v1939
    %v1941 = vmul.f32 %v1936, %v1940
    %v1942 = vpack.c.bf16 %v1941, %v1941
    %1943 = vrot.lane.b32.xlu0 %v1680, 40
    %v1944 = vpop.permute.xlu0 %1943
    %v1946 = vsel %vm601, %v1942, 0
    %v1949 = vsel %vm638, %v1944, 0
    %1951 = vmatpush.bf16.msra.mxu0 0
    %1952 = vmatpush.bf16.msra.mxu0 0
    %1953 = vmatpush.bf16.msra.mxu0 0
    %1954 = vmatpush.bf16.msra.mxu0 0
    %1955 = vmatpush.bf16.msra.mxu0 0
    %1956 = vmatpush.bf16.msra.mxu0 0
    %1957 = vmatpush.bf16.msra.mxu0 0
    %1958 = vmatpush.bf16.msra.mxu0 %v1949
    %1959 = vmatmul.bf16.gmra.mxu0 %v1946
    %v1960 = vpop.f32.mrf.mxu0
    %v1961 = vadd.f32 0.0, %v1960
    %v1962 = vpop.f32.mrf.mxu0
    %1963 = vdwg.mxu0
    %v1964 = vpack.c.bf16 %v1961, %v1961
    %v1966 = vsel %vm601, %v1964, 0
    %v1969 = vsel %vm638, %v1647, 0
    %1971 = vmatpush.bf16.msra.mxu0 0
    %1972 = vmatpush.bf16.msra.mxu0 0
    %1973 = vmatpush.bf16.msra.mxu0 0
    %1974 = vmatpush.bf16.msra.mxu0 0
    %1975 = vmatpush.bf16.msra.mxu0 0
    %1976 = vmatpush.bf16.msra.mxu0 0
    %1977 = vmatpush.bf16.msra.mxu0 0
    %1978 = vmatpush.bf16.msra.mxu0 %v1969
    %1979 = vmatmul.bf16.gmra.mxu0 %v1966
    %v1980 = vpop.f32.mrf.mxu0
    %v1981 = vadd.f32 0.0, %v1980
    %v1982 = vpop.f32.mrf.mxu0
    %1983 = vdwg.mxu0
    %v1984 = vadd.f32 %v1907, %v1981
    %v1986 = vperm.slane %v1648, 0
    %v1988 = vadd.f32 %v1984, %v1986
    %v1989 = vadd.f32 %v549, %v1988
    %v1990 = vld [vmem:[#allocation14] sm:$0x1]
    %v1991 = vld [vmem:[#allocation13] sm:$0x1]
    %v1992 = vsel %vm578, %v1989, 0.0
    %1993 = vadd.xlane.f32.xlu0 %v1992
    %v1994 = vpop.xlane.xlu0 %1993
    %v1995 = vmul.f32 %v1994, %v921
    %v1996 = vmul.f32 %v1989, %v1989
    %v1997 = vsel %vm578, %v1996, 0.0
    %1998 = vadd.xlane.f32.xlu0 %v1997
    %v1999 = vpop.xlane.xlu0 %1998
    %v2000 = vmul.f32 %v1999, %v921
    %v2001 = vmul.f32 %v1995, %v1995
    %v2002 = vsub.f32 %v2000, %v2001
    %v2003 = vsub.f32 %v1989, %v1995
    %v2004 = vadd.f32 %v2002, 1e-05
    %v2005 = vrsqrt.pop %v2004
    %v2006 = vmul.f32 %v2005, %v2004
    %v2007 = vmul.f32 %v2006, %v2005
    %v2008 = vmul.f32 0.5, %v2007
    %v2009 = vsub.f32 1.5, %v2008
    %v2010 = vmul.f32 %v2005, %v2009
    %vm2011 = vweird.f32 %v2004
    %vm2012 = vweird.f32 %v2005
    %vm2013 = vmor %vm2011, %vm2012
    %v2014 = vsel %vm2013, %v2005, %v2010
    %v2015 = vmul.f32 %v2003, %v2014
    %v2017 = vperm.slane %v1990, 0
    %v2019 = vmul.f32 %v2015, %v2017
    %v2021 = vperm.slane %v1991, 0
    %v2023 = vadd.f32 %v2019, %v2021
    %v2024 = vld [vmem:[%s17] sm:$0xf]
    %v2025 = vld [vmem:[%s17 + $0x4] sm:$0xf]
    %v2026 = vld [vmem:[%s17 + $0x8] sm:$0xf]
    %v2027 = vld [vmem:[%s17 + $0xc] sm:$0xf]
    %v2028 = vld [vmem:[#allocation11] sm:$0x1]
    %v2029 = vpack.c.bf16 %v2023, %v2023
    %v2031 = vperm.slane %v2028, 0
    %v2037 = vunpack.c.l.b16 %v2024
    %v2038 = vunpack.c.l.b16 %v2025
    %v2039 = vunpack.c.l.b16 %v2026
    %v2040 = vunpack.c.l.b16 %v2027
    %v2041 = vpack.c.b16 %v2038, %v2037
    %v2042 = vpack.c.b16 %v2040, %v2039
    %v2046 = vsel %vm578, %v2029, 0
    %2048 = vmatpush.bf16.msra.mxu0 0
    %2049 = vmatpush.bf16.msra.mxu0 0
    %2050 = vmatpush.bf16.msra.mxu0 0
    %2051 = vmatpush.bf16.msra.mxu0 0
    %2052 = vmatpush.bf16.msra.mxu0 0
    %2053 = vmatpush.bf16.msra.mxu0 0
    %2054 = vmatpush.bf16.msra.mxu0 %v2042
    %2055 = vmatpush.bf16.msra.mxu0 %v2041
    %2056 = vmatmul.bf16.gmra.mxu0 %v2046
    %v2057 = vpop.f32.mrf.mxu0
    %v2058 = vadd.f32 %v2031, %v2057
    %v2059 = vpop.f32.mrf.mxu0
    %2060 = vdwg.mxu0
    %v2061 = vld [vmem:[%s9] sm:$0xf]
    %v2062 = vld [vmem:[%s9 + $0x4] sm:$0xf]
    %v2063 = vld [vmem:[%s9 + $0x8] sm:$0xf]
    %v2064 = vld [vmem:[%s9 + $0xc] sm:$0xf]
    %v2065 = vld [vmem:[#allocation8] sm:$0x1]
    %v2066 = vpack.c.bf16 %v1638, %v1638
    %v2068 = vperm.slane %v2065, 0
    %v2074 = vunpack.c.l.b16 %v2061
    %v2075 = vunpack.c.l.b16 %v2062
    %v2076 = vunpack.c.l.b16 %v2063
    %v2077 = vunpack.c.l.b16 %v2064
    %v2078 = vpack.c.b16 %v2075, %v2074
    %v2079 = vpack.c.b16 %v2077, %v2076
    %v2083 = vsel %vm578, %v2066, 0
    %2085 = vmatpush.bf16.msra.mxu0 0
    %2086 = vmatpush.bf16.msra.mxu0 0
    %2087 = vmatpush.bf16.msra.mxu0 0
    %2088 = vmatpush.bf16.msra.mxu0 0
    %2089 = vmatpush.bf16.msra.mxu0 0
    %2090 = vmatpush.bf16.msra.mxu0 0
    %2091 = vmatpush.bf16.msra.mxu0 %v2079
    %2092 = vmatpush.bf16.msra.mxu0 %v2078
    %2093 = vmatmul.bf16.gmra.mxu0 %v2083
    %v2094 = vpop.f32.mrf.mxu0
    %v2095 = vadd.f32 %v2068, %v2094
    %v2096 = vpop.f32.mrf.mxu0
    %2097 = vdwg.mxu0
    %v2098 = vld [vmem:[%s13] sm:$0xf]
    %v2099 = vld [vmem:[%s13 + $0x4] sm:$0xf]
    %v2100 = vld [vmem:[%s13 + $0x8] sm:$0xf]
    %v2101 = vld [vmem:[%s13 + $0xc] sm:$0xf]
    %v2102 = vld [vmem:[#allocation10] sm:$0x1]
    %v2103 = vpack.c.bf16 %v2058, %v2058
    %v2104 = vpack.c.bf16 %v2095, %v2095
    %v2106 = vsel %vm601, %v2103, 0
    %v2109 = vsel %vm601, %v2104, 0
    %2111 = vmatpush.bf16.xpose.msra.mxu0 0
    %2112 = vmatpush.bf16.xpose.msra.mxu0 0
    %2113 = vmatpush.bf16.xpose.msra.mxu0 0
    %2114 = vmatpush.bf16.xpose.msra.mxu0 0
    %2115 = vmatpush.bf16.xpose.msra.mxu0 0
    %2116 = vmatpush.bf16.xpose.msra.mxu0 0
    %2117 = vmatpush.bf16.xpose.msra.mxu0 0
    %2118 = vmatpush.bf16.xpose.msra.mxu0 %v2109
    %2119 = vmatmul.bf16.gmra.mxu0 %v2106
    %v2120 = vpop.f32.mrf.mxu0
    %v2121 = vadd.f32 0.0, %v2120
    %v2122 = vpop.f32.mrf.mxu0
    %2123 = vdwg.mxu0
    %v2124 = vsel %vm601, %v2121, -inf
    %2125 = vmax.xlane.f32.xlu0 %v2124
    %v2126 = vpop.xlane.xlu0 %2125
    %v2127 = vsub.f32 %v2121, %v2126
    %v2128 = vmul.f32 %v2127, 1.442695
    %v2129 = vpow.pop %v2128
    %v2130 = vsel %vm601, %v2129, 0.0
    %2131 = vadd.xlane.f32.xlu0 %v2130
    %v2132 = vpop.xlane.xlu0 %2131
    %v2133 = vrcp.pop %v2132
    %v2134 = vmul.f32 %v2129, %v2133
    %v2135 = vpack.c.bf16 %v2134, %v2134
    %v2137 = vunpack.c.l.b16 %v2104
    %v2138 = vpack.c.b16 %v2137, %v2137
    %2139 = vrot.lane.b32.xlu0 %v2138, 96
    %v2140 = vpop.permute.xlu0 %2139
    %v2142 = vsel %vm601, %v2135, 0
    %v2145 = vsel %vm638, %v2140, 0
    %2147 = vmatpush.bf16.msra.mxu0 0
    %2148 = vmatpush.bf16.msra.mxu0 0
    %2149 = vmatpush.bf16.msra.mxu0 0
    %2150 = vmatpush.bf16.msra.mxu0 0
    %2151 = vmatpush.bf16.msra.mxu0 0
    %2152 = vmatpush.bf16.msra.mxu0 0
    %2153 = vmatpush.bf16.msra.mxu0 0
    %2154 = vmatpush.bf16.msra.mxu0 %v2145
    %2155 = vmatmul.bf16.gmra.mxu0 %v2142
    %v2156 = vpop.f32.mrf.mxu0
    %v2157 = vadd.f32 0.0, %v2156
    %v2158 = vpop.f32.mrf.mxu0
    %2159 = vdwg.mxu0
    %v2160 = vpack.c.bf16 %v2157, %v2157
    %v2162 = vunpack.c.l.b16 %v2103
    %v2163 = vpack.c.b16 %v2162, %v2162
    %2164 = vrot.lane.b32.xlu0 %v2163, 120
    %v2165 = vpop.permute.xlu0 %2164
    %2166 = vrot.lane.b32.xlu0 %v2138, 120
    %v2167 = vpop.permute.xlu0 %2166
    %v2169 = vsel %vm601, %v2165, 0
    %v2172 = vsel %vm601, %v2167, 0
    %2174 = vmatpush.bf16.xpose.msra.mxu0 0
    %2175 = vmatpush.bf16.xpose.msra.mxu0 0
    %2176 = vmatpush.bf16.xpose.msra.mxu0 0
    %2177 = vmatpush.bf16.xpose.msra.mxu0 0
    %2178 = vmatpush.bf16.xpose.msra.mxu0 0
    %2179 = vmatpush.bf16.xpose.msra.mxu0 0
    %2180 = vmatpush.bf16.xpose.msra.mxu0 0
    %2181 = vmatpush.bf16.xpose.msra.mxu0 %v2172
    %2182 = vmatmul.bf16.gmra.mxu0 %v2169
    %v2183 = vpop.f32.mrf.mxu0
    %v2184 = vadd.f32 0.0, %v2183
    %v2185 = vpop.f32.mrf.mxu0
    %2186 = vdwg.mxu0
    %v2187 = vsel %vm601, %v2184, -inf
    %2188 = vmax.xlane.f32.xlu0 %v2187
    %v2189 = vpop.xlane.xlu0 %2188
    %v2190 = vsub.f32 %v2184, %v2189
    %v2191 = vmul.f32 %v2190, 1.442695
    %v2192 = vpow.pop %v2191
    %v2193 = vsel %vm601, %v2192, 0.0
    %2194 = vadd.xlane.f32.xlu0 %v2193
    %v2195 = vpop.xlane.xlu0 %2194
    %v2196 = vrcp.pop %v2195
    %v2197 = vmul.f32 %v2192, %v2196
    %v2198 = vpack.c.bf16 %v2197, %v2197
    %2199 = vrot.lane.b32.xlu0 %v2138, 88
    %v2200 = vpop.permute.xlu0 %2199
    %v2202 = vsel %vm601, %v2198, 0
    %v2205 = vsel %vm638, %v2200, 0
    %2207 = vmatpush.bf16.msra.mxu0 0
    %2208 = vmatpush.bf16.msra.mxu0 0
    %2209 = vmatpush.bf16.msra.mxu0 0
    %2210 = vmatpush.bf16.msra.mxu0 0
    %2211 = vmatpush.bf16.msra.mxu0 0
    %2212 = vmatpush.bf16.msra.mxu0 0
    %2213 = vmatpush.bf16.msra.mxu0 0
    %2214 = vmatpush.bf16.msra.mxu0 %v2205
    %2215 = vmatmul.bf16.gmra.mxu0 %v2202
    %v2216 = vpop.f32.mrf.mxu0
    %v2217 = vadd.f32 0.0, %v2216
    %v2218 = vpop.f32.mrf.mxu0
    %2219 = vdwg.mxu0
    %v2220 = vpack.c.bf16 %v2217, %v2217
    %v2222 = vsel %vm601, %v2220, 0
    %v2225 = vsel %vm638, %v2099, 0
    %2227 = vmatpush.bf16.msra.mxu0 0
    %2228 = vmatpush.bf16.msra.mxu0 0
    %2229 = vmatpush.bf16.msra.mxu0 0
    %2230 = vmatpush.bf16.msra.mxu0 0
    %2231 = vmatpush.bf16.msra.mxu0 0
    %2232 = vmatpush.bf16.msra.mxu0 0
    %2233 = vmatpush.bf16.msra.mxu0 0
    %2234 = vmatpush.bf16.msra.mxu0 %v2225
    %2235 = vmatmul.bf16.gmra.mxu0 %v2222
    %v2236 = vpop.f32.mrf.mxu0
    %v2237 = vadd.f32 0.0, %v2236
    %v2238 = vpop.f32.mrf.mxu0
    %2239 = vdwg.mxu0
    %v2241 = vsel %vm601, %v2160, 0
    %v2244 = vsel %vm638, %v2098, 0
    %2246 = vmatpush.bf16.msra.mxu0 0
    %2247 = vmatpush.bf16.msra.mxu0 0
    %2248 = vmatpush.bf16.msra.mxu0 0
    %2249 = vmatpush.bf16.msra.mxu0 0
    %2250 = vmatpush.bf16.msra.mxu0 0
    %2251 = vmatpush.bf16.msra.mxu0 0
    %2252 = vmatpush.bf16.msra.mxu0 0
    %2253 = vmatpush.bf16.msra.mxu0 %v2244
    %2254 = vmatmul.bf16.gmra.mxu0 %v2241
    %v2255 = vpop.f32.mrf.mxu0
    %v2256 = vadd.f32 %v2237, %v2255
    %v2257 = vpop.f32.mrf.mxu0
    %2258 = vdwg.mxu0
    %2259 = vrot.lane.b32.xlu0 %v2163, 112
    %v2260 = vpop.permute.xlu0 %2259
    %2261 = vrot.lane.b32.xlu0 %v2138, 112
    %v2262 = vpop.permute.xlu0 %2261
    %v2264 = vsel %vm601, %v2260, 0
    %v2267 = vsel %vm601, %v2262, 0
    %2269 = vmatpush.bf16.xpose.msra.mxu0 0
    %2270 = vmatpush.bf16.xpose.msra.mxu0 0
    %2271 = vmatpush.bf16.xpose.msra.mxu0 0
    %2272 = vmatpush.bf16.xpose.msra.mxu0 0
    %2273 = vmatpush.bf16.xpose.msra.mxu0 0
    %2274 = vmatpush.bf16.xpose.msra.mxu0 0
    %2275 = vmatpush.bf16.xpose.msra.mxu0 0
    %2276 = vmatpush.bf16.xpose.msra.mxu0 %v2267
    %2277 = vmatmul.bf16.gmra.mxu0 %v2264
    %v2278 = vpop.f32.mrf.mxu0
    %v2279 = vadd.f32 0.0, %v2278
    %v2280 = vpop.f32.mrf.mxu0
    %2281 = vdwg.mxu0
    %v2282 = vsel %vm601, %v2279, -inf
    %2283 = vmax.xlane.f32.xlu0 %v2282
    %v2284 = vpop.xlane.xlu0 %2283
    %v2285 = vsub.f32 %v2279, %v2284
    %v2286 = vmul.f32 %v2285, 1.442695
    %v2287 = vpow.pop %v2286
    %v2288 = vsel %vm601, %v2287, 0.0
    %2289 = vadd.xlane.f32.xlu0 %v2288
    %v2290 = vpop.xlane.xlu0 %2289
    %v2291 = vrcp.pop %v2290
    %v2292 = vmul.f32 %v2287, %v2291
    %v2293 = vpack.c.bf16 %v2292, %v2292
    %2294 = vrot.lane.b32.xlu0 %v2138, 80
    %v2295 = vpop.permute.xlu0 %2294
    %v2297 = vsel %vm601, %v2293, 0
    %v2300 = vsel %vm638, %v2295, 0
    %2302 = vmatpush.bf16.msra.mxu0 0
    %2303 = vmatpush.bf16.msra.mxu0 0
    %2304 = vmatpush.bf16.msra.mxu0 0
    %2305 = vmatpush.bf16.msra.mxu0 0
    %2306 = vmatpush.bf16.msra.mxu0 0
    %2307 = vmatpush.bf16.msra.mxu0 0
    %2308 = vmatpush.bf16.msra.mxu0 0
    %2309 = vmatpush.bf16.msra.mxu0 %v2300
    %2310 = vmatmul.bf16.gmra.mxu0 %v2297
    %v2311 = vpop.f32.mrf.mxu0
    %v2312 = vadd.f32 0.0, %v2311
    %v2313 = vpop.f32.mrf.mxu0
    %2314 = vdwg.mxu0
    %v2315 = vpack.c.bf16 %v2312, %v2312
    %v2317 = vsel %vm601, %v2315, 0
    %v2320 = vsel %vm638, %v2100, 0
    %2322 = vmatpush.bf16.msra.mxu0 0
    %2323 = vmatpush.bf16.msra.mxu0 0
    %2324 = vmatpush.bf16.msra.mxu0 0
    %2325 = vmatpush.bf16.msra.mxu0 0
    %2326 = vmatpush.bf16.msra.mxu0 0
    %2327 = vmatpush.bf16.msra.mxu0 0
    %2328 = vmatpush.bf16.msra.mxu0 0
    %2329 = vmatpush.bf16.msra.mxu0 %v2320
    %2330 = vmatmul.bf16.gmra.mxu0 %v2317
    %v2331 = vpop.f32.mrf.mxu0
    %v2332 = vadd.f32 0.0, %v2331
    %v2333 = vpop.f32.mrf.mxu0
    %2334 = vdwg.mxu0
    %v2335 = vadd.f32 %v2256, %v2332
    %2336 = vrot.lane.b32.xlu0 %v2163, 104
    %v2337 = vpop.permute.xlu0 %2336
    %2338 = vrot.lane.b32.xlu0 %v2138, 104
    %v2339 = vpop.permute.xlu0 %2338
    %v2341 = vsel %vm601, %v2337, 0
    %v2344 = vsel %vm601, %v2339, 0
    %2346 = vmatpush.bf16.xpose.msra.mxu0 0
    %2347 = vmatpush.bf16.xpose.msra.mxu0 0
    %2348 = vmatpush.bf16.xpose.msra.mxu0 0
    %2349 = vmatpush.bf16.xpose.msra.mxu0 0
    %2350 = vmatpush.bf16.xpose.msra.mxu0 0
    %2351 = vmatpush.bf16.xpose.msra.mxu0 0
    %2352 = vmatpush.bf16.xpose.msra.mxu0 0
    %2353 = vmatpush.bf16.xpose.msra.mxu0 %v2344
    %2354 = vmatmul.bf16.gmra.mxu0 %v2341
    %v2355 = vpop.f32.mrf.mxu0
    %v2356 = vadd.f32 0.0, %v2355
    %v2357 = vpop.f32.mrf.mxu0
    %2358 = vdwg.mxu0
    %v2359 = vsel %vm601, %v2356, -inf
    %2360 = vmax.xlane.f32.xlu0 %v2359
    %v2361 = vpop.xlane.xlu0 %2360
    %v2362 = vsub.f32 %v2356, %v2361
    %v2363 = vmul.f32 %v2362, 1.442695
    %v2364 = vpow.pop %v2363
    %v2365 = vsel %vm601, %v2364, 0.0
    %2366 = vadd.xlane.f32.xlu0 %v2365
    %v2367 = vpop.xlane.xlu0 %2366
    %v2368 = vrcp.pop %v2367
    %v2369 = vmul.f32 %v2364, %v2368
    %v2370 = vpack.c.bf16 %v2369, %v2369
    %2371 = vrot.lane.b32.xlu0 %v2138, 72
    %v2372 = vpop.permute.xlu0 %2371
    %v2374 = vsel %vm601, %v2370, 0
    %v2377 = vsel %vm638, %v2372, 0
    %2379 = vmatpush.bf16.msra.mxu0 0
    %2380 = vmatpush.bf16.msra.mxu0 0
    %2381 = vmatpush.bf16.msra.mxu0 0
    %2382 = vmatpush.bf16.msra.mxu0 0
    %2383 = vmatpush.bf16.msra.mxu0 0
    %2384 = vmatpush.bf16.msra.mxu0 0
    %2385 = vmatpush.bf16.msra.mxu0 0
    %2386 = vmatpush.bf16.msra.mxu0 %v2377
    %2387 = vmatmul.bf16.gmra.mxu0 %v2374
    %v2388 = vpop.f32.mrf.mxu0
    %v2389 = vadd.f32 0.0, %v2388
    %v2390 = vpop.f32.mrf.mxu0
    %2391 = vdwg.mxu0
    %v2392 = vpack.c.bf16 %v2389, %v2389
    %v2394 = vsel %vm601, %v2392, 0
    %v2397 = vsel %vm638, %v2101, 0
    %2399 = vmatpush.bf16.msra.mxu0 0
    %2400 = vmatpush.bf16.msra.mxu0 0
    %2401 = vmatpush.bf16.msra.mxu0 0
    %2402 = vmatpush.bf16.msra.mxu0 0
    %2403 = vmatpush.bf16.msra.mxu0 0
    %2404 = vmatpush.bf16.msra.mxu0 0
    %2405 = vmatpush.bf16.msra.mxu0 0
    %2406 = vmatpush.bf16.msra.mxu0 %v2397
    %2407 = vmatmul.bf16.gmra.mxu0 %v2394
    %v2408 = vpop.f32.mrf.mxu0
    %v2409 = vadd.f32 0.0, %v2408
    %v2410 = vpop.f32.mrf.mxu0
    %2411 = vdwg.mxu0
    %v2412 = vadd.f32 %v2335, %v2409
    %v2414 = vperm.slane %v2102, 0
    %v2416 = vadd.f32 %v2412, %v2414
    %v2417 = vadd.f32 %v2023, %v2416
    %v2418 = vld [vmem:[#allocation17] sm:$0x1]
    %v2419 = vld [vmem:[#allocation16] sm:$0x1]
    %v2420 = vsel %vm578, %v2417, 0.0
    %2421 = vadd.xlane.f32.xlu0 %v2420
    %v2422 = vpop.xlane.xlu0 %2421
    %v2423 = vmul.f32 %v2422, %v921
    %v2424 = vmul.f32 %v2417, %v2417
    %v2425 = vsel %vm578, %v2424, 0.0
    %2426 = vadd.xlane.f32.xlu0 %v2425
    %v2427 = vpop.xlane.xlu0 %2426
    %v2428 = vmul.f32 %v2427, %v921
    %v2429 = vmul.f32 %v2423, %v2423
    %v2430 = vsub.f32 %v2428, %v2429
    %v2431 = vsub.f32 %v2417, %v2423
    %v2432 = vadd.f32 %v2430, 1e-05
    %v2433 = vrsqrt.pop %v2432
    %v2434 = vmul.f32 %v2433, %v2432
    %v2435 = vmul.f32 %v2434, %v2433
    %v2436 = vmul.f32 0.5, %v2435
    %v2437 = vsub.f32 1.5, %v2436
    %v2438 = vmul.f32 %v2433, %v2437
    %vm2439 = vweird.f32 %v2432
    %vm2440 = vweird.f32 %v2433
    %vm2441 = vmor %vm2439, %vm2440
    %v2442 = vsel %vm2441, %v2433, %v2438
    %v2443 = vmul.f32 %v2431, %v2442
    %v2445 = vperm.slane %v2418, 0
    %v2447 = vmul.f32 %v2443, %v2445
    %v2449 = vperm.slane %v2419, 0
    %v2451 = vadd.f32 %v2447, %v2449
    %v2452 = vld [vmem:[#allocation25] sm:$0xf]
    %v2453 = vld [vmem:[#allocation25 + $0x4] sm:$0xf]
    %v2454 = vld [vmem:[#allocation25 + $0x8] sm:$0xf]
    %v2455 = vld [vmem:[#allocation25 + $0xc] sm:$0xf]
    %v2456 = vld [vmem:[#allocation5] sm:$0x1]
    %v2457 = vld [vmem:[%s41] sm:$0xf]
    %v2458 = vld [vmem:[%s41 + $0x4] sm:$0xf]
    %v2459 = vld [vmem:[%s41 + $0x8] sm:$0xf]
    %v2460 = vld [vmem:[%s41 + $0xc] sm:$0xf]
    %v2461 = vld [vmem:[%s41 + $0x10] sm:$0xf]
    %v2462 = vld [vmem:[%s41 + $0x14] sm:$0xf]
    %v2463 = vld [vmem:[%s41 + $0x18] sm:$0xf]
    %v2464 = vld [vmem:[%s41 + $0x1c] sm:$0xf]
    %v2465 = vld [vmem:[#allocation7] sm:$0x1]
    %v2466 = vpack.c.bf16 %v2451, %v2451
    %v2468 = vperm.slane %v2456, 0
    %v2474 = vunpack.c.l.b16 %v2452
    %v2475 = vunpack.c.l.b16 %v2453
    %v2476 = vunpack.c.l.b16 %v2454
    %v2477 = vunpack.c.l.b16 %v2455
    %v2478 = vpack.c.b16 %v2475, %v2474
    %v2479 = vpack.c.b16 %v2477, %v2476
    %v2483 = vsel %vm578, %v2466, 0
    %2485 = vmatpush.bf16.msra.mxu0 0
    %2486 = vmatpush.bf16.msra.mxu0 0
    %2487 = vmatpush.bf16.msra.mxu0 0
    %2488 = vmatpush.bf16.msra.mxu0 0
    %2489 = vmatpush.bf16.msra.mxu0 0
    %2490 = vmatpush.bf16.msra.mxu0 0
    %2491 = vmatpush.bf16.msra.mxu0 %v2479
    %2492 = vmatpush.bf16.msra.mxu0 %v2478
    %2493 = vmatmul.bf16.gmra.mxu0 %v2483
    %v2494 = vpop.f32.mrf.mxu0
    %v2495 = vadd.f32 %v2468, %v2494
    %v2496 = vpop.f32.mrf.mxu0
    %2497 = vdwg.mxu0
    %v2498 = vmax.f32 %v2495, 0.0
    %v2499 = vpack.c.bf16 %v2498, %v2498
    %v2501 = vperm.slane %v2465, 0
    %v2511 = vunpack.c.l.b16 %v2457
    %v2512 = vunpack.c.l.b16 %v2458
    %v2513 = vunpack.c.l.b16 %v2459
    %v2514 = vunpack.c.l.b16 %v2460
    %v2515 = vunpack.c.l.b16 %v2461
    %v2516 = vunpack.c.l.b16 %v2462
    %v2517 = vunpack.c.l.b16 %v2463
    %v2518 = vunpack.c.l.b16 %v2464
    %v2519 = vpack.c.b16 %v2512, %v2511
    %v2520 = vpack.c.b16 %v2514, %v2513
    %v2521 = vpack.c.b16 %v2516, %v2515
    %v2522 = vpack.c.b16 %v2518, %v2517
    %v2528 = vsel %vm1026, %v2499, 0
    %2530 = vmatpush.bf16.msra.mxu0 0
    %2531 = vmatpush.bf16.msra.mxu0 0
    %2532 = vmatpush.bf16.msra.mxu0 0
    %2533 = vmatpush.bf16.msra.mxu0 0
    %2534 = vmatpush.bf16.msra.mxu0 %v2522
    %2535 = vmatpush.bf16.msra.mxu0 %v2521
    %2536 = vmatpush.bf16.msra.mxu0 %v2520
    %2537 = vmatpush.bf16.msra.mxu0 %v2519
    %2538 = vmatmul.bf16.gmra.mxu0 %v2528
    %v2539 = vpop.f32.mrf.mxu0
    %v2540 = vadd.f32 %v2501, %v2539
    %v2541 = vpop.f32.mrf.mxu0
    %2542 = vdwg.mxu0
    %v2543 = vadd.f32 %v2451, %v2540
    %v2544 = vld [vmem:[#allocation20] sm:$0x1]
    %v2545 = vld [vmem:[#allocation19] sm:$0x1]
    %v2546 = vsel %vm578, %v2543, 0.0
    %2547 = vadd.xlane.f32.xlu0 %v2546
    %v2548 = vpop.xlane.xlu0 %2547
    %v2549 = vmul.f32 %v2548, %v921
    %v2550 = vmul.f32 %v2543, %v2543
    %v2551 = vsel %vm578, %v2550, 0.0
    %2552 = vadd.xlane.f32.xlu0 %v2551
    %v2553 = vpop.xlane.xlu0 %2552
    %v2554 = vmul.f32 %v2553, %v921
    %v2555 = vmul.f32 %v2549, %v2549
    %v2556 = vsub.f32 %v2554, %v2555
    %v2557 = vsub.f32 %v2543, %v2549
    %v2558 = vadd.f32 %v2556, 1e-05
    %v2559 = vrsqrt.pop %v2558
    %v2560 = vmul.f32 %v2559, %v2558
    %v2561 = vmul.f32 %v2560, %v2559
    %v2562 = vmul.f32 0.5, %v2561
    %v2563 = vsub.f32 1.5, %v2562
    %v2564 = vmul.f32 %v2559, %v2563
    %vm2565 = vweird.f32 %v2558
    %vm2566 = vweird.f32 %v2559
    %vm2567 = vmor %vm2565, %vm2566
    %v2568 = vsel %vm2567, %v2559, %v2564
    %v2569 = vmul.f32 %v2557, %v2568
    %v2571 = vperm.slane %v2544, 0
    %v2573 = vmul.f32 %v2569, %v2571
    %v2575 = vperm.slane %v2545, 0
    %v2577 = vadd.f32 %v2573, %v2575
    %s2578 = scalar_lea.vmem %s37, 16
    %v2579 = vld [vmem:[%s2578] sm:$0xf]
    %v2580 = vld [vmem:[%s2578 + $0x4] sm:$0xf]
    %v2581 = vld [vmem:[%s2578 + $0x8] sm:$0xf]
    %v2582 = vld [vmem:[%s2578 + $0xc] sm:$0xf]
    %s2583 = scalar_lea.vmem [#allocation23], 1
    %v2584 = vld [vmem:[%s2583] sm:$0x1]
    %s2585 = scalar_lea.vmem %s33, 16
    %v2586 = vld [vmem:[%s2585] sm:$0xf]
    %v2587 = vld [vmem:[%s2585 + $0x4] sm:$0xf]
    %v2588 = vld [vmem:[%s2585 + $0x8] sm:$0xf]
    %v2589 = vld [vmem:[%s2585 + $0xc] sm:$0xf]
    %s2590 = scalar_lea.vmem [#allocation22], 1
    %v2591 = vld [vmem:[%s2590] sm:$0x1]
    %v2592 = vpack.c.bf16 %v2577, %v2577
    %v2594 = vperm.slane %v2584, 0
    %v2600 = vunpack.c.l.b16 %v2579
    %v2601 = vunpack.c.l.b16 %v2580
    %v2602 = vunpack.c.l.b16 %v2581
    %v2603 = vunpack.c.l.b16 %v2582
    %v2604 = vpack.c.b16 %v2601, %v2600
    %v2605 = vpack.c.b16 %v2603, %v2602
    %v2609 = vsel %vm578, %v2592, 0
    %2611 = vmatpush.bf16.msra.mxu0 0
    %2612 = vmatpush.bf16.msra.mxu0 0
    %2613 = vmatpush.bf16.msra.mxu0 0
    %2614 = vmatpush.bf16.msra.mxu0 0
    %2615 = vmatpush.bf16.msra.mxu0 0
    %2616 = vmatpush.bf16.msra.mxu0 0
    %2617 = vmatpush.bf16.msra.mxu0 %v2605
    %2618 = vmatpush.bf16.msra.mxu0 %v2604
    %2619 = vmatmul.bf16.gmra.mxu0 %v2609
    %v2620 = vpop.f32.mrf.mxu0
    %v2621 = vadd.f32 %v2594, %v2620
    %v2622 = vpop.f32.mrf.mxu0
    %2623 = vdwg.mxu0
    %v2624 = vpack.c.bf16 %v2621, %v2621
    %v2626 = vunpack.c.l.b16 %v2624
    %v2627 = vpack.c.b16 %v2626, %v2626
    %2628 = vrot.lane.b32.xlu0 %v2627, 96
    %v2629 = vpop.permute.xlu0 %2628
    %v2631 = vsel %vm601, %v2624, 0
    %v2634 = vsel %vm601, %v2629, 0
    %2636 = vmatpush.bf16.xpose.msra.mxu0 0
    %2637 = vmatpush.bf16.xpose.msra.mxu0 0
    %2638 = vmatpush.bf16.xpose.msra.mxu0 0
    %2639 = vmatpush.bf16.xpose.msra.mxu0 0
    %2640 = vmatpush.bf16.xpose.msra.mxu0 0
    %2641 = vmatpush.bf16.xpose.msra.mxu0 0
    %2642 = vmatpush.bf16.xpose.msra.mxu0 0
    %2643 = vmatpush.bf16.xpose.msra.mxu0 %v2634
    %2644 = vmatmul.bf16.gmra.mxu0 %v2631
    %v2645 = vpop.f32.mrf.mxu0
    %v2646 = vadd.f32 0.0, %v2645
    %v2647 = vpop.f32.mrf.mxu0
    %2648 = vdwg.mxu0
    %v2649 = vsel %vm601, %v2646, -inf
    %2650 = vmax.xlane.f32.xlu0 %v2649
    %v2651 = vpop.xlane.xlu0 %2650
    %v2652 = vsub.f32 %v2646, %v2651
    %v2653 = vmul.f32 %v2652, 1.442695
    %v2654 = vpow.pop %v2653
    %v2655 = vsel %vm601, %v2654, 0.0
    %2656 = vadd.xlane.f32.xlu0 %v2655
    %v2657 = vpop.xlane.xlu0 %2656
    %v2658 = vrcp.pop %v2657
    %v2659 = vmul.f32 %v2654, %v2658
    %v2660 = vpack.c.bf16 %v2659, %v2659
    %2661 = vrot.lane.b32.xlu0 %v2627, 64
    %v2662 = vpop.permute.xlu0 %2661
    %v2664 = vsel %vm601, %v2660, 0
    %v2667 = vsel %vm638, %v2662, 0
    %2669 = vmatpush.bf16.msra.mxu0 0
    %2670 = vmatpush.bf16.msra.mxu0 0
    %2671 = vmatpush.bf16.msra.mxu0 0
    %2672 = vmatpush.bf16.msra.mxu0 0
    %2673 = vmatpush.bf16.msra.mxu0 0
    %2674 = vmatpush.bf16.msra.mxu0 0
    %2675 = vmatpush.bf16.msra.mxu0 0
    %2676 = vmatpush.bf16.msra.mxu0 %v2667
    %2677 = vmatmul.bf16.gmra.mxu0 %v2664
    %v2678 = vpop.f32.mrf.mxu0
    %v2679 = vadd.f32 0.0, %v2678
    %v2680 = vpop.f32.mrf.mxu0
    %2681 = vdwg.mxu0
    %v2682 = vpack.c.bf16 %v2679, %v2679
    %2683 = vrot.lane.b32.xlu0 %v2627, 120
    %v2684 = vpop.permute.xlu0 %2683
    %2685 = vrot.lane.b32.xlu0 %v2627, 88
    %v2686 = vpop.permute.xlu0 %2685
    %v2688 = vsel %vm601, %v2684, 0
    %v2691 = vsel %vm601, %v2686, 0
    %2693 = vmatpush.bf16.xpose.msra.mxu0 0
    %2694 = vmatpush.bf16.xpose.msra.mxu0 0
    %2695 = vmatpush.bf16.xpose.msra.mxu0 0
    %2696 = vmatpush.bf16.xpose.msra.mxu0 0
    %2697 = vmatpush.bf16.xpose.msra.mxu0 0
    %2698 = vmatpush.bf16.xpose.msra.mxu0 0
    %2699 = vmatpush.bf16.xpose.msra.mxu0 0
    %2700 = vmatpush.bf16.xpose.msra.mxu0 %v2691
    %2701 = vmatmul.bf16.gmra.mxu0 %v2688
    %v2702 = vpop.f32.mrf.mxu0
    %v2703 = vadd.f32 0.0, %v2702
    %v2704 = vpop.f32.mrf.mxu0
    %2705 = vdwg.mxu0
    %v2706 = vsel %vm601, %v2703, -inf
    %2707 = vmax.xlane.f32.xlu0 %v2706
    %v2708 = vpop.xlane.xlu0 %2707
    %v2709 = vsub.f32 %v2703, %v2708
    %v2710 = vmul.f32 %v2709, 1.442695
    %v2711 = vpow.pop %v2710
    %v2712 = vsel %vm601, %v2711, 0.0
    %2713 = vadd.xlane.f32.xlu0 %v2712
    %v2714 = vpop.xlane.xlu0 %2713
    %v2715 = vrcp.pop %v2714
    %v2716 = vmul.f32 %v2711, %v2715
    %v2717 = vpack.c.bf16 %v2716, %v2716
    %2718 = vrot.lane.b32.xlu0 %v2627, 56
    %v2719 = vpop.permute.xlu0 %2718
    %v2721 = vsel %vm601, %v2717, 0
    %v2724 = vsel %vm638, %v2719, 0
    %2726 = vmatpush.bf16.msra.mxu0 0
    %2727 = vmatpush.bf16.msra.mxu0 0
    %2728 = vmatpush.bf16.msra.mxu0 0
    %2729 = vmatpush.bf16.msra.mxu0 0
    %2730 = vmatpush.bf16.msra.mxu0 0
    %2731 = vmatpush.bf16.msra.mxu0 0
    %2732 = vmatpush.bf16.msra.mxu0 0
    %2733 = vmatpush.bf16.msra.mxu0 %v2724
    %2734 = vmatmul.bf16.gmra.mxu0 %v2721
    %v2735 = vpop.f32.mrf.mxu0
    %v2736 = vadd.f32 0.0, %v2735
    %v2737 = vpop.f32.mrf.mxu0
    %2738 = vdwg.mxu0
    %v2739 = vpack.c.bf16 %v2736, %v2736
    %v2741 = vsel %vm601, %v2739, 0
    %v2744 = vsel %vm638, %v2587, 0
    %2746 = vmatpush.bf16.msra.mxu0 0
    %2747 = vmatpush.bf16.msra.mxu0 0
    %2748 = vmatpush.bf16.msra.mxu0 0
    %2749 = vmatpush.bf16.msra.mxu0 0
    %2750 = vmatpush.bf16.msra.mxu0 0
    %2751 = vmatpush.bf16.msra.mxu0 0
    %2752 = vmatpush.bf16.msra.mxu0 0
    %2753 = vmatpush.bf16.msra.mxu0 %v2744
    %2754 = vmatmul.bf16.gmra.mxu0 %v2741
    %v2755 = vpop.f32.mrf.mxu0
    %v2756 = vadd.f32 0.0, %v2755
    %v2757 = vpop.f32.mrf.mxu0
    %2758 = vdwg.mxu0
    %v2760 = vsel %vm601, %v2682, 0
    %v2763 = vsel %vm638, %v2586, 0
    %2765 = vmatpush.bf16.msra.mxu0 0
    %2766 = vmatpush.bf16.msra.mxu0 0
    %2767 = vmatpush.bf16.msra.mxu0 0
    %2768 = vmatpush.bf16.msra.mxu0 0
    %2769 = vmatpush.bf16.msra.mxu0 0
    %2770 = vmatpush.bf16.msra.mxu0 0
    %2771 = vmatpush.bf16.msra.mxu0 0
    %2772 = vmatpush.bf16.msra.mxu0 %v2763
    %2773 = vmatmul.bf16.gmra.mxu0 %v2760
    %v2774 = vpop.f32.mrf.mxu0
    %v2775 = vadd.f32 %v2756, %v2774
    %v2776 = vpop.f32.mrf.mxu0
    %2777 = vdwg.mxu0
    %2778 = vrot.lane.b32.xlu0 %v2627, 112
    %v2779 = vpop.permute.xlu0 %2778
    %2780 = vrot.lane.b32.xlu0 %v2627, 80
    %v2781 = vpop.permute.xlu0 %2780
    %v2783 = vsel %vm601, %v2779, 0
    %v2786 = vsel %vm601, %v2781, 0
    %2788 = vmatpush.bf16.xpose.msra.mxu0 0
    %2789 = vmatpush.bf16.xpose.msra.mxu0 0
    %2790 = vmatpush.bf16.xpose.msra.mxu0 0
    %2791 = vmatpush.bf16.xpose.msra.mxu0 0
    %2792 = vmatpush.bf16.xpose.msra.mxu0 0
    %2793 = vmatpush.bf16.xpose.msra.mxu0 0
    %2794 = vmatpush.bf16.xpose.msra.mxu0 0
    %2795 = vmatpush.bf16.xpose.msra.mxu0 %v2786
    %2796 = vmatmul.bf16.gmra.mxu0 %v2783
    %v2797 = vpop.f32.mrf.mxu0
    %v2798 = vadd.f32 0.0, %v2797
    %v2799 = vpop.f32.mrf.mxu0
    %2800 = vdwg.mxu0
    %v2801 = vsel %vm601, %v2798, -inf
    %2802 = vmax.xlane.f32.xlu0 %v2801
    %v2803 = vpop.xlane.xlu0 %2802
    %v2804 = vsub.f32 %v2798, %v2803
    %v2805 = vmul.f32 %v2804, 1.442695
    %v2806 = vpow.pop %v2805
    %v2807 = vsel %vm601, %v2806, 0.0
    %2808 = vadd.xlane.f32.xlu0 %v2807
    %v2809 = vpop.xlane.xlu0 %2808
    %v2810 = vrcp.pop %v2809
    %v2811 = vmul.f32 %v2806, %v2810
    %v2812 = vpack.c.bf16 %v2811, %v2811
    %2813 = vrot.lane.b32.xlu0 %v2627, 48
    %v2814 = vpop.permute.xlu0 %2813
    %v2816 = vsel %vm601, %v2812, 0
    %v2819 = vsel %vm638, %v2814, 0
    %2821 = vmatpush.bf16.msra.mxu0 0
    %2822 = vmatpush.bf16.msra.mxu0 0
    %2823 = vmatpush.bf16.msra.mxu0 0
    %2824 = vmatpush.bf16.msra.mxu0 0
    %2825 = vmatpush.bf16.msra.mxu0 0
    %2826 = vmatpush.bf16.msra.mxu0 0
    %2827 = vmatpush.bf16.msra.mxu0 0
    %2828 = vmatpush.bf16.msra.mxu0 %v2819
    %2829 = vmatmul.bf16.gmra.mxu0 %v2816
    %v2830 = vpop.f32.mrf.mxu0
    %v2831 = vadd.f32 0.0, %v2830
    %v2832 = vpop.f32.mrf.mxu0
    %2833 = vdwg.mxu0
    %v2834 = vpack.c.bf16 %v2831, %v2831
    %v2836 = vsel %vm601, %v2834, 0
    %v2839 = vsel %vm638, %v2588, 0
    %2841 = vmatpush.bf16.msra.mxu0 0
    %2842 = vmatpush.bf16.msra.mxu0 0
    %2843 = vmatpush.bf16.msra.mxu0 0
    %2844 = vmatpush.bf16.msra.mxu0 0
    %2845 = vmatpush.bf16.msra.mxu0 0
    %2846 = vmatpush.bf16.msra.mxu0 0
    %2847 = vmatpush.bf16.msra.mxu0 0
    %2848 = vmatpush.bf16.msra.mxu0 %v2839
    %2849 = vmatmul.bf16.gmra.mxu0 %v2836
    %v2850 = vpop.f32.mrf.mxu0
    %v2851 = vadd.f32 0.0, %v2850
    %v2852 = vpop.f32.mrf.mxu0
    %2853 = vdwg.mxu0
    %v2854 = vadd.f32 %v2775, %v2851
    %2855 = vrot.lane.b32.xlu0 %v2627, 104
    %v2856 = vpop.permute.xlu0 %2855
    %2857 = vrot.lane.b32.xlu0 %v2627, 72
    %v2858 = vpop.permute.xlu0 %2857
    %v2860 = vsel %vm601, %v2856, 0
    %v2863 = vsel %vm601, %v2858, 0
    %2865 = vmatpush.bf16.xpose.msra.mxu0 0
    %2866 = vmatpush.bf16.xpose.msra.mxu0 0
    %2867 = vmatpush.bf16.xpose.msra.mxu0 0
    %2868 = vmatpush.bf16.xpose.msra.mxu0 0
    %2869 = vmatpush.bf16.xpose.msra.mxu0 0
    %2870 = vmatpush.bf16.xpose.msra.mxu0 0
    %2871 = vmatpush.bf16.xpose.msra.mxu0 0
    %2872 = vmatpush.bf16.xpose.msra.mxu0 %v2863
    %2873 = vmatmul.bf16.gmra.mxu0 %v2860
    %v2874 = vpop.f32.mrf.mxu0
    %v2875 = vadd.f32 0.0, %v2874
    %v2876 = vpop.f32.mrf.mxu0
    %2877 = vdwg.mxu0
    %v2878 = vsel %vm601, %v2875, -inf
    %2879 = vmax.xlane.f32.xlu0 %v2878
    %v2880 = vpop.xlane.xlu0 %2879
    %v2881 = vsub.f32 %v2875, %v2880
    %v2882 = vmul.f32 %v2881, 1.442695
    %v2883 = vpow.pop %v2882
    %v2884 = vsel %vm601, %v2883, 0.0
    %2885 = vadd.xlane.f32.xlu0 %v2884
    %v2886 = vpop.xlane.xlu0 %2885
    %v2887 = vrcp.pop %v2886
    %v2888 = vmul.f32 %v2883, %v2887
    %v2889 = vpack.c.bf16 %v2888, %v2888
    %2890 = vrot.lane.b32.xlu0 %v2627, 40
    %v2891 = vpop.permute.xlu0 %2890
    %v2893 = vsel %vm601, %v2889, 0
    %v2896 = vsel %vm638, %v2891, 0
    %2898 = vmatpush.bf16.msra.mxu0 0
    %2899 = vmatpush.bf16.msra.mxu0 0
    %2900 = vmatpush.bf16.msra.mxu0 0
    %2901 = vmatpush.bf16.msra.mxu0 0
    %2902 = vmatpush.bf16.msra.mxu0 0
    %2903 = vmatpush.bf16.msra.mxu0 0
    %2904 = vmatpush.bf16.msra.mxu0 0
    %2905 = vmatpush.bf16.msra.mxu0 %v2896
    %2906 = vmatmul.bf16.gmra.mxu0 %v2893
    %v2907 = vpop.f32.mrf.mxu0
    %v2908 = vadd.f32 0.0, %v2907
    %v2909 = vpop.f32.mrf.mxu0
    %2910 = vdwg.mxu0
    %v2911 = vpack.c.bf16 %v2908, %v2908
    %v2913 = vsel %vm601, %v2911, 0
    %v2916 = vsel %vm638, %v2589, 0
    %2918 = vmatpush.bf16.msra.mxu0 0
    %2919 = vmatpush.bf16.msra.mxu0 0
    %2920 = vmatpush.bf16.msra.mxu0 0
    %2921 = vmatpush.bf16.msra.mxu0 0
    %2922 = vmatpush.bf16.msra.mxu0 0
    %2923 = vmatpush.bf16.msra.mxu0 0
    %2924 = vmatpush.bf16.msra.mxu0 0
    %2925 = vmatpush.bf16.msra.mxu0 %v2916
    %2926 = vmatmul.bf16.gmra.mxu0 %v2913
    %v2927 = vpop.f32.mrf.mxu0
    %v2928 = vadd.f32 0.0, %v2927
    %v2929 = vpop.f32.mrf.mxu0
    %2930 = vdwg.mxu0
    %v2931 = vadd.f32 %v2854, %v2928
    %v2933 = vperm.slane %v2591, 0
    %v2935 = vadd.f32 %v2931, %v2933
    %v2936 = vadd.f32 %v2577, %v2935
    %s2937 = scalar_lea.vmem [#allocation14], 1
    %v2938 = vld [vmem:[%s2937] sm:$0x1]
    %s2939 = scalar_lea.vmem [#allocation13], 1
    %v2940 = vld [vmem:[%s2939] sm:$0x1]
    %v2941 = vsel %vm578, %v2936, 0.0
    %2942 = vadd.xlane.f32.xlu0 %v2941
    %v2943 = vpop.xlane.xlu0 %2942
    %v2944 = vmul.f32 %v2943, %v921
    %v2945 = vmul.f32 %v2936, %v2936
    %v2946 = vsel %vm578, %v2945, 0.0
    %2947 = vadd.xlane.f32.xlu0 %v2946
    %v2948 = vpop.xlane.xlu0 %2947
    %v2949 = vmul.f32 %v2948, %v921
    %v2950 = vmul.f32 %v2944, %v2944
    %v2951 = vsub.f32 %v2949, %v2950
    %v2952 = vsub.f32 %v2936, %v2944
    %v2953 = vadd.f32 %v2951, 1e-05
    %v2954 = vrsqrt.pop %v2953
    %v2955 = vmul.f32 %v2954, %v2953
    %v2956 = vmul.f32 %v2955, %v2954
    %v2957 = vmul.f32 0.5, %v2956
    %v2958 = vsub.f32 1.5, %v2957
    %v2959 = vmul.f32 %v2954, %v2958
    %vm2960 = vweird.f32 %v2953
    %vm2961 = vweird.f32 %v2954
    %vm2962 = vmor %vm2960, %vm2961
    %v2963 = vsel %vm2962, %v2954, %v2959
    %v2964 = vmul.f32 %v2952, %v2963
    %v2966 = vperm.slane %v2938, 0
    %v2968 = vmul.f32 %v2964, %v2966
    %v2970 = vperm.slane %v2940, 0
    %v2972 = vadd.f32 %v2968, %v2970
    %s2973 = scalar_lea.vmem %s17, 16
    %v2974 = vld [vmem:[%s2973] sm:$0xf]
    %v2975 = vld [vmem:[%s2973 + $0x4] sm:$0xf]
    %v2976 = vld [vmem:[%s2973 + $0x8] sm:$0xf]
    %v2977 = vld [vmem:[%s2973 + $0xc] sm:$0xf]
    %s2978 = scalar_lea.vmem [#allocation11], 1
    %v2979 = vld [vmem:[%s2978] sm:$0x1]
    %v2980 = vpack.c.bf16 %v2972, %v2972
    %v2982 = vperm.slane %v2979, 0
    %v2988 = vunpack.c.l.b16 %v2974
    %v2989 = vunpack.c.l.b16 %v2975
    %v2990 = vunpack.c.l.b16 %v2976
    %v2991 = vunpack.c.l.b16 %v2977
    %v2992 = vpack.c.b16 %v2989, %v2988
    %v2993 = vpack.c.b16 %v2991, %v2990
    %v2997 = vsel %vm578, %v2980, 0
    %2999 = vmatpush.bf16.msra.mxu0 0
    %3000 = vmatpush.bf16.msra.mxu0 0
    %3001 = vmatpush.bf16.msra.mxu0 0
    %3002 = vmatpush.bf16.msra.mxu0 0
    %3003 = vmatpush.bf16.msra.mxu0 0
    %3004 = vmatpush.bf16.msra.mxu0 0
    %3005 = vmatpush.bf16.msra.mxu0 %v2993
    %3006 = vmatpush.bf16.msra.mxu0 %v2992
    %3007 = vmatmul.bf16.gmra.mxu0 %v2997
    %v3008 = vpop.f32.mrf.mxu0
    %v3009 = vadd.f32 %v2982, %v3008
    %v3010 = vpop.f32.mrf.mxu0
    %3011 = vdwg.mxu0
    %s3012 = scalar_lea.vmem %s9, 16
    %v3013 = vld [vmem:[%s3012] sm:$0xf]
    %v3014 = vld [vmem:[%s3012 + $0x4] sm:$0xf]
    %v3015 = vld [vmem:[%s3012 + $0x8] sm:$0xf]
    %v3016 = vld [vmem:[%s3012 + $0xc] sm:$0xf]
    %s3017 = scalar_lea.vmem [#allocation8], 1
    %v3018 = vld [vmem:[%s3017] sm:$0x1]
    %v3020 = vperm.slane %v3018, 0
    %v3026 = vunpack.c.l.b16 %v3013
    %v3027 = vunpack.c.l.b16 %v3014
    %v3028 = vunpack.c.l.b16 %v3015
    %v3029 = vunpack.c.l.b16 %v3016
    %v3030 = vpack.c.b16 %v3027, %v3026
    %v3031 = vpack.c.b16 %v3029, %v3028
    %3034 = vmatpush.bf16.msra.mxu0 0
    %3035 = vmatpush.bf16.msra.mxu0 0
    %3036 = vmatpush.bf16.msra.mxu0 0
    %3037 = vmatpush.bf16.msra.mxu0 0
    %3038 = vmatpush.bf16.msra.mxu0 0
    %3039 = vmatpush.bf16.msra.mxu0 0
    %3040 = vmatpush.bf16.msra.mxu0 %v3031
    %3041 = vmatpush.bf16.msra.mxu0 %v3030
    %3042 = vmatmul.bf16.gmra.mxu0 %v2083
    %v3043 = vpop.f32.mrf.mxu0
    %v3044 = vadd.f32 %v3020, %v3043
    %v3045 = vpop.f32.mrf.mxu0
    %3046 = vdwg.mxu0
    %s3047 = scalar_lea.vmem %s13, 16
    %v3048 = vld [vmem:[%s3047] sm:$0xf]
    %v3049 = vld [vmem:[%s3047 + $0x4] sm:$0xf]
    %v3050 = vld [vmem:[%s3047 + $0x8] sm:$0xf]
    %v3051 = vld [vmem:[%s3047 + $0xc] sm:$0xf]
    %s3052 = scalar_lea.vmem [#allocation10], 1
    %v3053 = vld [vmem:[%s3052] sm:$0x1]
    %v3054 = vpack.c.bf16 %v3009, %v3009
    %v3055 = vpack.c.bf16 %v3044, %v3044
    %v3057 = vsel %vm601, %v3054, 0
    %v3060 = vsel %vm601, %v3055, 0
    %3062 = vmatpush.bf16.xpose.msra.mxu0 0
    %3063 = vmatpush.bf16.xpose.msra.mxu0 0
    %3064 = vmatpush.bf16.xpose.msra.mxu0 0
    %3065 = vmatpush.bf16.xpose.msra.mxu0 0
    %3066 = vmatpush.bf16.xpose.msra.mxu0 0
    %3067 = vmatpush.bf16.xpose.msra.mxu0 0
    %3068 = vmatpush.bf16.xpose.msra.mxu0 0
    %3069 = vmatpush.bf16.xpose.msra.mxu0 %v3060
    %3070 = vmatmul.bf16.gmra.mxu0 %v3057
    %v3071 = vpop.f32.mrf.mxu0
    %v3072 = vadd.f32 0.0, %v3071
    %v3073 = vpop.f32.mrf.mxu0
    %3074 = vdwg.mxu0
    %v3075 = vsel %vm601, %v3072, -inf
    %3076 = vmax.xlane.f32.xlu0 %v3075
    %v3077 = vpop.xlane.xlu0 %3076
    %v3078 = vsub.f32 %v3072, %v3077
    %v3079 = vmul.f32 %v3078, 1.442695
    %v3080 = vpow.pop %v3079
    %v3081 = vsel %vm601, %v3080, 0.0
    %3082 = vadd.xlane.f32.xlu0 %v3081
    %v3083 = vpop.xlane.xlu0 %3082
    %v3084 = vrcp.pop %v3083
    %v3085 = vmul.f32 %v3080, %v3084
    %v3086 = vpack.c.bf16 %v3085, %v3085
    %v3088 = vunpack.c.l.b16 %v3055
    %v3089 = vpack.c.b16 %v3088, %v3088
    %3090 = vrot.lane.b32.xlu0 %v3089, 96
    %v3091 = vpop.permute.xlu0 %3090
    %v3093 = vsel %vm601, %v3086, 0
    %v3096 = vsel %vm638, %v3091, 0
    %3098 = vmatpush.bf16.msra.mxu0 0
    %3099 = vmatpush.bf16.msra.mxu0 0
    %3100 = vmatpush.bf16.msra.mxu0 0
    %3101 = vmatpush.bf16.msra.mxu0 0
    %3102 = vmatpush.bf16.msra.mxu0 0
    %3103 = vmatpush.bf16.msra.mxu0 0
    %3104 = vmatpush.bf16.msra.mxu0 0
    %3105 = vmatpush.bf16.msra.mxu0 %v3096
    %3106 = vmatmul.bf16.gmra.mxu0 %v3093
    %v3107 = vpop.f32.mrf.mxu0
    %v3108 = vadd.f32 0.0, %v3107
    %v3109 = vpop.f32.mrf.mxu0
    %3110 = vdwg.mxu0
    %v3111 = vpack.c.bf16 %v3108, %v3108
    %v3113 = vunpack.c.l.b16 %v3054
    %v3114 = vpack.c.b16 %v3113, %v3113
    %3115 = vrot.lane.b32.xlu0 %v3114, 120
    %v3116 = vpop.permute.xlu0 %3115
    %3117 = vrot.lane.b32.xlu0 %v3089, 120
    %v3118 = vpop.permute.xlu0 %3117
    %v3120 = vsel %vm601, %v3116, 0
    %v3123 = vsel %vm601, %v3118, 0
    %3125 = vmatpush.bf16.xpose.msra.mxu0 0
    %3126 = vmatpush.bf16.xpose.msra.mxu0 0
    %3127 = vmatpush.bf16.xpose.msra.mxu0 0
    %3128 = vmatpush.bf16.xpose.msra.mxu0 0
    %3129 = vmatpush.bf16.xpose.msra.mxu0 0
    %3130 = vmatpush.bf16.xpose.msra.mxu0 0
    %3131 = vmatpush.bf16.xpose.msra.mxu0 0
    %3132 = vmatpush.bf16.xpose.msra.mxu0 %v3123
    %3133 = vmatmul.bf16.gmra.mxu0 %v3120
    %v3134 = vpop.f32.mrf.mxu0
    %v3135 = vadd.f32 0.0, %v3134
    %v3136 = vpop.f32.mrf.mxu0
    %3137 = vdwg.mxu0
    %v3138 = vsel %vm601, %v3135, -inf
    %3139 = vmax.xlane.f32.xlu0 %v3138
    %v3140 = vpop.xlane.xlu0 %3139
    %v3141 = vsub.f32 %v3135, %v3140
    %v3142 = vmul.f32 %v3141, 1.442695
    %v3143 = vpow.pop %v3142
    %v3144 = vsel %vm601, %v3143, 0.0
    %3145 = vadd.xlane.f32.xlu0 %v3144
    %v3146 = vpop.xlane.xlu0 %3145
    %v3147 = vrcp.pop %v3146
    %v3148 = vmul.f32 %v3143, %v3147
    %v3149 = vpack.c.bf16 %v3148, %v3148
    %3150 = vrot.lane.b32.xlu0 %v3089, 88
    %v3151 = vpop.permute.xlu0 %3150
    %v3153 = vsel %vm601, %v3149, 0
    %v3156 = vsel %vm638, %v3151, 0
    %3158 = vmatpush.bf16.msra.mxu0 0
    %3159 = vmatpush.bf16.msra.mxu0 0
    %3160 = vmatpush.bf16.msra.mxu0 0
    %3161 = vmatpush.bf16.msra.mxu0 0
    %3162 = vmatpush.bf16.msra.mxu0 0
    %3163 = vmatpush.bf16.msra.mxu0 0
    %3164 = vmatpush.bf16.msra.mxu0 0
    %3165 = vmatpush.bf16.msra.mxu0 %v3156
    %3166 = vmatmul.bf16.gmra.mxu0 %v3153
    %v3167 = vpop.f32.mrf.mxu0
    %v3168 = vadd.f32 0.0, %v3167
    %v3169 = vpop.f32.mrf.mxu0
    %3170 = vdwg.mxu0
    %v3171 = vpack.c.bf16 %v3168, %v3168
    %v3173 = vsel %vm601, %v3171, 0
    %v3176 = vsel %vm638, %v3049, 0
    %3178 = vmatpush.bf16.msra.mxu0 0
    %3179 = vmatpush.bf16.msra.mxu0 0
    %3180 = vmatpush.bf16.msra.mxu0 0
    %3181 = vmatpush.bf16.msra.mxu0 0
    %3182 = vmatpush.bf16.msra.mxu0 0
    %3183 = vmatpush.bf16.msra.mxu0 0
    %3184 = vmatpush.bf16.msra.mxu0 0
    %3185 = vmatpush.bf16.msra.mxu0 %v3176
    %3186 = vmatmul.bf16.gmra.mxu0 %v3173
    %v3187 = vpop.f32.mrf.mxu0
    %v3188 = vadd.f32 0.0, %v3187
    %v3189 = vpop.f32.mrf.mxu0
    %3190 = vdwg.mxu0
    %v3192 = vsel %vm601, %v3111, 0
    %v3195 = vsel %vm638, %v3048, 0
    %3197 = vmatpush.bf16.msra.mxu0 0
    %3198 = vmatpush.bf16.msra.mxu0 0
    %3199 = vmatpush.bf16.msra.mxu0 0
    %3200 = vmatpush.bf16.msra.mxu0 0
    %3201 = vmatpush.bf16.msra.mxu0 0
    %3202 = vmatpush.bf16.msra.mxu0 0
    %3203 = vmatpush.bf16.msra.mxu0 0
    %3204 = vmatpush.bf16.msra.mxu0 %v3195
    %3205 = vmatmul.bf16.gmra.mxu0 %v3192
    %v3206 = vpop.f32.mrf.mxu0
    %v3207 = vadd.f32 %v3188, %v3206
    %v3208 = vpop.f32.mrf.mxu0
    %3209 = vdwg.mxu0
    %3210 = vrot.lane.b32.xlu0 %v3114, 112
    %v3211 = vpop.permute.xlu0 %3210
    %3212 = vrot.lane.b32.xlu0 %v3089, 112
    %v3213 = vpop.permute.xlu0 %3212
    %v3215 = vsel %vm601, %v3211, 0
    %v3218 = vsel %vm601, %v3213, 0
    %3220 = vmatpush.bf16.xpose.msra.mxu0 0
    %3221 = vmatpush.bf16.xpose.msra.mxu0 0
    %3222 = vmatpush.bf16.xpose.msra.mxu0 0
    %3223 = vmatpush.bf16.xpose.msra.mxu0 0
    %3224 = vmatpush.bf16.xpose.msra.mxu0 0
    %3225 = vmatpush.bf16.xpose.msra.mxu0 0
    %3226 = vmatpush.bf16.xpose.msra.mxu0 0
    %3227 = vmatpush.bf16.xpose.msra.mxu0 %v3218
    %3228 = vmatmul.bf16.gmra.mxu0 %v3215
    %v3229 = vpop.f32.mrf.mxu0
    %v3230 = vadd.f32 0.0, %v3229
    %v3231 = vpop.f32.mrf.mxu0
    %3232 = vdwg.mxu0
    %v3233 = vsel %vm601, %v3230, -inf
    %3234 = vmax.xlane.f32.xlu0 %v3233
    %v3235 = vpop.xlane.xlu0 %3234
    %v3236 = vsub.f32 %v3230, %v3235
    %v3237 = vmul.f32 %v3236, 1.442695
    %v3238 = vpow.pop %v3237
    %v3239 = vsel %vm601, %v3238, 0.0
    %3240 = vadd.xlane.f32.xlu0 %v3239
    %v3241 = vpop.xlane.xlu0 %3240
    %v3242 = vrcp.pop %v3241
    %v3243 = vmul.f32 %v3238, %v3242
    %v3244 = vpack.c.bf16 %v3243, %v3243
    %3245 = vrot.lane.b32.xlu0 %v3089, 80
    %v3246 = vpop.permute.xlu0 %3245
    %v3248 = vsel %vm601, %v3244, 0
    %v3251 = vsel %vm638, %v3246, 0
    %3253 = vmatpush.bf16.msra.mxu0 0
    %3254 = vmatpush.bf16.msra.mxu0 0
    %3255 = vmatpush.bf16.msra.mxu0 0
    %3256 = vmatpush.bf16.msra.mxu0 0
    %3257 = vmatpush.bf16.msra.mxu0 0
    %3258 = vmatpush.bf16.msra.mxu0 0
    %3259 = vmatpush.bf16.msra.mxu0 0
    %3260 = vmatpush.bf16.msra.mxu0 %v3251
    %3261 = vmatmul.bf16.gmra.mxu0 %v3248
    %v3262 = vpop.f32.mrf.mxu0
    %v3263 = vadd.f32 0.0, %v3262
    %v3264 = vpop.f32.mrf.mxu0
    %3265 = vdwg.mxu0
    %v3266 = vpack.c.bf16 %v3263, %v3263
    %v3268 = vsel %vm601, %v3266, 0
    %v3271 = vsel %vm638, %v3050, 0
    %3273 = vmatpush.bf16.msra.mxu0 0
    %3274 = vmatpush.bf16.msra.mxu0 0
    %3275 = vmatpush.bf16.msra.mxu0 0
    %3276 = vmatpush.bf16.msra.mxu0 0
    %3277 = vmatpush.bf16.msra.mxu0 0
    %3278 = vmatpush.bf16.msra.mxu0 0
    %3279 = vmatpush.bf16.msra.mxu0 0
    %3280 = vmatpush.bf16.msra.mxu0 %v3271
    %3281 = vmatmul.bf16.gmra.mxu0 %v3268
    %v3282 = vpop.f32.mrf.mxu0
    %v3283 = vadd.f32 0.0, %v3282
    %v3284 = vpop.f32.mrf.mxu0
    %3285 = vdwg.mxu0
    %v3286 = vadd.f32 %v3207, %v3283
    %3287 = vrot.lane.b32.xlu0 %v3114, 104
    %v3288 = vpop.permute.xlu0 %3287
    %3289 = vrot.lane.b32.xlu0 %v3089, 104
    %v3290 = vpop.permute.xlu0 %3289
    %v3292 = vsel %vm601, %v3288, 0
    %v3295 = vsel %vm601, %v3290, 0
    %3297 = vmatpush.bf16.xpose.msra.mxu0 0
    %3298 = vmatpush.bf16.xpose.msra.mxu0 0
    %3299 = vmatpush.bf16.xpose.msra.mxu0 0
    %3300 = vmatpush.bf16.xpose.msra.mxu0 0
    %3301 = vmatpush.bf16.xpose.msra.mxu0 0
    %3302 = vmatpush.bf16.xpose.msra.mxu0 0
    %3303 = vmatpush.bf16.xpose.msra.mxu0 0
    %3304 = vmatpush.bf16.xpose.msra.mxu0 %v3295
    %3305 = vmatmul.bf16.gmra.mxu0 %v3292
    %v3306 = vpop.f32.mrf.mxu0
    %v3307 = vadd.f32 0.0, %v3306
    %v3308 = vpop.f32.mrf.mxu0
    %3309 = vdwg.mxu0
    %v3310 = vsel %vm601, %v3307, -inf
    %3311 = vmax.xlane.f32.xlu0 %v3310
    %v3312 = vpop.xlane.xlu0 %3311
    %v3313 = vsub.f32 %v3307, %v3312
    %v3314 = vmul.f32 %v3313, 1.442695
    %v3315 = vpow.pop %v3314
    %v3316 = vsel %vm601, %v3315, 0.0
    %3317 = vadd.xlane.f32.xlu0 %v3316
    %v3318 = vpop.xlane.xlu0 %3317
    %v3319 = vrcp.pop %v3318
    %v3320 = vmul.f32 %v3315, %v3319
    %v3321 = vpack.c.bf16 %v3320, %v3320
    %3322 = vrot.lane.b32.xlu0 %v3089, 72
    %v3323 = vpop.permute.xlu0 %3322
    %v3325 = vsel %vm601, %v3321, 0
    %v3328 = vsel %vm638, %v3323, 0
    %3330 = vmatpush.bf16.msra.mxu0 0
    %3331 = vmatpush.bf16.msra.mxu0 0
    %3332 = vmatpush.bf16.msra.mxu0 0
    %3333 = vmatpush.bf16.msra.mxu0 0
    %3334 = vmatpush.bf16.msra.mxu0 0
    %3335 = vmatpush.bf16.msra.mxu0 0
    %3336 = vmatpush.bf16.msra.mxu0 0
    %3337 = vmatpush.bf16.msra.mxu0 %v3328
    %3338 = vmatmul.bf16.gmra.mxu0 %v3325
    %v3339 = vpop.f32.mrf.mxu0
    %v3340 = vadd.f32 0.0, %v3339
    %v3341 = vpop.f32.mrf.mxu0
    %3342 = vdwg.mxu0
    %v3343 = vpack.c.bf16 %v3340, %v3340
    %v3345 = vsel %vm601, %v3343, 0
    %v3348 = vsel %vm638, %v3051, 0
    %3350 = vmatpush.bf16.msra.mxu0 0
    %3351 = vmatpush.bf16.msra.mxu0 0
    %3352 = vmatpush.bf16.msra.mxu0 0
    %3353 = vmatpush.bf16.msra.mxu0 0
    %3354 = vmatpush.bf16.msra.mxu0 0
    %3355 = vmatpush.bf16.msra.mxu0 0
    %3356 = vmatpush.bf16.msra.mxu0 0
    %3357 = vmatpush.bf16.msra.mxu0 %v3348
    %3358 = vmatmul.bf16.gmra.mxu0 %v3345
    %v3359 = vpop.f32.mrf.mxu0
    %v3360 = vadd.f32 0.0, %v3359
    %v3361 = vpop.f32.mrf.mxu0
    %3362 = vdwg.mxu0
    %v3363 = vadd.f32 %v3286, %v3360
    %v3365 = vperm.slane %v3053, 0
    %v3367 = vadd.f32 %v3363, %v3365
    %v3368 = vadd.f32 %v2972, %v3367
    %s3369 = scalar_lea.vmem [#allocation17], 1
    %v3370 = vld [vmem:[%s3369] sm:$0x1]
    %s3371 = scalar_lea.vmem [#allocation16], 1
    %v3372 = vld [vmem:[%s3371] sm:$0x1]
    %v3373 = vsel %vm578, %v3368, 0.0
    %3374 = vadd.xlane.f32.xlu0 %v3373
    %v3375 = vpop.xlane.xlu0 %3374
    %v3376 = vmul.f32 %v3375, %v921
    %v3377 = vmul.f32 %v3368, %v3368
    %v3378 = vsel %vm578, %v3377, 0.0
    %3379 = vadd.xlane.f32.xlu0 %v3378
    %v3380 = vpop.xlane.xlu0 %3379
    %v3381 = vmul.f32 %v3380, %v921
    %v3382 = vmul.f32 %v3376, %v3376
    %v3383 = vsub.f32 %v3381, %v3382
    %v3384 = vsub.f32 %v3368, %v3376
    %v3385 = vadd.f32 %v3383, 1e-05
    %v3386 = vrsqrt.pop %v3385
    %v3387 = vmul.f32 %v3386, %v3385
    %v3388 = vmul.f32 %v3387, %v3386
    %v3389 = vmul.f32 0.5, %v3388
    %v3390 = vsub.f32 1.5, %v3389
    %v3391 = vmul.f32 %v3386, %v3390
    %vm3392 = vweird.f32 %v3385
    %vm3393 = vweird.f32 %v3386
    %vm3394 = vmor %vm3392, %vm3393
    %v3395 = vsel %vm3394, %v3386, %v3391
    %v3396 = vmul.f32 %v3384, %v3395
    %v3398 = vperm.slane %v3370, 0
    %v3400 = vmul.f32 %v3396, %v3398
    %v3402 = vperm.slane %v3372, 0
    %v3404 = vadd.f32 %v3400, %v3402
    %s3405 = scalar_lea.vmem [#allocation25], 16
    %v3406 = vld [vmem:[%s3405] sm:$0xf]
    %v3407 = vld [vmem:[%s3405 + $0x4] sm:$0xf]
    %v3408 = vld [vmem:[%s3405 + $0x8] sm:$0xf]
    %v3409 = vld [vmem:[%s3405 + $0xc] sm:$0xf]
    %s3410 = scalar_lea.vmem [#allocation5], 1
    %v3411 = vld [vmem:[%s3410] sm:$0x1]
    %s3412 = scalar_lea.vmem %s41, 32
    %v3413 = vld [vmem:[%s3412] sm:$0xf]
    %v3414 = vld [vmem:[%s3412 + $0x4] sm:$0xf]
    %v3415 = vld [vmem:[%s3412 + $0x8] sm:$0xf]
    %v3416 = vld [vmem:[%s3412 + $0xc] sm:$0xf]
    %v3417 = vld [vmem:[%s3412 + $0x10] sm:$0xf]
    %v3418 = vld [vmem:[%s3412 + $0x14] sm:$0xf]
    %v3419 = vld [vmem:[%s3412 + $0x18] sm:$0xf]
    %v3420 = vld [vmem:[%s3412 + $0x1c] sm:$0xf]
    %s3421 = scalar_lea.vmem [#allocation7], 1
    %v3422 = vld [vmem:[%s3421] sm:$0x1]
    %v3423 = vpack.c.bf16 %v3404, %v3404
    %v3425 = vperm.slane %v3411, 0
    %v3431 = vunpack.c.l.b16 %v3406
    %v3432 = vunpack.c.l.b16 %v3407
    %v3433 = vunpack.c.l.b16 %v3408
    %v3434 = vunpack.c.l.b16 %v3409
    %v3435 = vpack.c.b16 %v3432, %v3431
    %v3436 = vpack.c.b16 %v3434, %v3433
    %v3440 = vsel %vm578, %v3423, 0
    %3442 = vmatpush.bf16.msra.mxu0 0
    %3443 = vmatpush.bf16.msra.mxu0 0
    %3444 = vmatpush.bf16.msra.mxu0 0
    %3445 = vmatpush.bf16.msra.mxu0 0
    %3446 = vmatpush.bf16.msra.mxu0 0
    %3447 = vmatpush.bf16.msra.mxu0 0
    %3448 = vmatpush.bf16.msra.mxu0 %v3436
    %3449 = vmatpush.bf16.msra.mxu0 %v3435
    %3450 = vmatmul.bf16.gmra.mxu0 %v3440
    %v3451 = vpop.f32.mrf.mxu0
    %v3452 = vadd.f32 %v3425, %v3451
    %v3453 = vpop.f32.mrf.mxu0
    %3454 = vdwg.mxu0
    %v3455 = vmax.f32 %v3452, 0.0
    %v3456 = vpack.c.bf16 %v3455, %v3455
    %v3458 = vperm.slane %v3422, 0
    %v3468 = vunpack.c.l.b16 %v3413
    %v3469 = vunpack.c.l.b16 %v3414
    %v3470 = vunpack.c.l.b16 %v3415
    %v3471 = vunpack.c.l.b16 %v3416
    %v3472 = vunpack.c.l.b16 %v3417
    %v3473 = vunpack.c.l.b16 %v3418
    %v3474 = vunpack.c.l.b16 %v3419
    %v3475 = vunpack.c.l.b16 %v3420
    %v3476 = vpack.c.b16 %v3469, %v3468
    %v3477 = vpack.c.b16 %v3471, %v3470
    %v3478 = vpack.c.b16 %v3473, %v3472
    %v3479 = vpack.c.b16 %v3475, %v3474
    %v3485 = vsel %vm1026, %v3456, 0
    %3487 = vmatpush.bf16.msra.mxu0 0
    %3488 = vmatpush.bf16.msra.mxu0 0
    %3489 = vmatpush.bf16.msra.mxu0 0
    %3490 = vmatpush.bf16.msra.mxu0 0
    %3491 = vmatpush.bf16.msra.mxu0 %v3479
    %3492 = vmatpush.bf16.msra.mxu0 %v3478
    %3493 = vmatpush.bf16.msra.mxu0 %v3477
    %3494 = vmatpush.bf16.msra.mxu0 %v3476
    %3495 = vmatmul.bf16.gmra.mxu0 %v3485
    %v3496 = vpop.f32.mrf.mxu0
    %v3497 = vadd.f32 %v3458, %v3496
    %v3498 = vpop.f32.mrf.mxu0
    %3499 = vdwg.mxu0
    %v3500 = vadd.f32 %v3404, %v3497
    %s3501 = scalar_lea.vmem [#allocation20], 1
    %v3502 = vld [vmem:[%s3501] sm:$0x1]
    %s3503 = scalar_lea.vmem [#allocation19], 1
    %v3504 = vld [vmem:[%s3503] sm:$0x1]
    %v3505 = vsel %vm578, %v3500, 0.0
    %3506 = vadd.xlane.f32.xlu0 %v3505
    %v3507 = vpop.xlane.xlu0 %3506
    %v3508 = vmul.f32 %v3507, %v921
    %v3509 = vmul.f32 %v3500, %v3500
    %v3510 = vsel %vm578, %v3509, 0.0
    %3511 = vadd.xlane.f32.xlu0 %v3510
    %v3512 = vpop.xlane.xlu0 %3511
    %v3513 = vmul.f32 %v3512, %v921
    %v3514 = vmul.f32 %v3508, %v3508
    %v3515 = vsub.f32 %v3513, %v3514
    %v3516 = vsub.f32 %v3500, %v3508
    %v3517 = vadd.f32 %v3515, 1e-05
    %v3518 = vrsqrt.pop %v3517
    %v3519 = vmul.f32 %v3518, %v3517
    %v3520 = vmul.f32 %v3519, %v3518
    %v3521 = vmul.f32 0.5, %v3520
    %v3522 = vsub.f32 1.5, %v3521
    %v3523 = vmul.f32 %v3518, %v3522
    %vm3524 = vweird.f32 %v3517
    %vm3525 = vweird.f32 %v3518
    %vm3526 = vmor %vm3524, %vm3525
    %v3527 = vsel %vm3526, %v3518, %v3523
    %v3528 = vmul.f32 %v3516, %v3527
    %v3530 = vperm.slane %v3502, 0
    %v3532 = vmul.f32 %v3528, %v3530
    %v3534 = vperm.slane %v3504, 0
    %v3536 = vadd.f32 %v3532, %v3534
    %v3537 = vld [vmem:[#allocation28] sm:$0x1]
    %v3538 = vld [vmem:[#allocation26] sm:$0x1]
    %v3539 = vsel %vm578, %v3536, 0.0
    %3540 = vadd.xlane.f32.xlu0 %v3539
    %v3541 = vpop.xlane.xlu0 %3540
    %v3542 = vmul.f32 %v3541, %v921
    %v3543 = vmul.f32 %v3536, %v3536
    %v3544 = vsel %vm578, %v3543, 0.0
    %3545 = vadd.xlane.f32.xlu0 %v3544
    %v3546 = vpop.xlane.xlu0 %3545
    %v3547 = vmul.f32 %v3546, %v921
    %v3548 = vmul.f32 %v3542, %v3542
    %v3549 = vsub.f32 %v3547, %v3548
    %v3550 = vsub.f32 %v3536, %v3542
    %v3551 = vadd.f32 %v3549, 1e-05
    %v3552 = vrsqrt.pop %v3551
    %v3553 = vmul.f32 %v3552, %v3551
    %v3554 = vmul.f32 %v3553, %v3552
    %v3555 = vmul.f32 0.5, %v3554
    %v3556 = vsub.f32 1.5, %v3555
    %v3557 = vmul.f32 %v3552, %v3556
    %vm3558 = vweird.f32 %v3551
    %vm3559 = vweird.f32 %v3552
    %vm3560 = vmor %vm3558, %vm3559
    %v3561 = vsel %vm3560, %v3552, %v3557
    %v3562 = vmul.f32 %v3550, %v3561
    %v3564 = vperm.slane %v3537, 0
    %v3566 = vmul.f32 %v3562, %v3564
    %v3568 = vperm.slane %v3538, 0
    %v3570 = vadd.f32 %v3566, %v3568
    %v3571 = vld [vmem:[%s81] sm:$0xf]
    %v3572 = vld [vmem:[%s81 + $0x4] sm:$0xf]
    %v3573 = vld [vmem:[%s81 + $0x8] sm:$0xf]
    %v3574 = vld [vmem:[%s81 + $0xc] sm:$0xf]
    %v3575 = vld [vmem:[%s79] sm:$0x1]
    %v3576 = vpack.c.bf16 %v3570, %v3570
    %v3578 = vperm.slane %v3575, 0
    %v3584 = vunpack.c.l.b16 %v3571
    %v3585 = vunpack.c.l.b16 %v3572
    %v3586 = vunpack.c.l.b16 %v3573
    %v3587 = vunpack.c.l.b16 %v3574
    %v3588 = vpack.c.b16 %v3585, %v3584
    %v3589 = vpack.c.b16 %v3587, %v3586
    %v3593 = vsel %vm578, %v3576, 0
    %3595 = vmatpush.bf16.msra.mxu0 0
    %3596 = vmatpush.bf16.msra.mxu0 0
    %3597 = vmatpush.bf16.msra.mxu0 0
    %3598 = vmatpush.bf16.msra.mxu0 0
    %3599 = vmatpush.bf16.msra.mxu0 0
    %3600 = vmatpush.bf16.msra.mxu0 0
    %3601 = vmatpush.bf16.msra.mxu0 %v3589
    %3602 = vmatpush.bf16.msra.mxu0 %v3588
    %3603 = vmatmul.bf16.gmra.mxu0 %v3593
    %v3604 = vpop.f32.mrf.mxu0
    %v3605 = vadd.f32 %v3578, %v3604
    %v3606 = vpop.f32.mrf.mxu0
    %3607 = vdwg.mxu0
    %3608 = vst [vmem:[#allocation38] sm:$0xff] %v3605
    // Predicated region
    $region258: #{tpu_custom_call.1} parent=1 // pred_check
      _
    $region259: #{tpu_custom_call.1} parent=1 // pred_check_branch
      %3610 = sbr.rel (0) target = $region261
    $region260: #{tpu_custom_call.1} parent=1 // pred_region
      %3612 = vsyncadd [#allocation4], 0
      %s3614 = sshll.u32 [#allocation38], 4
      %s3615 = int_to_ptr.vmem [resolvable:$true] %s3614
      %s3616 = sshll.u32 %s83, 4
      %s3617 = int_to_ptr.hbm [resolvable:$true] %s3616
      %3619 = dma.vmem_to_hbm [thread:$0]  %s3615, 128, %s3617, [#allocation4]
    $region261: #{tpu_custom_call.1} parent=1 // pred_fallthru
      _
    // Predicated region
    $region262: #{tpu_custom_call.1} parent=1 // pred_check
      _
    $region263: #{tpu_custom_call.1} parent=1 // pred_check_branch
      %3621 = sbr.rel (0) target = $region265
    $region264: #{tpu_custom_call.1} parent=1 // pred_region
      %3623 = dma.done [#allocation4], 128
    $region265: #{tpu_custom_call.1} parent=1 // pred_fallthru
      _
    %3624 = vsyncpa [#allocation3], 1
    %3625 = vsyncpa [#allocation6], 1
    %3626 = vsyncpa [#allocation9], 1
    %3627 = vsyncpa [#allocation12], 1
    %3628 = vsyncpa [#allocation15], 1
    %3629 = vsyncpa [#allocation18], 1
    %3630 = vsyncpa [#allocation21], 1
    %3631 = vsyncpa [#allocation24], 1
    %3632 = vsyncpa [#allocation27], 1
    %3633 = vsyncpa [#allocation30], 1
    %3634 = vsyncpa [#allocation33], 1
    %3635 = vsyncpa [#allocation36], 1
    %3636 = vsyncpa [#allocation4], 1

</llo_original>
